<compile_context>
chip_gen: v5e
topology: v5e:2x2
jax: 0.10.0
libtpu: 0.0.40
codegen_flags: <defaults>
</compile_context>

<pallas_src>
import jax
import jax.numpy as jnp
from jax.experimental import pallas as pl
from jax.experimental.pallas import tpu as pltpu


def _round_up(x, m):
    return ((x + m - 1) // m) * m


def _mlp_kernel(x_ref, w1_ref, b1_ref, w2_ref, b2_ref, o_ref):
    # li1: (block_m, IN) bf16 @ (IN, HID) bf16 -> f32 accumulation on the MXU.
    h = jnp.dot(x_ref[...], w1_ref[...], preferred_element_type=jnp.float32)
    # Bias + ReLU in f32 (fast VPU path on all generations, incl. v5e with no bf16 VPU).
    h = jnp.maximum(h + b1_ref[...], jnp.float32(0.0))
    # li2: downcast only at the dot input so the second matmul is also bf16-native.
    y = jnp.dot(h.astype(w2_ref.dtype), w2_ref[...],
                preferred_element_type=jnp.float32)
    o_ref[...] = (y + b2_ref[...]).astype(o_ref.dtype)


def pure_kakuritsu_forward(x, w1, b1, w2, b2, *, block_m=None):
    """Fused 2-layer MLP (linear -> relu -> linear) as one Pallas TPU kernel.

    x : (B, IN)    float32
    w1: (IN, HID)  float32   (transposed vs. torch's (HID, IN))
    b1: (1, HID)   float32
    w2: (HID, OUT) float32
    b2: (1, OUT)   float32
    returns (B, OUT) float32
    """
    B, IN = x.shape
    HID = w1.shape[1]
    OUT = w2.shape[1]

    if block_m is None:
        # Large M tile for MXU occupancy; >=16 so bf16 sublane tiling is respected.
        block_m = min(256, _round_up(B, 16))

    # Pad everything to hardware-friendly shapes (lane = 128 multiples, batch = block_m
    # multiple). Zero padding does not change the matmul results in the valid region.
    B_p = _round_up(B, block_m)
    IN_p = _round_up(IN, 128)
    HID_p = _round_up(HID, 128)
    OUT_p = _round_up(OUT, 128)

    x_p = jnp.pad(x, ((0, B_p - B), (0, IN_p - IN))).astype(jnp.bfloat16)
    w1_p = jnp.pad(w1, ((0, IN_p - IN), (0, HID_p - HID))).astype(jnp.bfloat16)
    b1_p = jnp.pad(b1, ((0, 0), (0, HID_p - HID))).astype(jnp.float32)
    w2_p = jnp.pad(w2, ((0, HID_p - HID), (0, OUT_p - OUT))).astype(jnp.bfloat16)
    b2_p = jnp.pad(b2, ((0, 0), (0, OUT_p - OUT))).astype(jnp.float32)

    grid = (B_p // block_m,)

    cost = pl.CostEstimate(
        flops=2 * B_p * (IN_p * HID_p + HID_p * OUT_p),
        transcendentals=0,
        bytes_accessed=(x_p.size * 2 + w1_p.size * 2 + w2_p.size * 2
                        + b1_p.size * 4 + b2_p.size * 4 + B_p * OUT_p * 4),
    )

    out_padded = pl.pallas_call(
        _mlp_kernel,
        out_shape=jax.ShapeDtypeStruct((B_p, OUT_p), jnp.float32),
        grid_spec=pltpu.PrefetchScalarGridSpec(
            num_scalar_prefetch=0,
            grid=grid,
            in_specs=[
                pl.BlockSpec((block_m, IN_p), lambda i: (i, 0)),   # x tile (pipelined)
                pl.BlockSpec((IN_p, HID_p), lambda i: (0, 0)),     # W1 (constant index ->
                pl.BlockSpec((1, HID_p), lambda i: (0, 0)),        #  resident, not re-DMA'd)
                pl.BlockSpec((HID_p, OUT_p), lambda i: (0, 0)),    # W2 (resident)
                pl.BlockSpec((1, OUT_p), lambda i: (0, 0)),        # b2
            ],
            out_specs=pl.BlockSpec((block_m, OUT_p), lambda i: (i, 0)),
        ),
        compiler_params=pltpu.CompilerParams(
            dimension_semantics=("parallel",),      # megacore-shard the batch axis
            vmem_limit_bytes=48 * 1024 * 1024,      # explicit headroom; bf16 weights fit easily
        ),
        cost_estimate=cost,
    )(x_p, w1_p, b1_p, w2_p, b2_p)

    return out_padded[:B, :OUT]


def init_params(key, inshape, hidden, outshape):
    """Deterministic PyTorch-style (uniform +/- 1/sqrt(fan_in)) init for the two linears."""
    k1, k2, k3, k4 = jax.random.split(key, 4)
    bound1 = 1.0 / jnp.sqrt(jnp.float32(inshape))
    bound2 = 1.0 / jnp.sqrt(jnp.float32(hidden))
    # stored already transposed: (in, out)
    w1 = jax.random.uniform(k1, (inshape, hidden), jnp.float32, -bound1, bound1)
    b1 = jax.random.uniform(k2, (1, hidden), jnp.float32, -bound1, bound1)
    w2 = jax.random.uniform(k3, (hidden, outshape), jnp.float32, -bound2, bound2)
    b2 = jax.random.uniform(k4, (1, outshape), jnp.float32, -bound2, bound2)
    return w1, b1, w2, b2


if __name__ == "__main__":
    # Small shapes consistent with the module's forward: x is (batch, inshape).
    # (Real module: inshape=2048, hidden=1000, outshape=1000; scaled down here.)
    # batch=384 exercises batch padding (-> 512) and a 2-step grid (megacore on v7x);
    # hidden=1000 / outshape=120 exercise the 128-lane padding path (1000->1024, 120->128).
    batch, inshape, hidden, outshape = 384, 256, 1000, 120

    key = jax.random.PRNGKey(0)
    kx, kp = jax.random.split(key)
    x = jax.random.normal(kx, (batch, inshape), jnp.float32)
    w1, b1, w2, b2 = init_params(kp, inshape, hidden, outshape)

    out = pure_kakuritsu_forward(x, w1, b1, w2, b2)
    out = jax.block_until_ready(out)

    # Pure-JAX f32 reference; kernel uses bf16 matmuls so tolerance is relaxed.
    ref = jnp.maximum(x @ w1 + b1, 0.0) @ w2 + b2
    assert out.shape == (batch, outshape)
    assert jnp.allclose(out, ref, atol=2e-2, rtol=2e-2), float(
        jnp.max(jnp.abs(out - ref)))

    print("KERNEL_OK")
</pallas_src>

<mosaic_0001>
module attributes {stable_mosaic.version = 11 : i64} {
  func.func @_mlp_kernel(%arg0: i32, %arg1: memref<256x256xbf16, #tpu.memory_space<vmem>>, %arg2: memref<256x1024xbf16, #tpu.memory_space<vmem>>, %arg3: memref<1x1024xf32, #tpu.memory_space<vmem>>, %arg4: memref<1024x128xbf16, #tpu.memory_space<vmem>>, %arg5: memref<1x128xf32, #tpu.memory_space<vmem>>, %arg6: memref<256x128xf32, #tpu.memory_space<vmem>>) attributes {dimension_semantics = [#tpu.dimension_semantics<parallel>], iteration_bounds = array<i64: 2>, scalar_prefetch = 0 : i64, scratch_operands = 0 : i64, tpu.core_type = #tpu.core_type<tc>, window_params = [{transform_indices = @transform_0, window_bounds = array<i64: 256, 256>}, {pipeline_mode = #tpu.pipeline_mode<synchronous>, transform_indices = @transform_1, window_bounds = array<i64: 256, 1024>}, {pipeline_mode = #tpu.pipeline_mode<synchronous>, transform_indices = @transform_2, window_bounds = array<i64: 1, 1024>}, {pipeline_mode = #tpu.pipeline_mode<synchronous>, transform_indices = @transform_3, window_bounds = array<i64: 1024, 128>}, {pipeline_mode = #tpu.pipeline_mode<synchronous>, transform_indices = @transform_4, window_bounds = array<i64: 1, 128>}, {transform_indices = @transform_5, window_bounds = array<i64: 256, 128>}]} {
    %c0 = arith.constant 0 : index
    %c0_0 = arith.constant 0 : index
    %0 = vector.load %arg1[%c0, %c0_0] : memref<256x256xbf16, #tpu.memory_space<vmem>>, vector<256x256xbf16>
    %c0_1 = arith.constant 0 : index
    %c0_2 = arith.constant 0 : index
    %1 = vector.load %arg2[%c0_1, %c0_2] : memref<256x1024xbf16, #tpu.memory_space<vmem>>, vector<256x1024xbf16>
    %cst = arith.constant dense<0.000000e+00> : vector<256x1024xf32>
    %2 = tpu.matmul %0, %1, %cst {dimension_numbers = #tpu.dot_dimension_numbers<[1], [0], [0], [1], [0, 0, 1, 1], [], []>} : vector<256x256xbf16>, vector<256x1024xbf16>, vector<256x1024xf32> -> vector<256x1024xf32>
    %c0_3 = arith.constant 0 : index
    %c0_4 = arith.constant 0 : index
    %3 = vector.load %arg3[%c0_3, %c0_4] : memref<1x1024xf32, #tpu.memory_space<vmem>>, vector<1x1024xf32>
    %4 = vector.broadcast %3 : vector<1x1024xf32> to vector<256x1024xf32>
    %5 = arith.addf %2, %4 : vector<256x1024xf32>
    %cst_5 = arith.constant 0.000000e+00 : f32
    %6 = vector.broadcast %cst_5 : f32 to vector<256x1024xf32>
    %7 = arith.maximumf %5, %6 : vector<256x1024xf32>
    %8 = arith.truncf %7 : vector<256x1024xf32> to vector<256x1024xbf16>
    %c0_6 = arith.constant 0 : index
    %c0_7 = arith.constant 0 : index
    %9 = vector.load %arg4[%c0_6, %c0_7] : memref<1024x128xbf16, #tpu.memory_space<vmem>>, vector<1024x128xbf16>
    %cst_8 = arith.constant dense<0.000000e+00> : vector<256x128xf32>
    %10 = tpu.matmul %8, %9, %cst_8 {dimension_numbers = #tpu.dot_dimension_numbers<[1], [0], [0], [1], [0, 0, 1, 1], [], []>} : vector<256x1024xbf16>, vector<1024x128xbf16>, vector<256x128xf32> -> vector<256x128xf32>
    %c0_9 = arith.constant 0 : index
    %c0_10 = arith.constant 0 : index
    %11 = vector.load %arg5[%c0_9, %c0_10] : memref<1x128xf32, #tpu.memory_space<vmem>>, vector<1x128xf32>
    %12 = vector.broadcast %11 : vector<1x128xf32> to vector<256x128xf32>
    %13 = arith.addf %10, %12 : vector<256x128xf32>
    %c0_11 = arith.constant 0 : index
    %c0_12 = arith.constant 0 : index
    %14 = vector.load %arg6[%c0_11, %c0_12] : memref<256x128xf32, #tpu.memory_space<vmem>>, vector<256x128xf32>
    tpu.vector_store %arg6[%c0_11, %c0_12], %13 {strides = array<i32>} : memref<256x128xf32, #tpu.memory_space<vmem>>, vector<256x128xf32>,
    return
  }
  func.func @transform_0(%arg0: i32) -> (i32, i32) {
    %c0_i32 = arith.constant 0 : i32
    %c0_i32_0 = arith.constant 0 : i32
    return %arg0, %c0_i32 : i32, i32
  }
  func.func @transform_1(%arg0: i32) -> (i32, i32) {
    %c0_i32 = arith.constant 0 : i32
    %c0_i32_0 = arith.constant 0 : i32
    %c0_i32_1 = arith.constant 0 : i32
    return %c0_i32, %c0_i32_0 : i32, i32
  }
  func.func @transform_2(%arg0: i32) -> (i32, i32) {
    %c0_i32 = arith.constant 0 : i32
    %c0_i32_0 = arith.constant 0 : i32
    %c0_i32_1 = arith.constant 0 : i32
    return %c0_i32, %c0_i32_0 : i32, i32
  }
  func.func @transform_3(%arg0: i32) -> (i32, i32) {
    %c0_i32 = arith.constant 0 : i32
    %c0_i32_0 = arith.constant 0 : i32
    %c0_i32_1 = arith.constant 0 : i32
    return %c0_i32, %c0_i32_0 : i32, i32
  }
  func.func @transform_4(%arg0: i32) -> (i32, i32) {
    %c0_i32 = arith.constant 0 : i32
    %c0_i32_0 = arith.constant 0 : i32
    %c0_i32_1 = arith.constant 0 : i32
    return %c0_i32, %c0_i32_0 : i32, i32
  }
  func.func @transform_5(%arg0: i32) -> (i32, i32) {
    %c0_i32 = arith.constant 0 : i32
    %c0_i32_0 = arith.constant 0 : i32
    return %arg0, %c0_i32 : i32, i32
  }
}

</mosaic_0001>

<llo_original>
// kernel: tpu_custom_call.1
$region0: #{tpu_custom_call.1}
  #allocation0 [shape = 'u32[]', space=smem, size = 0x4, offset = 0x4, fixed_abs, tag = 'smem constant byte address 0x4 - core index']
  #allocation1 [shape = 'u32[72,128]{1,0:T(1,128)}', space=vmem, size = 0x9000, scoped, tag = 'internal scratch']
  %s0 = inlined_call_operand.hbm [shape: bf16[512,256], index: 0, kind: input, shape index: {}]
  %s1 = inlined_call_operand.hbm [shape: bf16[256,1024], index: 1, kind: input, shape index: {}]
  %s2 = inlined_call_operand.hbm [shape: f32[1,1024], index: 2, kind: input, shape index: {}]
  %s3 = inlined_call_operand.hbm [shape: bf16[1024,128], index: 3, kind: input, shape index: {}]
  %s4 = inlined_call_operand.vmem [shape: f32[1,128], index: 4, kind: input, shape index: {}]
  %s5 = inlined_call_operand.hbm [shape: f32[512,128], index: 5, kind: output, shape index: {}]
  %s6 = sld [smem:[#allocation0]]
  $region69: #{tpu_custom_call.1} parent=0
    _
  %s8 = ssub.s32 1, %s6
  %s9 = scalar_select 0, %s8, %s6
  $region1: #{tpu_custom_call.1} parent=0
    #allocation2 [shape = 'u8[262144]{0}', space=vmem, size = 0x40000, scoped, tag = 'input window, operand 0']
    #allocation3 [shape = 's32[2]{0}', space=sflag, size = 0x8, scoped, tag = 'scoped memory for tpu_custom_call.1']
    #allocation4 [shape = 's32[2]{0}', space=sflag, size = 0x8, scoped, tag = 'scoped memory for tpu_custom_call.1']
    #allocation5 [shape = 'u8[524288]{0}', space=vmem, size = 0x80000, scoped, tag = 'input window, operand 1, single buffered']
    #allocation6 [shape = 's32[1]{0}', space=sflag, size = 0x4, scoped, tag = 'scoped memory for tpu_custom_call.1']
    #allocation7 [shape = 'u8[4096]{0}', space=vmem, size = 0x1000, scoped, tag = 'input window, operand 2, single buffered']
    #allocation8 [shape = 'u8[262144]{0}', space=vmem, size = 0x40000, scoped, tag = 'input window, operand 3, single buffered']
    #allocation9 [shape = 's32[1]{0}', space=sflag, size = 0x4, scoped, tag = 'scoped memory for tpu_custom_call.1']
    #allocation10 [shape = 'u8[262144]{0}', space=vmem, size = 0x40000, scoped, tag = 'output window, operand 0']
    %10 = vsyncpa [#allocation3], 0
    %s11 = scalar_lea.sflag [#allocation3], 1
    %12 = vsyncpa %s11, 0
    %13 = vsyncpa [#allocation6], 0
    %14 = vsyncpa [#allocation9], 0
    %15 = vsyncpa [#allocation4], 0
    %s16 = scalar_lea.sflag [#allocation4], 1
    %17 = vsyncpa %s16, 0
    loop: start=0, step=1, limit=4
    $region2: #{tpu_custom_call.1} parent=1 // loop_pre_header
      _
    $region3: #{tpu_custom_call.1} parent=1 // loop_header
      %s19 = sphi 0, %s23
      %p20 = scmp.ge.s32.totalorder %s19, 4
      %s29 = sphi 0, %s31
      %s32 = sphi 0, %s29
      %s33 = sphi 0, %s32
      %s49 = sphi 0, %s33
      %s53 = sphi 0, %s53
      %s55 = sphi 0, %s53
      %s56 = sphi 0, %s55
      %s70 = sphi 0, %s56
      %s74 = sphi 0, %s74
      %s76 = sphi 0, %s74
      %s77 = sphi 0, %s76
      %s91 = sphi 0, %s77
      %s95 = sphi 0, %s95
      %s97 = sphi 0, %s95
      %s98 = sphi 0, %s97
      %s112 = sphi 0, %s98
      %s116 = sphi 0, %s116
      %s118 = sphi 0, %s116
      %s119 = sphi 0, %s118
      %s133 = sphi 0, %s119
      %s139 = sphi 0, %s141
      %s142 = sphi 0, %s139
      %s143 = sphi 0, %s142
      %s159 = sphi 0, %s143
    $region4: #{tpu_custom_call.1} parent=1 // loop_header_branch
      %22 = sbr.rel (%p20) target = $region8
    $region5: #{tpu_custom_call.1} parent=1 // loop_body
      %s24 = ssub.s32 %s19, 1
      %s25 = ssub.s32 %s19, 2
      %s26 = sadd.s32 %s19, 1
      %s27 = ssub.s32 %s19, %s26
      %p28 = scmp.eq.s32.totalorder %s27, 0
      %s30 = sadd.s32 %s29, 1
      %s31 = scalar_select %p28, %s29, %s30
      %p34 = pneg %p28
      %p35 = scmp.eq.s32.totalorder %s19, 1
      %p36 = por %p34, %p35
      %p37 = scmp.ne.s32.totalorder %s29, %s32
      %p38 = scmp.eq.s32.totalorder %s19, 0
      %p39 = por %p37, %p38
      %p40 = scmp.ne.s32.totalorder %s29, %s32
      %p41 = scmp.eq.s32.totalorder %s24, 1
      %p42 = por %p40, %p41
      %p43 = scmp.ne.s32.totalorder %s32, %s33
      %p44 = scmp.eq.s32.totalorder %s24, 0
      %p45 = por %p43, %p44
      %p46 = scmp.ne.s32.totalorder %s32, %s33
      %p47 = scmp.eq.s32.totalorder %s25, 1
      %p48 = por %p46, %p47
      %p50 = scmp.ne.s32.totalorder %s33, %s49
      %p51 = scmp.eq.s32.totalorder %s25, 0
      %p52 = por %p50, %p51
      %s54 = sadd.s32 %s53, 1
      %p57 = scmp.eq.s32.totalorder %s19, 1
      %p58 = scmp.ne.s32.totalorder %s53, %s55
      %p59 = scmp.eq.s32.totalorder %s19, 0
      %p60 = por %p58, %p59
      %p61 = scmp.ne.s32.totalorder %s53, %s55
      %p62 = scmp.eq.s32.totalorder %s24, 1
      %p63 = por %p61, %p62
      %p64 = scmp.ne.s32.totalorder %s55, %s56
      %p65 = scmp.eq.s32.totalorder %s24, 0
      %p66 = por %p64, %p65
      %p67 = scmp.ne.s32.totalorder %s55, %s56
      %p68 = scmp.eq.s32.totalorder %s25, 1
      %p69 = por %p67, %p68
      %p71 = scmp.ne.s32.totalorder %s56, %s70
      %p72 = scmp.eq.s32.totalorder %s25, 0
      %p73 = por %p71, %p72
      %s75 = sadd.s32 %s74, 1
      %p78 = scmp.eq.s32.totalorder %s19, 1
      %p79 = scmp.ne.s32.totalorder %s74, %s76
      %p80 = scmp.eq.s32.totalorder %s19, 0
      %p81 = por %p79, %p80
      %p82 = scmp.ne.s32.totalorder %s74, %s76
      %p83 = scmp.eq.s32.totalorder %s24, 1
      %p84 = por %p82, %p83
      %p85 = scmp.ne.s32.totalorder %s76, %s77
      %p86 = scmp.eq.s32.totalorder %s24, 0
      %p87 = por %p85, %p86
      %p88 = scmp.ne.s32.totalorder %s76, %s77
      %p89 = scmp.eq.s32.totalorder %s25, 1
      %p90 = por %p88, %p89
      %p92 = scmp.ne.s32.totalorder %s77, %s91
      %p93 = scmp.eq.s32.totalorder %s25, 0
      %p94 = por %p92, %p93
      %s96 = sadd.s32 %s95, 1
      %p99 = scmp.eq.s32.totalorder %s19, 1
      %p100 = scmp.ne.s32.totalorder %s95, %s97
      %p101 = scmp.eq.s32.totalorder %s19, 0
      %p102 = por %p100, %p101
      %p103 = scmp.ne.s32.totalorder %s95, %s97
      %p104 = scmp.eq.s32.totalorder %s24, 1
      %p105 = por %p103, %p104
      %p106 = scmp.ne.s32.totalorder %s97, %s98
      %p107 = scmp.eq.s32.totalorder %s24, 0
      %p108 = por %p106, %p107
      %p109 = scmp.ne.s32.totalorder %s97, %s98
      %p110 = scmp.eq.s32.totalorder %s25, 1
      %p111 = por %p109, %p110
      %p113 = scmp.ne.s32.totalorder %s98, %s112
      %p114 = scmp.eq.s32.totalorder %s25, 0
      %p115 = por %p113, %p114
      %s117 = sadd.s32 %s116, 1
      %p120 = scmp.eq.s32.totalorder %s19, 1
      %p121 = scmp.ne.s32.totalorder %s116, %s118
      %p122 = scmp.eq.s32.totalorder %s19, 0
      %p123 = por %p121, %p122
      %p124 = scmp.ne.s32.totalorder %s116, %s118
      %p125 = scmp.eq.s32.totalorder %s24, 1
      %p126 = por %p124, %p125
      %p127 = scmp.ne.s32.totalorder %s118, %s119
      %p128 = scmp.eq.s32.totalorder %s24, 0
      %p129 = por %p127, %p128
      %p130 = scmp.ne.s32.totalorder %s118, %s119
      %p131 = scmp.eq.s32.totalorder %s25, 1
      %p132 = por %p130, %p131
      %p134 = scmp.ne.s32.totalorder %s119, %s133
      %p135 = scmp.eq.s32.totalorder %s25, 0
      %p136 = por %p134, %p135
      %s137 = ssub.s32 %s19, %s26
      %p138 = scmp.eq.s32.totalorder %s137, 0
      %s140 = sadd.s32 %s139, 1
      %s141 = scalar_select %p138, %s139, %s140
      %p144 = pneg %p138
      %p145 = scmp.eq.s32.totalorder %s19, 1
      %p146 = por %p144, %p145
      %p147 = scmp.ne.s32.totalorder %s139, %s142
      %p148 = scmp.eq.s32.totalorder %s19, 0
      %p149 = por %p147, %p148
      %p150 = scmp.ne.s32.totalorder %s139, %s142
      %p151 = scmp.eq.s32.totalorder %s24, 1
      %p152 = por %p150, %p151
      %p153 = scmp.ne.s32.totalorder %s142, %s143
      %p154 = scmp.eq.s32.totalorder %s24, 0
      %p155 = por %p153, %p154
      %p156 = scmp.ne.s32.totalorder %s142, %s143
      %p157 = scmp.eq.s32.totalorder %s25, 1
      %p158 = por %p156, %p157
      %p160 = scmp.ne.s32.totalorder %s143, %s159
      %p161 = scmp.eq.s32.totalorder %s25, 0
      %p162 = por %p160, %p161
      %p163 = scmp.le.s32.totalorder 1, %s19
      %p164 = scmp.lt.s32.totalorder %s19, 3
      %p165 = pnand %p163, %p164
      %p166 = pneg %p165
      // Predicated region
      $region9: #{tpu_custom_call.1} parent=5 // pred_check
        _
      $region10: #{tpu_custom_call.1} parent=5 // pred_check_branch
        %168 = sbr.rel (%p165) target = $region12
      $region11: #{tpu_custom_call.1} parent=5 // pred_region
        %s169 = ssub.s32 %s19, 1
        // Predicated region
        $region13: #{tpu_custom_call.1} parent=11 // pred_check
          %p170 = pneg %p66
        $region14: #{tpu_custom_call.1} parent=11 // pred_check_branch
          %172 = sbr.rel (%p170) target = $region16
        $region15: #{tpu_custom_call.1} parent=11 // pred_region
          %174 = vsyncadd [#allocation6], 0
          %s175 = sshll.u32 %s1, 4
          %s176 = int_to_ptr.hbm [resolvable:$true] %s175
          %s177 = sshll.u32 [#allocation5], 4
          %s178 = int_to_ptr.vmem [resolvable:$true] %s177
          %183 = dma.hbm_to_vmem [thread:$0]  %s176, 16384, %s178, [#allocation6], 512, 512, 32
        $region16: #{tpu_custom_call.1} parent=11 // pred_fallthru
          _
        // Predicated region
        $region17: #{tpu_custom_call.1} parent=11 // pred_check
          %p184 = pneg %p87
        $region18: #{tpu_custom_call.1} parent=11 // pred_check_branch
          %186 = sbr.rel (%p184) target = $region20
        $region19: #{tpu_custom_call.1} parent=11 // pred_region
          %188 = vsyncadd [#allocation6], 0
          %s190 = sshll.u32 %s2, 4
          %s191 = int_to_ptr.hbm [resolvable:$true] %s190
          %s192 = sshll.u32 [#allocation7], 4
          %s193 = int_to_ptr.vmem [resolvable:$true] %s192
          %195 = dma.hbm_to_vmem [thread:$0]  %s191, 128, %s193, [#allocation6]
        $region20: #{tpu_custom_call.1} parent=11 // pred_fallthru
          _
        // Predicated region
        $region21: #{tpu_custom_call.1} parent=11 // pred_check
          %p196 = pneg %p108
        $region22: #{tpu_custom_call.1} parent=11 // pred_check_branch
          %198 = sbr.rel (%p196) target = $region24
        $region23: #{tpu_custom_call.1} parent=11 // pred_region
          %200 = vsyncadd [#allocation9], 0
          %s201 = sshll.u32 %s3, 4
          %s202 = int_to_ptr.hbm [resolvable:$true] %s201
          %s203 = sshll.u32 [#allocation8], 4
          %s204 = int_to_ptr.vmem [resolvable:$true] %s203
          %209 = dma.hbm_to_vmem [thread:$0]  %s202, 8192, %s204, [#allocation9], 64, 64, 4
        $region24: #{tpu_custom_call.1} parent=11 // pred_fallthru
          _
        // Predicated region
        $region25: #{tpu_custom_call.1} parent=11 // pred_check
          %p210 = pneg %p129
        $region26: #{tpu_custom_call.1} parent=11 // pred_check_branch
          %212 = sbr.rel (%p210) target = $region28
        $region27: #{tpu_custom_call.1} parent=11 // pred_region
          _
        $region28: #{tpu_custom_call.1} parent=11 // pred_fallthru
          _
      $region12: #{tpu_custom_call.1} parent=5 // pred_fallthru
        _
      %p213 = scmp.lt.s32.totalorder %s19, 2
      // Predicated region
      $region29: #{tpu_custom_call.1} parent=5 // pred_check
        %p214 = pneg %p213
      $region30: #{tpu_custom_call.1} parent=5 // pred_check_branch
        %216 = sbr.rel (%p214) target = $region32
      $region31: #{tpu_custom_call.1} parent=5 // pred_region
        // Predicated region
        $region33: #{tpu_custom_call.1} parent=31 // pred_check
          %p217 = pneg %p39
        $region34: #{tpu_custom_call.1} parent=31 // pred_check_branch
          %219 = sbr.rel (%p217) target = $region36
        $region35: #{tpu_custom_call.1} parent=31 // pred_region
          %s220 = sand.u32 %s29, 1
          %s221 = scalar_lea.sflag [#allocation3], %s220
          %s222 = sand.u32 %s29, 1
          %s223 = smul.addr %s222, 256
          %s224 = scalar_lea.vmem [#allocation2], %s223
          %s225 = smul.u32 32, %s19
          %227 = vsyncadd %s221, 0
          %s228 = smul.addr %s225, 2
          %s229 = smul.addr %s228, 4
          %s230 = scalar_lea.hbm %s0, %s229
          %s231 = sshll.u32 %s230, 4
          %s232 = int_to_ptr.hbm [resolvable:$true] %s231
          %s233 = sshll.u32 %s224, 4
          %s234 = int_to_ptr.vmem [resolvable:$true] %s233
          %239 = dma.hbm_to_vmem [thread:$0]  %s232, 4096, %s234, %s221, 128, 128, 8
        $region36: #{tpu_custom_call.1} parent=31 // pred_fallthru
          _
      $region32: #{tpu_custom_call.1} parent=5 // pred_fallthru
        _
      %p240 = scmp.le.s32.totalorder 1, %s19
      %p241 = scmp.lt.s32.totalorder %s19, 3
      %p242 = pnand %p240, %p241
      %p243 = pneg %p242
      // Predicated region
      $region37: #{tpu_custom_call.1} parent=5 // pred_check
        _
      $region38: #{tpu_custom_call.1} parent=5 // pred_check_branch
        %245 = sbr.rel (%p242) target = $region40
      $region39: #{tpu_custom_call.1} parent=5 // pred_region
        %s246 = ssub.s32 %s19, 1
        %s247 = sand.u32 %s32, 1
        %s248 = scalar_lea.sflag [#allocation3], %s247
        %s249 = sand.u32 %s32, 1
        %s250 = smul.addr %s249, 256
        %s251 = scalar_lea.vmem [#allocation2], %s250
        // Predicated region
        $region41: #{tpu_custom_call.1} parent=39 // pred_check
          %p252 = pneg %p45
        $region42: #{tpu_custom_call.1} parent=39 // pred_check_branch
          %254 = sbr.rel (%p252) target = $region44
        $region43: #{tpu_custom_call.1} parent=39 // pred_region
          %256 = dma.done %s248, 4096
        $region44: #{tpu_custom_call.1} parent=39 // pred_fallthru
          _
        // Predicated region
        $region45: #{tpu_custom_call.1} parent=39 // pred_check
          %p257 = pneg %p66
        $region46: #{tpu_custom_call.1} parent=39 // pred_check_branch
          %259 = sbr.rel (%p257) target = $region48
        $region47: #{tpu_custom_call.1} parent=39 // pred_region
          %261 = dma.done [#allocation6], 16384
        $region48: #{tpu_custom_call.1} parent=39 // pred_fallthru
          _
        // Predicated region
        $region49: #{tpu_custom_call.1} parent=39 // pred_check
          %p262 = pneg %p87
        $region50: #{tpu_custom_call.1} parent=39 // pred_check_branch
          %264 = sbr.rel (%p262) target = $region52
        $region51: #{tpu_custom_call.1} parent=39 // pred_region
          %266 = dma.done [#allocation6], 128
        $region52: #{tpu_custom_call.1} parent=39 // pred_fallthru
          _
        // Predicated region
        $region53: #{tpu_custom_call.1} parent=39 // pred_check
          %p267 = pneg %p108
        $region54: #{tpu_custom_call.1} parent=39 // pred_check_branch
          %269 = sbr.rel (%p267) target = $region56
        $region55: #{tpu_custom_call.1} parent=39 // pred_region
          %271 = dma.done [#allocation9], 8192
        $region56: #{tpu_custom_call.1} parent=39 // pred_fallthru
          _
        %s272 = sand.u32 %s32, 1
        %s273 = scalar_lea.sflag [#allocation3], %s272
        %s274 = sand.u32 %s32, 1
        %s275 = smul.addr %s274, 256
        %s276 = scalar_lea.vmem [#allocation2], %s275
        %p277 = pneg %p45
        %p278 = pneg %p42
        %p279 = pneg %p66
        %p280 = pneg %p63
        %p281 = pneg %p87
        %p282 = pneg %p84
        %p283 = pneg %p108
        %p284 = pneg %p105
        %p285 = pneg %p129
        %p286 = pneg %p126
        %p287 = pneg %p155
        %p288 = pneg %p152
        %s289 = sand.u32 %s142, 1
        %s290 = scalar_lea.sflag [#allocation4], %s289
        %s291 = sand.u32 %s142, 1
        %s292 = smul.addr %s291, 256
        %s293 = scalar_lea.vmem [#allocation10], %s292
        %s294 = smul.u32 32, %s24
        %s295 = smul.u32 32, %s24
        %v296 = vld [vmem:[%s251] sm:$0xff]
        %v297 = vld [vmem:[%s251 + $0x8] sm:$0xff]
        %v298 = vld [vmem:[%s251 + $0x10] sm:$0xff]
        %v299 = vld [vmem:[%s251 + $0x18] sm:$0xff]
        %v300 = vld [vmem:[%s251 + $0x20] sm:$0xff]
        %v301 = vld [vmem:[%s251 + $0x28] sm:$0xff]
        %v302 = vld [vmem:[%s251 + $0x30] sm:$0xff]
        %v303 = vld [vmem:[%s251 + $0x38] sm:$0xff]
        %v304 = vld [vmem:[%s251 + $0x40] sm:$0xff]
        %v305 = vld [vmem:[%s251 + $0x48] sm:$0xff]
        %v306 = vld [vmem:[%s251 + $0x50] sm:$0xff]
        %v307 = vld [vmem:[%s251 + $0x58] sm:$0xff]
        %v308 = vld [vmem:[%s251 + $0x60] sm:$0xff]
        %v309 = vld [vmem:[%s251 + $0x68] sm:$0xff]
        %v310 = vld [vmem:[%s251 + $0x70] sm:$0xff]
        %v311 = vld [vmem:[%s251 + $0x78] sm:$0xff]
        %v312 = vld [vmem:[%s251 + $0x80] sm:$0xff]
        %v313 = vld [vmem:[%s251 + $0x88] sm:$0xff]
        %v314 = vld [vmem:[%s251 + $0x90] sm:$0xff]
        %v315 = vld [vmem:[%s251 + $0x98] sm:$0xff]
        %v316 = vld [vmem:[%s251 + $0xa0] sm:$0xff]
        %v317 = vld [vmem:[%s251 + $0xa8] sm:$0xff]
        %v318 = vld [vmem:[%s251 + $0xb0] sm:$0xff]
        %v319 = vld [vmem:[%s251 + $0xb8] sm:$0xff]
        %v320 = vld [vmem:[%s251 + $0xc0] sm:$0xff]
        %v321 = vld [vmem:[%s251 + $0xc8] sm:$0xff]
        %v322 = vld [vmem:[%s251 + $0xd0] sm:$0xff]
        %v323 = vld [vmem:[%s251 + $0xd8] sm:$0xff]
        %v324 = vld [vmem:[%s251 + $0xe0] sm:$0xff]
        %v325 = vld [vmem:[%s251 + $0xe8] sm:$0xff]
        %v326 = vld [vmem:[%s251 + $0xf0] sm:$0xff]
        %v327 = vld [vmem:[%s251 + $0xf8] sm:$0xff]
        %v328 = vld [vmem:[#allocation5] sm:$0xff]
        %v329 = vld [vmem:[#allocation5 + $0x8] sm:$0xff]
        %v330 = vld [vmem:[#allocation5 + $0x10] sm:$0xff]
        %v331 = vld [vmem:[#allocation5 + $0x18] sm:$0xff]
        %v332 = vld [vmem:[#allocation5 + $0x20] sm:$0xff]
        %v333 = vld [vmem:[#allocation5 + $0x28] sm:$0xff]
        %v334 = vld [vmem:[#allocation5 + $0x30] sm:$0xff]
        %v335 = vld [vmem:[#allocation5 + $0x38] sm:$0xff]
        %v336 = vld [vmem:[#allocation5 + $0x40] sm:$0xff]
        %v337 = vld [vmem:[#allocation5 + $0x48] sm:$0xff]
        %v338 = vld [vmem:[#allocation5 + $0x50] sm:$0xff]
        %v339 = vld [vmem:[#allocation5 + $0x58] sm:$0xff]
        %v340 = vld [vmem:[#allocation5 + $0x60] sm:$0xff]
        %v341 = vld [vmem:[#allocation5 + $0x68] sm:$0xff]
        %v342 = vld [vmem:[#allocation5 + $0x70] sm:$0xff]
        %v343 = vld [vmem:[#allocation5 + $0x78] sm:$0xff]
        %v344 = vld [vmem:[#allocation5 + $0x80] sm:$0xff]
        %v345 = vld [vmem:[#allocation5 + $0x88] sm:$0xff]
        %v346 = vld [vmem:[#allocation5 + $0x90] sm:$0xff]
        %v347 = vld [vmem:[#allocation5 + $0x98] sm:$0xff]
        %v348 = vld [vmem:[#allocation5 + $0xa0] sm:$0xff]
        %v349 = vld [vmem:[#allocation5 + $0xa8] sm:$0xff]
        %v350 = vld [vmem:[#allocation5 + $0xb0] sm:$0xff]
        %v351 = vld [vmem:[#allocation5 + $0xb8] sm:$0xff]
        %v352 = vld [vmem:[#allocation5 + $0xc0] sm:$0xff]
        %v353 = vld [vmem:[#allocation5 + $0xc8] sm:$0xff]
        %v354 = vld [vmem:[#allocation5 + $0xd0] sm:$0xff]
        %v355 = vld [vmem:[#allocation5 + $0xd8] sm:$0xff]
        %v356 = vld [vmem:[#allocation5 + $0xe0] sm:$0xff]
        %v357 = vld [vmem:[#allocation5 + $0xe8] sm:$0xff]
        %v358 = vld [vmem:[#allocation5 + $0xf0] sm:$0xff]
        %v359 = vld [vmem:[#allocation5 + $0xf8] sm:$0xff]
        %v360 = vld [vmem:[#allocation5 + $0x100] sm:$0xff]
        %v361 = vld [vmem:[#allocation5 + $0x108] sm:$0xff]
        %v362 = vld [vmem:[#allocation5 + $0x110] sm:$0xff]
        %v363 = vld [vmem:[#allocation5 + $0x118] sm:$0xff]
        %v364 = vld [vmem:[#allocation5 + $0x120] sm:$0xff]
        %v365 = vld [vmem:[#allocation5 + $0x128] sm:$0xff]
        %v366 = vld [vmem:[#allocation5 + $0x130] sm:$0xff]
        %v367 = vld [vmem:[#allocation5 + $0x138] sm:$0xff]
        %v368 = vld [vmem:[#allocation5 + $0x140] sm:$0xff]
        %v369 = vld [vmem:[#allocation5 + $0x148] sm:$0xff]
        %v370 = vld [vmem:[#allocation5 + $0x150] sm:$0xff]
        %v371 = vld [vmem:[#allocation5 + $0x158] sm:$0xff]
        %v372 = vld [vmem:[#allocation5 + $0x160] sm:$0xff]
        %v373 = vld [vmem:[#allocation5 + $0x168] sm:$0xff]
        %v374 = vld [vmem:[#allocation5 + $0x170] sm:$0xff]
        %v375 = vld [vmem:[#allocation5 + $0x178] sm:$0xff]
        %v376 = vld [vmem:[#allocation5 + $0x180] sm:$0xff]
        %v377 = vld [vmem:[#allocation5 + $0x188] sm:$0xff]
        %v378 = vld [vmem:[#allocation5 + $0x190] sm:$0xff]
        %v379 = vld [vmem:[#allocation5 + $0x198] sm:$0xff]
        %v380 = vld [vmem:[#allocation5 + $0x1a0] sm:$0xff]
        %v381 = vld [vmem:[#allocation5 + $0x1a8] sm:$0xff]
        %v382 = vld [vmem:[#allocation5 + $0x1b0] sm:$0xff]
        %v383 = vld [vmem:[#allocation5 + $0x1b8] sm:$0xff]
        %v384 = vld [vmem:[#allocation5 + $0x1c0] sm:$0xff]
        %v385 = vld [vmem:[#allocation5 + $0x1c8] sm:$0xff]
        %v386 = vld [vmem:[#allocation5 + $0x1d0] sm:$0xff]
        %v387 = vld [vmem:[#allocation5 + $0x1d8] sm:$0xff]
        %v388 = vld [vmem:[#allocation5 + $0x1e0] sm:$0xff]
        %v389 = vld [vmem:[#allocation5 + $0x1e8] sm:$0xff]
        %v390 = vld [vmem:[#allocation5 + $0x1f0] sm:$0xff]
        %v391 = vld [vmem:[#allocation5 + $0x1f8] sm:$0xff]
        %v392 = vld [vmem:[#allocation5 + $0x200] sm:$0xff]
        %v393 = vld [vmem:[#allocation5 + $0x208] sm:$0xff]
        %v394 = vld [vmem:[#allocation5 + $0x210] sm:$0xff]
        %v395 = vld [vmem:[#allocation5 + $0x218] sm:$0xff]
        %v396 = vld [vmem:[#allocation5 + $0x220] sm:$0xff]
        %v397 = vld [vmem:[#allocation5 + $0x228] sm:$0xff]
        %v398 = vld [vmem:[#allocation5 + $0x230] sm:$0xff]
        %v399 = vld [vmem:[#allocation5 + $0x238] sm:$0xff]
        %v400 = vld [vmem:[#allocation5 + $0x240] sm:$0xff]
        %v401 = vld [vmem:[#allocation5 + $0x248] sm:$0xff]
        %v402 = vld [vmem:[#allocation5 + $0x250] sm:$0xff]
        %v403 = vld [vmem:[#allocation5 + $0x258] sm:$0xff]
        %v404 = vld [vmem:[#allocation5 + $0x260] sm:$0xff]
        %v405 = vld [vmem:[#allocation5 + $0x268] sm:$0xff]
        %v406 = vld [vmem:[#allocation5 + $0x270] sm:$0xff]
        %v407 = vld [vmem:[#allocation5 + $0x278] sm:$0xff]
        %v408 = vld [vmem:[#allocation5 + $0x280] sm:$0xff]
        %v409 = vld [vmem:[#allocation5 + $0x288] sm:$0xff]
        %v410 = vld [vmem:[#allocation5 + $0x290] sm:$0xff]
        %v411 = vld [vmem:[#allocation5 + $0x298] sm:$0xff]
        %v412 = vld [vmem:[#allocation5 + $0x2a0] sm:$0xff]
        %v413 = vld [vmem:[#allocation5 + $0x2a8] sm:$0xff]
        %v414 = vld [vmem:[#allocation5 + $0x2b0] sm:$0xff]
        %v415 = vld [vmem:[#allocation5 + $0x2b8] sm:$0xff]
        %v416 = vld [vmem:[#allocation5 + $0x2c0] sm:$0xff]
        %v417 = vld [vmem:[#allocation5 + $0x2c8] sm:$0xff]
        %v418 = vld [vmem:[#allocation5 + $0x2d0] sm:$0xff]
        %v419 = vld [vmem:[#allocation5 + $0x2d8] sm:$0xff]
        %v420 = vld [vmem:[#allocation5 + $0x2e0] sm:$0xff]
        %v421 = vld [vmem:[#allocation5 + $0x2e8] sm:$0xff]
        %v422 = vld [vmem:[#allocation5 + $0x2f0] sm:$0xff]
        %v423 = vld [vmem:[#allocation5 + $0x2f8] sm:$0xff]
        %v424 = vld [vmem:[#allocation5 + $0x300] sm:$0xff]
        %v425 = vld [vmem:[#allocation5 + $0x308] sm:$0xff]
        %v426 = vld [vmem:[#allocation5 + $0x310] sm:$0xff]
        %v427 = vld [vmem:[#allocation5 + $0x318] sm:$0xff]
        %v428 = vld [vmem:[#allocation5 + $0x320] sm:$0xff]
        %v429 = vld [vmem:[#allocation5 + $0x328] sm:$0xff]
        %v430 = vld [vmem:[#allocation5 + $0x330] sm:$0xff]
        %v431 = vld [vmem:[#allocation5 + $0x338] sm:$0xff]
        %v432 = vld [vmem:[#allocation5 + $0x340] sm:$0xff]
        %v433 = vld [vmem:[#allocation5 + $0x348] sm:$0xff]
        %v434 = vld [vmem:[#allocation5 + $0x350] sm:$0xff]
        %v435 = vld [vmem:[#allocation5 + $0x358] sm:$0xff]
        %v436 = vld [vmem:[#allocation5 + $0x360] sm:$0xff]
        %v437 = vld [vmem:[#allocation5 + $0x368] sm:$0xff]
        %v438 = vld [vmem:[#allocation5 + $0x370] sm:$0xff]
        %v439 = vld [vmem:[#allocation5 + $0x378] sm:$0xff]
        %v440 = vld [vmem:[#allocation5 + $0x380] sm:$0xff]
        %v441 = vld [vmem:[#allocation5 + $0x388] sm:$0xff]
        %v442 = vld [vmem:[#allocation5 + $0x390] sm:$0xff]
        %v443 = vld [vmem:[#allocation5 + $0x398] sm:$0xff]
        %v444 = vld [vmem:[#allocation5 + $0x3a0] sm:$0xff]
        %v445 = vld [vmem:[#allocation5 + $0x3a8] sm:$0xff]
        %v446 = vld [vmem:[#allocation5 + $0x3b0] sm:$0xff]
        %v447 = vld [vmem:[#allocation5 + $0x3b8] sm:$0xff]
        %v448 = vld [vmem:[#allocation5 + $0x3c0] sm:$0xff]
        %v449 = vld [vmem:[#allocation5 + $0x3c8] sm:$0xff]
        %v450 = vld [vmem:[#allocation5 + $0x3d0] sm:$0xff]
        %v451 = vld [vmem:[#allocation5 + $0x3d8] sm:$0xff]
        %v452 = vld [vmem:[#allocation5 + $0x3e0] sm:$0xff]
        %v453 = vld [vmem:[#allocation5 + $0x3e8] sm:$0xff]
        %v454 = vld [vmem:[#allocation5 + $0x3f0] sm:$0xff]
        %v455 = vld [vmem:[#allocation5 + $0x3f8] sm:$0xff]
        %v456 = vld [vmem:[#allocation7] sm:$0xff]
        %v458 = vperm.slane %v456, 0
        %v459 = vperm.slane %v456, 1
        %v460 = vperm.slane %v456, 2
        %v461 = vperm.slane %v456, 3
        %v462 = vperm.slane %v456, 4
        %v463 = vperm.slane %v456, 5
        %v464 = vperm.slane %v456, 6
        %v465 = vperm.slane %v456, 7
        %v506 = vunpack.c.l.b16 %v296
        %v507 = vunpack.c.h.b16 %v296
        %v508 = vunpack.c.l.b16 %v297
        %v509 = vunpack.c.h.b16 %v297
        %v510 = vunpack.c.l.b16 %v298
        %v511 = vunpack.c.h.b16 %v298
        %v512 = vunpack.c.l.b16 %v299
        %v513 = vunpack.c.h.b16 %v299
        %v514 = vunpack.c.l.b16 %v300
        %v515 = vunpack.c.h.b16 %v300
        %v516 = vunpack.c.l.b16 %v301
        %v517 = vunpack.c.h.b16 %v301
        %v518 = vunpack.c.l.b16 %v302
        %v519 = vunpack.c.h.b16 %v302
        %v520 = vunpack.c.l.b16 %v303
        %v521 = vunpack.c.h.b16 %v303
        %v522 = vunpack.c.l.b16 %v304
        %v523 = vunpack.c.h.b16 %v304
        %v524 = vunpack.c.l.b16 %v305
        %v525 = vunpack.c.h.b16 %v305
        %v526 = vunpack.c.l.b16 %v306
        %v527 = vunpack.c.h.b16 %v306
        %v528 = vunpack.c.l.b16 %v307
        %v529 = vunpack.c.h.b16 %v307
        %v530 = vunpack.c.l.b16 %v308
        %v531 = vunpack.c.h.b16 %v308
        %v532 = vunpack.c.l.b16 %v309
        %v533 = vunpack.c.h.b16 %v309
        %v534 = vunpack.c.l.b16 %v310
        %v535 = vunpack.c.h.b16 %v310
        %v536 = vunpack.c.l.b16 %v311
        %v537 = vunpack.c.h.b16 %v311
        %v538 = vunpack.c.l.b16 %v312
        %v539 = vunpack.c.h.b16 %v312
        %v540 = vunpack.c.l.b16 %v313
        %v541 = vunpack.c.h.b16 %v313
        %v542 = vunpack.c.l.b16 %v314
        %v543 = vunpack.c.h.b16 %v314
        %v544 = vunpack.c.l.b16 %v315
        %v545 = vunpack.c.h.b16 %v315
        %v546 = vunpack.c.l.b16 %v316
        %v547 = vunpack.c.h.b16 %v316
        %v548 = vunpack.c.l.b16 %v317
        %v549 = vunpack.c.h.b16 %v317
        %v550 = vunpack.c.l.b16 %v318
        %v551 = vunpack.c.h.b16 %v318
        %v552 = vunpack.c.l.b16 %v319
        %v553 = vunpack.c.h.b16 %v319
        %v554 = vunpack.c.l.b16 %v320
        %v555 = vunpack.c.h.b16 %v320
        %v556 = vunpack.c.l.b16 %v321
        %v557 = vunpack.c.h.b16 %v321
        %v558 = vunpack.c.l.b16 %v322
        %v559 = vunpack.c.h.b16 %v322
        %v560 = vunpack.c.l.b16 %v323
        %v561 = vunpack.c.h.b16 %v323
        %v562 = vunpack.c.l.b16 %v324
        %v563 = vunpack.c.h.b16 %v324
        %v564 = vunpack.c.l.b16 %v325
        %v565 = vunpack.c.h.b16 %v325
        %v566 = vunpack.c.l.b16 %v326
        %v567 = vunpack.c.h.b16 %v326
        %v568 = vunpack.c.l.b16 %v327
        %v569 = vunpack.c.h.b16 %v327
        %v570 = vpack.c.b16 %v508, %v506
        %v571 = vpack.c.b16 %v509, %v507
        %v572 = vpack.c.b16 %v512, %v510
        %v573 = vpack.c.b16 %v513, %v511
        %v574 = vpack.c.b16 %v516, %v514
        %v575 = vpack.c.b16 %v517, %v515
        %v576 = vpack.c.b16 %v520, %v518
        %v577 = vpack.c.b16 %v521, %v519
        %v578 = vpack.c.b16 %v524, %v522
        %v579 = vpack.c.b16 %v525, %v523
        %v580 = vpack.c.b16 %v528, %v526
        %v581 = vpack.c.b16 %v529, %v527
        %v582 = vpack.c.b16 %v532, %v530
        %v583 = vpack.c.b16 %v533, %v531
        %v584 = vpack.c.b16 %v536, %v534
        %v585 = vpack.c.b16 %v537, %v535
        %v586 = vpack.c.b16 %v540, %v538
        %v587 = vpack.c.b16 %v541, %v539
        %v588 = vpack.c.b16 %v544, %v542
        %v589 = vpack.c.b16 %v545, %v543
        %v590 = vpack.c.b16 %v548, %v546
        %v591 = vpack.c.b16 %v549, %v547
        %v592 = vpack.c.b16 %v552, %v550
        %v593 = vpack.c.b16 %v553, %v551
        %v594 = vpack.c.b16 %v556, %v554
        %v595 = vpack.c.b16 %v557, %v555
        %v596 = vpack.c.b16 %v560, %v558
        %v597 = vpack.c.b16 %v561, %v559
        %v598 = vpack.c.b16 %v564, %v562
        %v599 = vpack.c.b16 %v565, %v563
        %v600 = vpack.c.b16 %v568, %v566
        %v601 = vpack.c.b16 %v569, %v567
        %v762 = vunpack.c.l.b16 %v328
        %v763 = vunpack.c.h.b16 %v328
        %v764 = vunpack.c.l.b16 %v329
        %v765 = vunpack.c.h.b16 %v329
        %v766 = vunpack.c.l.b16 %v330
        %v767 = vunpack.c.h.b16 %v330
        %v768 = vunpack.c.l.b16 %v331
        %v769 = vunpack.c.h.b16 %v331
        %v770 = vunpack.c.l.b16 %v332
        %v771 = vunpack.c.h.b16 %v332
        %v772 = vunpack.c.l.b16 %v333
        %v773 = vunpack.c.h.b16 %v333
        %v774 = vunpack.c.l.b16 %v334
        %v775 = vunpack.c.h.b16 %v334
        %v776 = vunpack.c.l.b16 %v335
        %v777 = vunpack.c.h.b16 %v335
        %v778 = vunpack.c.l.b16 %v336
        %v779 = vunpack.c.h.b16 %v336
        %v780 = vunpack.c.l.b16 %v337
        %v781 = vunpack.c.h.b16 %v337
        %v782 = vunpack.c.l.b16 %v338
        %v783 = vunpack.c.h.b16 %v338
        %v784 = vunpack.c.l.b16 %v339
        %v785 = vunpack.c.h.b16 %v339
        %v786 = vunpack.c.l.b16 %v340
        %v787 = vunpack.c.h.b16 %v340
        %v788 = vunpack.c.l.b16 %v341
        %v789 = vunpack.c.h.b16 %v341
        %v790 = vunpack.c.l.b16 %v342
        %v791 = vunpack.c.h.b16 %v342
        %v792 = vunpack.c.l.b16 %v343
        %v793 = vunpack.c.h.b16 %v343
        %v794 = vunpack.c.l.b16 %v344
        %v795 = vunpack.c.h.b16 %v344
        %v796 = vunpack.c.l.b16 %v345
        %v797 = vunpack.c.h.b16 %v345
        %v798 = vunpack.c.l.b16 %v346
        %v799 = vunpack.c.h.b16 %v346
        %v800 = vunpack.c.l.b16 %v347
        %v801 = vunpack.c.h.b16 %v347
        %v802 = vunpack.c.l.b16 %v348
        %v803 = vunpack.c.h.b16 %v348
        %v804 = vunpack.c.l.b16 %v349
        %v805 = vunpack.c.h.b16 %v349
        %v806 = vunpack.c.l.b16 %v350
        %v807 = vunpack.c.h.b16 %v350
        %v808 = vunpack.c.l.b16 %v351
        %v809 = vunpack.c.h.b16 %v351
        %v810 = vunpack.c.l.b16 %v352
        %v811 = vunpack.c.h.b16 %v352
        %v812 = vunpack.c.l.b16 %v353
        %v813 = vunpack.c.h.b16 %v353
        %v814 = vunpack.c.l.b16 %v354
        %v815 = vunpack.c.h.b16 %v354
        %v816 = vunpack.c.l.b16 %v355
        %v817 = vunpack.c.h.b16 %v355
        %v818 = vunpack.c.l.b16 %v356
        %v819 = vunpack.c.h.b16 %v356
        %v820 = vunpack.c.l.b16 %v357
        %v821 = vunpack.c.h.b16 %v357
        %v822 = vunpack.c.l.b16 %v358
        %v823 = vunpack.c.h.b16 %v358
        %v824 = vunpack.c.l.b16 %v359
        %v825 = vunpack.c.h.b16 %v359
        %v826 = vunpack.c.l.b16 %v360
        %v827 = vunpack.c.h.b16 %v360
        %v828 = vunpack.c.l.b16 %v361
        %v829 = vunpack.c.h.b16 %v361
        %v830 = vunpack.c.l.b16 %v362
        %v831 = vunpack.c.h.b16 %v362
        %v832 = vunpack.c.l.b16 %v363
        %v833 = vunpack.c.h.b16 %v363
        %v834 = vunpack.c.l.b16 %v364
        %v835 = vunpack.c.h.b16 %v364
        %v836 = vunpack.c.l.b16 %v365
        %v837 = vunpack.c.h.b16 %v365
        %v838 = vunpack.c.l.b16 %v366
        %v839 = vunpack.c.h.b16 %v366
        %v840 = vunpack.c.l.b16 %v367
        %v841 = vunpack.c.h.b16 %v367
        %v842 = vunpack.c.l.b16 %v368
        %v843 = vunpack.c.h.b16 %v368
        %v844 = vunpack.c.l.b16 %v369
        %v845 = vunpack.c.h.b16 %v369
        %v846 = vunpack.c.l.b16 %v370
        %v847 = vunpack.c.h.b16 %v370
        %v848 = vunpack.c.l.b16 %v371
        %v849 = vunpack.c.h.b16 %v371
        %v850 = vunpack.c.l.b16 %v372
        %v851 = vunpack.c.h.b16 %v372
        %v852 = vunpack.c.l.b16 %v373
        %v853 = vunpack.c.h.b16 %v373
        %v854 = vunpack.c.l.b16 %v374
        %v855 = vunpack.c.h.b16 %v374
        %v856 = vunpack.c.l.b16 %v375
        %v857 = vunpack.c.h.b16 %v375
        %v858 = vunpack.c.l.b16 %v376
        %v859 = vunpack.c.h.b16 %v376
        %v860 = vunpack.c.l.b16 %v377
        %v861 = vunpack.c.h.b16 %v377
        %v862 = vunpack.c.l.b16 %v378
        %v863 = vunpack.c.h.b16 %v378
        %v864 = vunpack.c.l.b16 %v379
        %v865 = vunpack.c.h.b16 %v379
        %v866 = vunpack.c.l.b16 %v380
        %v867 = vunpack.c.h.b16 %v380
        %v868 = vunpack.c.l.b16 %v381
        %v869 = vunpack.c.h.b16 %v381
        %v870 = vunpack.c.l.b16 %v382
        %v871 = vunpack.c.h.b16 %v382
        %v872 = vunpack.c.l.b16 %v383
        %v873 = vunpack.c.h.b16 %v383
        %v874 = vunpack.c.l.b16 %v384
        %v875 = vunpack.c.h.b16 %v384
        %v876 = vunpack.c.l.b16 %v385
        %v877 = vunpack.c.h.b16 %v385
        %v878 = vunpack.c.l.b16 %v386
        %v879 = vunpack.c.h.b16 %v386
        %v880 = vunpack.c.l.b16 %v387
        %v881 = vunpack.c.h.b16 %v387
        %v882 = vunpack.c.l.b16 %v388
        %v883 = vunpack.c.h.b16 %v388
        %v884 = vunpack.c.l.b16 %v389
        %v885 = vunpack.c.h.b16 %v389
        %v886 = vunpack.c.l.b16 %v390
        %v887 = vunpack.c.h.b16 %v390
        %v888 = vunpack.c.l.b16 %v391
        %v889 = vunpack.c.h.b16 %v391
        %v890 = vunpack.c.l.b16 %v392
        %v891 = vunpack.c.h.b16 %v392
        %v892 = vunpack.c.l.b16 %v393
        %v893 = vunpack.c.h.b16 %v393
        %v894 = vunpack.c.l.b16 %v394
        %v895 = vunpack.c.h.b16 %v394
        %v896 = vunpack.c.l.b16 %v395
        %v897 = vunpack.c.h.b16 %v395
        %v898 = vunpack.c.l.b16 %v396
        %v899 = vunpack.c.h.b16 %v396
        %v900 = vunpack.c.l.b16 %v397
        %v901 = vunpack.c.h.b16 %v397
        %v902 = vunpack.c.l.b16 %v398
        %v903 = vunpack.c.h.b16 %v398
        %v904 = vunpack.c.l.b16 %v399
        %v905 = vunpack.c.h.b16 %v399
        %v906 = vunpack.c.l.b16 %v400
        %v907 = vunpack.c.h.b16 %v400
        %v908 = vunpack.c.l.b16 %v401
        %v909 = vunpack.c.h.b16 %v401
        %v910 = vunpack.c.l.b16 %v402
        %v911 = vunpack.c.h.b16 %v402
        %v912 = vunpack.c.l.b16 %v403
        %v913 = vunpack.c.h.b16 %v403
        %v914 = vunpack.c.l.b16 %v404
        %v915 = vunpack.c.h.b16 %v404
        %v916 = vunpack.c.l.b16 %v405
        %v917 = vunpack.c.h.b16 %v405
        %v918 = vunpack.c.l.b16 %v406
        %v919 = vunpack.c.h.b16 %v406
        %v920 = vunpack.c.l.b16 %v407
        %v921 = vunpack.c.h.b16 %v407
        %v922 = vunpack.c.l.b16 %v408
        %v923 = vunpack.c.h.b16 %v408
        %v924 = vunpack.c.l.b16 %v409
        %v925 = vunpack.c.h.b16 %v409
        %v926 = vunpack.c.l.b16 %v410
        %v927 = vunpack.c.h.b16 %v410
        %v928 = vunpack.c.l.b16 %v411
        %v929 = vunpack.c.h.b16 %v411
        %v930 = vunpack.c.l.b16 %v412
        %v931 = vunpack.c.h.b16 %v412
        %v932 = vunpack.c.l.b16 %v413
        %v933 = vunpack.c.h.b16 %v413
        %v934 = vunpack.c.l.b16 %v414
        %v935 = vunpack.c.h.b16 %v414
        %v936 = vunpack.c.l.b16 %v415
        %v937 = vunpack.c.h.b16 %v415
        %v938 = vunpack.c.l.b16 %v416
        %v939 = vunpack.c.h.b16 %v416
        %v940 = vunpack.c.l.b16 %v417
        %v941 = vunpack.c.h.b16 %v417
        %v942 = vunpack.c.l.b16 %v418
        %v943 = vunpack.c.h.b16 %v418
        %v944 = vunpack.c.l.b16 %v419
        %v945 = vunpack.c.h.b16 %v419
        %v946 = vunpack.c.l.b16 %v420
        %v947 = vunpack.c.h.b16 %v420
        %v948 = vunpack.c.l.b16 %v421
        %v949 = vunpack.c.h.b16 %v421
        %v950 = vunpack.c.l.b16 %v422
        %v951 = vunpack.c.h.b16 %v422
        %v952 = vunpack.c.l.b16 %v423
        %v953 = vunpack.c.h.b16 %v423
        %v954 = vunpack.c.l.b16 %v424
        %v955 = vunpack.c.h.b16 %v424
        %v956 = vunpack.c.l.b16 %v425
        %v957 = vunpack.c.h.b16 %v425
        %v958 = vunpack.c.l.b16 %v426
        %v959 = vunpack.c.h.b16 %v426
        %v960 = vunpack.c.l.b16 %v427
        %v961 = vunpack.c.h.b16 %v427
        %v962 = vunpack.c.l.b16 %v428
        %v963 = vunpack.c.h.b16 %v428
        %v964 = vunpack.c.l.b16 %v429
        %v965 = vunpack.c.h.b16 %v429
        %v966 = vunpack.c.l.b16 %v430
        %v967 = vunpack.c.h.b16 %v430
        %v968 = vunpack.c.l.b16 %v431
        %v969 = vunpack.c.h.b16 %v431
        %v970 = vunpack.c.l.b16 %v432
        %v971 = vunpack.c.h.b16 %v432
        %v972 = vunpack.c.l.b16 %v433
        %v973 = vunpack.c.h.b16 %v433
        %v974 = vunpack.c.l.b16 %v434
        %v975 = vunpack.c.h.b16 %v434
        %v976 = vunpack.c.l.b16 %v435
        %v977 = vunpack.c.h.b16 %v435
        %v978 = vunpack.c.l.b16 %v436
        %v979 = vunpack.c.h.b16 %v436
        %v980 = vunpack.c.l.b16 %v437
        %v981 = vunpack.c.h.b16 %v437
        %v982 = vunpack.c.l.b16 %v438
        %v983 = vunpack.c.h.b16 %v438
        %v984 = vunpack.c.l.b16 %v439
        %v985 = vunpack.c.h.b16 %v439
        %v986 = vunpack.c.l.b16 %v440
        %v987 = vunpack.c.h.b16 %v440
        %v988 = vunpack.c.l.b16 %v441
        %v989 = vunpack.c.h.b16 %v441
        %v990 = vunpack.c.l.b16 %v442
        %v991 = vunpack.c.h.b16 %v442
        %v992 = vunpack.c.l.b16 %v443
        %v993 = vunpack.c.h.b16 %v443
        %v994 = vunpack.c.l.b16 %v444
        %v995 = vunpack.c.h.b16 %v444
        %v996 = vunpack.c.l.b16 %v445
        %v997 = vunpack.c.h.b16 %v445
        %v998 = vunpack.c.l.b16 %v446
        %v999 = vunpack.c.h.b16 %v446
        %v1000 = vunpack.c.l.b16 %v447
        %v1001 = vunpack.c.h.b16 %v447
        %v1002 = vunpack.c.l.b16 %v448
        %v1003 = vunpack.c.h.b16 %v448
        %v1004 = vunpack.c.l.b16 %v449
        %v1005 = vunpack.c.h.b16 %v449
        %v1006 = vunpack.c.l.b16 %v450
        %v1007 = vunpack.c.h.b16 %v450
        %v1008 = vunpack.c.l.b16 %v451
        %v1009 = vunpack.c.h.b16 %v451
        %v1010 = vunpack.c.l.b16 %v452
        %v1011 = vunpack.c.h.b16 %v452
        %v1012 = vunpack.c.l.b16 %v453
        %v1013 = vunpack.c.h.b16 %v453
        %v1014 = vunpack.c.l.b16 %v454
        %v1015 = vunpack.c.h.b16 %v454
        %v1016 = vunpack.c.l.b16 %v455
        %v1017 = vunpack.c.h.b16 %v455
        %v1018 = vpack.c.b16 %v770, %v762
        %v1019 = vpack.c.b16 %v771, %v763
        %v1020 = vpack.c.b16 %v772, %v764
        %v1021 = vpack.c.b16 %v773, %v765
        %v1022 = vpack.c.b16 %v774, %v766
        %v1023 = vpack.c.b16 %v775, %v767
        %v1024 = vpack.c.b16 %v776, %v768
        %v1025 = vpack.c.b16 %v777, %v769
        %v1026 = vpack.c.b16 %v786, %v778
        %v1027 = vpack.c.b16 %v787, %v779
        %v1028 = vpack.c.b16 %v788, %v780
        %v1029 = vpack.c.b16 %v789, %v781
        %v1030 = vpack.c.b16 %v790, %v782
        %v1031 = vpack.c.b16 %v791, %v783
        %v1032 = vpack.c.b16 %v792, %v784
        %v1033 = vpack.c.b16 %v793, %v785
        %v1034 = vpack.c.b16 %v802, %v794
        %v1035 = vpack.c.b16 %v803, %v795
        %v1036 = vpack.c.b16 %v804, %v796
        %v1037 = vpack.c.b16 %v805, %v797
        %v1038 = vpack.c.b16 %v806, %v798
        %v1039 = vpack.c.b16 %v807, %v799
        %v1040 = vpack.c.b16 %v808, %v800
        %v1041 = vpack.c.b16 %v809, %v801
        %v1042 = vpack.c.b16 %v818, %v810
        %v1043 = vpack.c.b16 %v819, %v811
        %v1044 = vpack.c.b16 %v820, %v812
        %v1045 = vpack.c.b16 %v821, %v813
        %v1046 = vpack.c.b16 %v822, %v814
        %v1047 = vpack.c.b16 %v823, %v815
        %v1048 = vpack.c.b16 %v824, %v816
        %v1049 = vpack.c.b16 %v825, %v817
        %v1050 = vpack.c.b16 %v834, %v826
        %v1051 = vpack.c.b16 %v835, %v827
        %v1052 = vpack.c.b16 %v836, %v828
        %v1053 = vpack.c.b16 %v837, %v829
        %v1054 = vpack.c.b16 %v838, %v830
        %v1055 = vpack.c.b16 %v839, %v831
        %v1056 = vpack.c.b16 %v840, %v832
        %v1057 = vpack.c.b16 %v841, %v833
        %v1058 = vpack.c.b16 %v850, %v842
        %v1059 = vpack.c.b16 %v851, %v843
        %v1060 = vpack.c.b16 %v852, %v844
        %v1061 = vpack.c.b16 %v853, %v845
        %v1062 = vpack.c.b16 %v854, %v846
        %v1063 = vpack.c.b16 %v855, %v847
        %v1064 = vpack.c.b16 %v856, %v848
        %v1065 = vpack.c.b16 %v857, %v849
        %v1066 = vpack.c.b16 %v866, %v858
        %v1067 = vpack.c.b16 %v867, %v859
        %v1068 = vpack.c.b16 %v868, %v860
        %v1069 = vpack.c.b16 %v869, %v861
        %v1070 = vpack.c.b16 %v870, %v862
        %v1071 = vpack.c.b16 %v871, %v863
        %v1072 = vpack.c.b16 %v872, %v864
        %v1073 = vpack.c.b16 %v873, %v865
        %v1074 = vpack.c.b16 %v882, %v874
        %v1075 = vpack.c.b16 %v883, %v875
        %v1076 = vpack.c.b16 %v884, %v876
        %v1077 = vpack.c.b16 %v885, %v877
        %v1078 = vpack.c.b16 %v886, %v878
        %v1079 = vpack.c.b16 %v887, %v879
        %v1080 = vpack.c.b16 %v888, %v880
        %v1081 = vpack.c.b16 %v889, %v881
        %v1082 = vpack.c.b16 %v898, %v890
        %v1083 = vpack.c.b16 %v899, %v891
        %v1084 = vpack.c.b16 %v900, %v892
        %v1085 = vpack.c.b16 %v901, %v893
        %v1086 = vpack.c.b16 %v902, %v894
        %v1087 = vpack.c.b16 %v903, %v895
        %v1088 = vpack.c.b16 %v904, %v896
        %v1089 = vpack.c.b16 %v905, %v897
        %v1090 = vpack.c.b16 %v914, %v906
        %v1091 = vpack.c.b16 %v915, %v907
        %v1092 = vpack.c.b16 %v916, %v908
        %v1093 = vpack.c.b16 %v917, %v909
        %v1094 = vpack.c.b16 %v918, %v910
        %v1095 = vpack.c.b16 %v919, %v911
        %v1096 = vpack.c.b16 %v920, %v912
        %v1097 = vpack.c.b16 %v921, %v913
        %v1098 = vpack.c.b16 %v930, %v922
        %v1099 = vpack.c.b16 %v931, %v923
        %v1100 = vpack.c.b16 %v932, %v924
        %v1101 = vpack.c.b16 %v933, %v925
        %v1102 = vpack.c.b16 %v934, %v926
        %v1103 = vpack.c.b16 %v935, %v927
        %v1104 = vpack.c.b16 %v936, %v928
        %v1105 = vpack.c.b16 %v937, %v929
        %v1106 = vpack.c.b16 %v946, %v938
        %v1107 = vpack.c.b16 %v947, %v939
        %v1108 = vpack.c.b16 %v948, %v940
        %v1109 = vpack.c.b16 %v949, %v941
        %v1110 = vpack.c.b16 %v950, %v942
        %v1111 = vpack.c.b16 %v951, %v943
        %v1112 = vpack.c.b16 %v952, %v944
        %v1113 = vpack.c.b16 %v953, %v945
        %v1114 = vpack.c.b16 %v962, %v954
        %v1115 = vpack.c.b16 %v963, %v955
        %v1116 = vpack.c.b16 %v964, %v956
        %v1117 = vpack.c.b16 %v965, %v957
        %v1118 = vpack.c.b16 %v966, %v958
        %v1119 = vpack.c.b16 %v967, %v959
        %v1120 = vpack.c.b16 %v968, %v960
        %v1121 = vpack.c.b16 %v969, %v961
        %v1122 = vpack.c.b16 %v978, %v970
        %v1123 = vpack.c.b16 %v979, %v971
        %v1124 = vpack.c.b16 %v980, %v972
        %v1125 = vpack.c.b16 %v981, %v973
        %v1126 = vpack.c.b16 %v982, %v974
        %v1127 = vpack.c.b16 %v983, %v975
        %v1128 = vpack.c.b16 %v984, %v976
        %v1129 = vpack.c.b16 %v985, %v977
        %v1130 = vpack.c.b16 %v994, %v986
        %v1131 = vpack.c.b16 %v995, %v987
        %v1132 = vpack.c.b16 %v996, %v988
        %v1133 = vpack.c.b16 %v997, %v989
        %v1134 = vpack.c.b16 %v998, %v990
        %v1135 = vpack.c.b16 %v999, %v991
        %v1136 = vpack.c.b16 %v1000, %v992
        %v1137 = vpack.c.b16 %v1001, %v993
        %v1138 = vpack.c.b16 %v1010, %v1002
        %v1139 = vpack.c.b16 %v1011, %v1003
        %v1140 = vpack.c.b16 %v1012, %v1004
        %v1141 = vpack.c.b16 %v1013, %v1005
        %v1142 = vpack.c.b16 %v1014, %v1006
        %v1143 = vpack.c.b16 %v1015, %v1007
        %v1144 = vpack.c.b16 %v1016, %v1008
        %v1145 = vpack.c.b16 %v1017, %v1009
        %1274 = vmatpush.bf16.msra.mxu0 %v1074
        %1275 = vmatpush.bf16.msra.mxu0 %v1066
        %1276 = vmatpush.bf16.msra.mxu0 %v1058
        %1277 = vmatpush.bf16.msra.mxu0 %v1050
        %1278 = vmatpush.bf16.msra.mxu0 %v1042
        %1279 = vmatpush.bf16.msra.mxu0 %v1034
        %1280 = vmatpush.bf16.msra.mxu0 %v1026
        %1281 = vmatpush.bf16.msra.mxu0 %v1018
        %1282 = vmatmul.bf16.gmra.mxu0 %v570
        %v1283 = vpop.f32.mrf.mxu0
        %v1284 = vadd.f32 %v458, %v1283
        %v1285 = vpop.f32.mrf.mxu0
        %v1286 = vadd.f32 %v458, %v1285
        %1287 = vmatmul.bf16.gmra.mxu0 %v572
        %v1288 = vpop.f32.mrf.mxu0
        %v1289 = vadd.f32 %v458, %v1288
        %v1290 = vpop.f32.mrf.mxu0
        %v1291 = vadd.f32 %v458, %v1290
        %1292 = vmatmul.bf16.gmra.mxu0 %v574
        %v1293 = vpop.f32.mrf.mxu0
        %v1294 = vadd.f32 %v458, %v1293
        %v1295 = vpop.f32.mrf.mxu0
        %v1296 = vadd.f32 %v458, %v1295
        %1297 = vmatmul.bf16.gmra.mxu0 %v576
        %v1298 = vpop.f32.mrf.mxu0
        %v1299 = vadd.f32 %v458, %v1298
        %v1300 = vpop.f32.mrf.mxu0
        %v1301 = vadd.f32 %v458, %v1300
        %1302 = vmatmul.bf16.gmra.mxu0 %v578
        %v1303 = vpop.f32.mrf.mxu0
        %v1304 = vadd.f32 %v458, %v1303
        %v1305 = vpop.f32.mrf.mxu0
        %v1306 = vadd.f32 %v458, %v1305
        %1307 = vmatmul.bf16.gmra.mxu0 %v580
        %v1308 = vpop.f32.mrf.mxu0
        %v1309 = vadd.f32 %v458, %v1308
        %v1310 = vpop.f32.mrf.mxu0
        %v1311 = vadd.f32 %v458, %v1310
        %1312 = vmatmul.bf16.gmra.mxu0 %v582
        %v1313 = vpop.f32.mrf.mxu0
        %v1314 = vadd.f32 %v458, %v1313
        %v1315 = vpop.f32.mrf.mxu0
        %v1316 = vadd.f32 %v458, %v1315
        %1317 = vmatmul.bf16.gmra.mxu0 %v584
        %v1318 = vpop.f32.mrf.mxu0
        %v1319 = vadd.f32 %v458, %v1318
        %v1320 = vpop.f32.mrf.mxu0
        %v1321 = vadd.f32 %v458, %v1320
        %1322 = vmatmul.bf16.gmra.mxu0 %v586
        %v1323 = vpop.f32.mrf.mxu0
        %v1324 = vadd.f32 %v458, %v1323
        %v1325 = vpop.f32.mrf.mxu0
        %v1326 = vadd.f32 %v458, %v1325
        %1327 = vmatmul.bf16.gmra.mxu0 %v588
        %v1328 = vpop.f32.mrf.mxu0
        %v1329 = vadd.f32 %v458, %v1328
        %v1330 = vpop.f32.mrf.mxu0
        %v1331 = vadd.f32 %v458, %v1330
        %1332 = vmatmul.bf16.gmra.mxu0 %v590
        %v1333 = vpop.f32.mrf.mxu0
        %v1334 = vadd.f32 %v458, %v1333
        %v1335 = vpop.f32.mrf.mxu0
        %v1336 = vadd.f32 %v458, %v1335
        %1337 = vmatmul.bf16.gmra.mxu0 %v592
        %v1338 = vpop.f32.mrf.mxu0
        %v1339 = vadd.f32 %v458, %v1338
        %v1340 = vpop.f32.mrf.mxu0
        %v1341 = vadd.f32 %v458, %v1340
        %1342 = vmatmul.bf16.gmra.mxu0 %v594
        %v1343 = vpop.f32.mrf.mxu0
        %v1344 = vadd.f32 %v458, %v1343
        %v1345 = vpop.f32.mrf.mxu0
        %v1346 = vadd.f32 %v458, %v1345
        %1347 = vmatmul.bf16.gmra.mxu0 %v596
        %v1348 = vpop.f32.mrf.mxu0
        %v1349 = vadd.f32 %v458, %v1348
        %v1350 = vpop.f32.mrf.mxu0
        %v1351 = vadd.f32 %v458, %v1350
        %1352 = vmatmul.bf16.gmra.mxu0 %v598
        %v1353 = vpop.f32.mrf.mxu0
        %v1354 = vadd.f32 %v458, %v1353
        %v1355 = vpop.f32.mrf.mxu0
        %v1356 = vadd.f32 %v458, %v1355
        %1357 = vmatmul.bf16.gmra.mxu0 %v600
        %v1358 = vpop.f32.mrf.mxu0
        %v1359 = vadd.f32 %v458, %v1358
        %v1360 = vpop.f32.mrf.mxu0
        %v1361 = vadd.f32 %v458, %v1360
        %1362 = vdwg.mxu0
        %1363 = vmatpush.bf16.msra.mxu0 %v1138
        %1364 = vmatpush.bf16.msra.mxu0 %v1130
        %1365 = vmatpush.bf16.msra.mxu0 %v1122
        %1366 = vmatpush.bf16.msra.mxu0 %v1114
        %1367 = vmatpush.bf16.msra.mxu0 %v1106
        %1368 = vmatpush.bf16.msra.mxu0 %v1098
        %1369 = vmatpush.bf16.msra.mxu0 %v1090
        %1370 = vmatpush.bf16.msra.mxu0 %v1082
        %1371 = vmatmul.bf16.gmra.mxu0 %v571
        %v1372 = vpop.f32.mrf.mxu0
        %v1373 = vadd.f32 %v1284, %v1372
        %v1374 = vpop.f32.mrf.mxu0
        %v1375 = vadd.f32 %v1286, %v1374
        %1376 = vmatmul.bf16.gmra.mxu0 %v573
        %v1377 = vpop.f32.mrf.mxu0
        %v1378 = vadd.f32 %v1289, %v1377
        %v1379 = vpop.f32.mrf.mxu0
        %v1380 = vadd.f32 %v1291, %v1379
        %1381 = vmatmul.bf16.gmra.mxu0 %v575
        %v1382 = vpop.f32.mrf.mxu0
        %v1383 = vadd.f32 %v1294, %v1382
        %v1384 = vpop.f32.mrf.mxu0
        %v1385 = vadd.f32 %v1296, %v1384
        %1386 = vmatmul.bf16.gmra.mxu0 %v577
        %v1387 = vpop.f32.mrf.mxu0
        %v1388 = vadd.f32 %v1299, %v1387
        %v1389 = vpop.f32.mrf.mxu0
        %v1390 = vadd.f32 %v1301, %v1389
        %1391 = vmatmul.bf16.gmra.mxu0 %v579
        %v1392 = vpop.f32.mrf.mxu0
        %v1393 = vadd.f32 %v1304, %v1392
        %v1394 = vpop.f32.mrf.mxu0
        %v1395 = vadd.f32 %v1306, %v1394
        %1396 = vmatmul.bf16.gmra.mxu0 %v581
        %v1397 = vpop.f32.mrf.mxu0
        %v1398 = vadd.f32 %v1309, %v1397
        %v1399 = vpop.f32.mrf.mxu0
        %v1400 = vadd.f32 %v1311, %v1399
        %1401 = vmatmul.bf16.gmra.mxu0 %v583
        %v1402 = vpop.f32.mrf.mxu0
        %v1403 = vadd.f32 %v1314, %v1402
        %v1404 = vpop.f32.mrf.mxu0
        %v1405 = vadd.f32 %v1316, %v1404
        %1406 = vmatmul.bf16.gmra.mxu0 %v585
        %v1407 = vpop.f32.mrf.mxu0
        %v1408 = vadd.f32 %v1319, %v1407
        %v1409 = vpop.f32.mrf.mxu0
        %v1410 = vadd.f32 %v1321, %v1409
        %1411 = vmatmul.bf16.gmra.mxu0 %v587
        %v1412 = vpop.f32.mrf.mxu0
        %v1413 = vadd.f32 %v1324, %v1412
        %v1414 = vpop.f32.mrf.mxu0
        %v1415 = vadd.f32 %v1326, %v1414
        %1416 = vmatmul.bf16.gmra.mxu0 %v589
        %v1417 = vpop.f32.mrf.mxu0
        %v1418 = vadd.f32 %v1329, %v1417
        %v1419 = vpop.f32.mrf.mxu0
        %v1420 = vadd.f32 %v1331, %v1419
        %1421 = vmatmul.bf16.gmra.mxu0 %v591
        %v1422 = vpop.f32.mrf.mxu0
        %v1423 = vadd.f32 %v1334, %v1422
        %v1424 = vpop.f32.mrf.mxu0
        %v1425 = vadd.f32 %v1336, %v1424
        %1426 = vmatmul.bf16.gmra.mxu0 %v593
        %v1427 = vpop.f32.mrf.mxu0
        %v1428 = vadd.f32 %v1339, %v1427
        %v1429 = vpop.f32.mrf.mxu0
        %v1430 = vadd.f32 %v1341, %v1429
        %1431 = vmatmul.bf16.gmra.mxu0 %v595
        %v1432 = vpop.f32.mrf.mxu0
        %v1433 = vadd.f32 %v1344, %v1432
        %v1434 = vpop.f32.mrf.mxu0
        %v1435 = vadd.f32 %v1346, %v1434
        %1436 = vmatmul.bf16.gmra.mxu0 %v597
        %v1437 = vpop.f32.mrf.mxu0
        %v1438 = vadd.f32 %v1349, %v1437
        %v1439 = vpop.f32.mrf.mxu0
        %v1440 = vadd.f32 %v1351, %v1439
        %1441 = vmatmul.bf16.gmra.mxu0 %v599
        %v1442 = vpop.f32.mrf.mxu0
        %v1443 = vadd.f32 %v1354, %v1442
        %v1444 = vpop.f32.mrf.mxu0
        %v1445 = vadd.f32 %v1356, %v1444
        %1446 = vmatmul.bf16.gmra.mxu0 %v601
        %v1447 = vpop.f32.mrf.mxu0
        %v1448 = vadd.f32 %v1359, %v1447
        %v1449 = vpop.f32.mrf.mxu0
        %v1450 = vadd.f32 %v1361, %v1449
        %1451 = vdwg.mxu0
        %1452 = vmatpush.bf16.msra.mxu0 %v1075
        %1453 = vmatpush.bf16.msra.mxu0 %v1067
        %1454 = vmatpush.bf16.msra.mxu0 %v1059
        %1455 = vmatpush.bf16.msra.mxu0 %v1051
        %1456 = vmatpush.bf16.msra.mxu0 %v1043
        %1457 = vmatpush.bf16.msra.mxu0 %v1035
        %1458 = vmatpush.bf16.msra.mxu0 %v1027
        %1459 = vmatpush.bf16.msra.mxu0 %v1019
        %1460 = vmatmul.bf16.gmra.mxu0 %v570
        %v1461 = vpop.f32.mrf.mxu0
        %v1462 = vadd.f32 %v459, %v1461
        %v1463 = vpop.f32.mrf.mxu0
        %v1464 = vadd.f32 %v459, %v1463
        %1465 = vmatmul.bf16.gmra.mxu0 %v572
        %v1466 = vpop.f32.mrf.mxu0
        %v1467 = vadd.f32 %v459, %v1466
        %v1468 = vpop.f32.mrf.mxu0
        %v1469 = vadd.f32 %v459, %v1468
        %1470 = vmatmul.bf16.gmra.mxu0 %v574
        %v1471 = vpop.f32.mrf.mxu0
        %v1472 = vadd.f32 %v459, %v1471
        %v1473 = vpop.f32.mrf.mxu0
        %v1474 = vadd.f32 %v459, %v1473
        %1475 = vmatmul.bf16.gmra.mxu0 %v576
        %v1476 = vpop.f32.mrf.mxu0
        %v1477 = vadd.f32 %v459, %v1476
        %v1478 = vpop.f32.mrf.mxu0
        %v1479 = vadd.f32 %v459, %v1478
        %1480 = vmatmul.bf16.gmra.mxu0 %v578
        %v1481 = vpop.f32.mrf.mxu0
        %v1482 = vadd.f32 %v459, %v1481
        %v1483 = vpop.f32.mrf.mxu0
        %v1484 = vadd.f32 %v459, %v1483
        %1485 = vmatmul.bf16.gmra.mxu0 %v580
        %v1486 = vpop.f32.mrf.mxu0
        %v1487 = vadd.f32 %v459, %v1486
        %v1488 = vpop.f32.mrf.mxu0
        %v1489 = vadd.f32 %v459, %v1488
        %1490 = vmatmul.bf16.gmra.mxu0 %v582
        %v1491 = vpop.f32.mrf.mxu0
        %v1492 = vadd.f32 %v459, %v1491
        %v1493 = vpop.f32.mrf.mxu0
        %v1494 = vadd.f32 %v459, %v1493
        %1495 = vmatmul.bf16.gmra.mxu0 %v584
        %v1496 = vpop.f32.mrf.mxu0
        %v1497 = vadd.f32 %v459, %v1496
        %v1498 = vpop.f32.mrf.mxu0
        %v1499 = vadd.f32 %v459, %v1498
        %1500 = vmatmul.bf16.gmra.mxu0 %v586
        %v1501 = vpop.f32.mrf.mxu0
        %v1502 = vadd.f32 %v459, %v1501
        %v1503 = vpop.f32.mrf.mxu0
        %v1504 = vadd.f32 %v459, %v1503
        %1505 = vmatmul.bf16.gmra.mxu0 %v588
        %v1506 = vpop.f32.mrf.mxu0
        %v1507 = vadd.f32 %v459, %v1506
        %v1508 = vpop.f32.mrf.mxu0
        %v1509 = vadd.f32 %v459, %v1508
        %1510 = vmatmul.bf16.gmra.mxu0 %v590
        %v1511 = vpop.f32.mrf.mxu0
        %v1512 = vadd.f32 %v459, %v1511
        %v1513 = vpop.f32.mrf.mxu0
        %v1514 = vadd.f32 %v459, %v1513
        %1515 = vmatmul.bf16.gmra.mxu0 %v592
        %v1516 = vpop.f32.mrf.mxu0
        %v1517 = vadd.f32 %v459, %v1516
        %v1518 = vpop.f32.mrf.mxu0
        %v1519 = vadd.f32 %v459, %v1518
        %1520 = vmatmul.bf16.gmra.mxu0 %v594
        %v1521 = vpop.f32.mrf.mxu0
        %v1522 = vadd.f32 %v459, %v1521
        %v1523 = vpop.f32.mrf.mxu0
        %v1524 = vadd.f32 %v459, %v1523
        %1525 = vmatmul.bf16.gmra.mxu0 %v596
        %v1526 = vpop.f32.mrf.mxu0
        %v1527 = vadd.f32 %v459, %v1526
        %v1528 = vpop.f32.mrf.mxu0
        %v1529 = vadd.f32 %v459, %v1528
        %1530 = vmatmul.bf16.gmra.mxu0 %v598
        %v1531 = vpop.f32.mrf.mxu0
        %v1532 = vadd.f32 %v459, %v1531
        %v1533 = vpop.f32.mrf.mxu0
        %v1534 = vadd.f32 %v459, %v1533
        %1535 = vmatmul.bf16.gmra.mxu0 %v600
        %v1536 = vpop.f32.mrf.mxu0
        %v1537 = vadd.f32 %v459, %v1536
        %v1538 = vpop.f32.mrf.mxu0
        %v1539 = vadd.f32 %v459, %v1538
        %1540 = vdwg.mxu0
        %1541 = vmatpush.bf16.msra.mxu0 %v1139
        %1542 = vmatpush.bf16.msra.mxu0 %v1131
        %1543 = vmatpush.bf16.msra.mxu0 %v1123
        %1544 = vmatpush.bf16.msra.mxu0 %v1115
        %1545 = vmatpush.bf16.msra.mxu0 %v1107
        %1546 = vmatpush.bf16.msra.mxu0 %v1099
        %1547 = vmatpush.bf16.msra.mxu0 %v1091
        %1548 = vmatpush.bf16.msra.mxu0 %v1083
        %1549 = vmatmul.bf16.gmra.mxu0 %v571
        %v1550 = vpop.f32.mrf.mxu0
        %v1551 = vadd.f32 %v1462, %v1550
        %v1552 = vpop.f32.mrf.mxu0
        %v1553 = vadd.f32 %v1464, %v1552
        %1554 = vmatmul.bf16.gmra.mxu0 %v573
        %v1555 = vpop.f32.mrf.mxu0
        %v1556 = vadd.f32 %v1467, %v1555
        %v1557 = vpop.f32.mrf.mxu0
        %v1558 = vadd.f32 %v1469, %v1557
        %1559 = vmatmul.bf16.gmra.mxu0 %v575
        %v1560 = vpop.f32.mrf.mxu0
        %v1561 = vadd.f32 %v1472, %v1560
        %v1562 = vpop.f32.mrf.mxu0
        %v1563 = vadd.f32 %v1474, %v1562
        %1564 = vmatmul.bf16.gmra.mxu0 %v577
        %v1565 = vpop.f32.mrf.mxu0
        %v1566 = vadd.f32 %v1477, %v1565
        %v1567 = vpop.f32.mrf.mxu0
        %v1568 = vadd.f32 %v1479, %v1567
        %1569 = vmatmul.bf16.gmra.mxu0 %v579
        %v1570 = vpop.f32.mrf.mxu0
        %v1571 = vadd.f32 %v1482, %v1570
        %v1572 = vpop.f32.mrf.mxu0
        %v1573 = vadd.f32 %v1484, %v1572
        %1574 = vmatmul.bf16.gmra.mxu0 %v581
        %v1575 = vpop.f32.mrf.mxu0
        %v1576 = vadd.f32 %v1487, %v1575
        %v1577 = vpop.f32.mrf.mxu0
        %v1578 = vadd.f32 %v1489, %v1577
        %1579 = vmatmul.bf16.gmra.mxu0 %v583
        %v1580 = vpop.f32.mrf.mxu0
        %v1581 = vadd.f32 %v1492, %v1580
        %v1582 = vpop.f32.mrf.mxu0
        %v1583 = vadd.f32 %v1494, %v1582
        %1584 = vmatmul.bf16.gmra.mxu0 %v585
        %v1585 = vpop.f32.mrf.mxu0
        %v1586 = vadd.f32 %v1497, %v1585
        %v1587 = vpop.f32.mrf.mxu0
        %v1588 = vadd.f32 %v1499, %v1587
        %1589 = vmatmul.bf16.gmra.mxu0 %v587
        %v1590 = vpop.f32.mrf.mxu0
        %v1591 = vadd.f32 %v1502, %v1590
        %v1592 = vpop.f32.mrf.mxu0
        %v1593 = vadd.f32 %v1504, %v1592
        %1594 = vmatmul.bf16.gmra.mxu0 %v589
        %v1595 = vpop.f32.mrf.mxu0
        %v1596 = vadd.f32 %v1507, %v1595
        %v1597 = vpop.f32.mrf.mxu0
        %v1598 = vadd.f32 %v1509, %v1597
        %1599 = vmatmul.bf16.gmra.mxu0 %v591
        %v1600 = vpop.f32.mrf.mxu0
        %v1601 = vadd.f32 %v1512, %v1600
        %v1602 = vpop.f32.mrf.mxu0
        %v1603 = vadd.f32 %v1514, %v1602
        %1604 = vmatmul.bf16.gmra.mxu0 %v593
        %v1605 = vpop.f32.mrf.mxu0
        %v1606 = vadd.f32 %v1517, %v1605
        %v1607 = vpop.f32.mrf.mxu0
        %v1608 = vadd.f32 %v1519, %v1607
        %1609 = vmatmul.bf16.gmra.mxu0 %v595
        %v1610 = vpop.f32.mrf.mxu0
        %v1611 = vadd.f32 %v1522, %v1610
        %v1612 = vpop.f32.mrf.mxu0
        %v1613 = vadd.f32 %v1524, %v1612
        %1614 = vmatmul.bf16.gmra.mxu0 %v597
        %v1615 = vpop.f32.mrf.mxu0
        %v1616 = vadd.f32 %v1527, %v1615
        %v1617 = vpop.f32.mrf.mxu0
        %v1618 = vadd.f32 %v1529, %v1617
        %1619 = vmatmul.bf16.gmra.mxu0 %v599
        %v1620 = vpop.f32.mrf.mxu0
        %v1621 = vadd.f32 %v1532, %v1620
        %v1622 = vpop.f32.mrf.mxu0
        %v1623 = vadd.f32 %v1534, %v1622
        %1624 = vmatmul.bf16.gmra.mxu0 %v601
        %v1625 = vpop.f32.mrf.mxu0
        %v1626 = vadd.f32 %v1537, %v1625
        %v1627 = vpop.f32.mrf.mxu0
        %v1628 = vadd.f32 %v1539, %v1627
        %1629 = vdwg.mxu0
        %1630 = vmatpush.bf16.msra.mxu0 %v1076
        %1631 = vmatpush.bf16.msra.mxu0 %v1068
        %1632 = vmatpush.bf16.msra.mxu0 %v1060
        %1633 = vmatpush.bf16.msra.mxu0 %v1052
        %1634 = vmatpush.bf16.msra.mxu0 %v1044
        %1635 = vmatpush.bf16.msra.mxu0 %v1036
        %1636 = vmatpush.bf16.msra.mxu0 %v1028
        %1637 = vmatpush.bf16.msra.mxu0 %v1020
        %1638 = vmatmul.bf16.gmra.mxu0 %v570
        %v1639 = vpop.f32.mrf.mxu0
        %v1640 = vadd.f32 %v460, %v1639
        %v1641 = vpop.f32.mrf.mxu0
        %v1642 = vadd.f32 %v460, %v1641
        %1643 = vmatmul.bf16.gmra.mxu0 %v572
        %v1644 = vpop.f32.mrf.mxu0
        %v1645 = vadd.f32 %v460, %v1644
        %v1646 = vpop.f32.mrf.mxu0
        %v1647 = vadd.f32 %v460, %v1646
        %1648 = vmatmul.bf16.gmra.mxu0 %v574
        %v1649 = vpop.f32.mrf.mxu0
        %v1650 = vadd.f32 %v460, %v1649
        %v1651 = vpop.f32.mrf.mxu0
        %v1652 = vadd.f32 %v460, %v1651
        %1653 = vmatmul.bf16.gmra.mxu0 %v576
        %v1654 = vpop.f32.mrf.mxu0
        %v1655 = vadd.f32 %v460, %v1654
        %v1656 = vpop.f32.mrf.mxu0
        %v1657 = vadd.f32 %v460, %v1656
        %1658 = vmatmul.bf16.gmra.mxu0 %v578
        %v1659 = vpop.f32.mrf.mxu0
        %v1660 = vadd.f32 %v460, %v1659
        %v1661 = vpop.f32.mrf.mxu0
        %v1662 = vadd.f32 %v460, %v1661
        %1663 = vmatmul.bf16.gmra.mxu0 %v580
        %v1664 = vpop.f32.mrf.mxu0
        %v1665 = vadd.f32 %v460, %v1664
        %v1666 = vpop.f32.mrf.mxu0
        %v1667 = vadd.f32 %v460, %v1666
        %1668 = vmatmul.bf16.gmra.mxu0 %v582
        %v1669 = vpop.f32.mrf.mxu0
        %v1670 = vadd.f32 %v460, %v1669
        %v1671 = vpop.f32.mrf.mxu0
        %v1672 = vadd.f32 %v460, %v1671
        %1673 = vmatmul.bf16.gmra.mxu0 %v584
        %v1674 = vpop.f32.mrf.mxu0
        %v1675 = vadd.f32 %v460, %v1674
        %v1676 = vpop.f32.mrf.mxu0
        %v1677 = vadd.f32 %v460, %v1676
        %1678 = vmatmul.bf16.gmra.mxu0 %v586
        %v1679 = vpop.f32.mrf.mxu0
        %v1680 = vadd.f32 %v460, %v1679
        %v1681 = vpop.f32.mrf.mxu0
        %v1682 = vadd.f32 %v460, %v1681
        %1683 = vmatmul.bf16.gmra.mxu0 %v588
        %v1684 = vpop.f32.mrf.mxu0
        %v1685 = vadd.f32 %v460, %v1684
        %v1686 = vpop.f32.mrf.mxu0
        %v1687 = vadd.f32 %v460, %v1686
        %1688 = vmatmul.bf16.gmra.mxu0 %v590
        %v1689 = vpop.f32.mrf.mxu0
        %v1690 = vadd.f32 %v460, %v1689
        %v1691 = vpop.f32.mrf.mxu0
        %v1692 = vadd.f32 %v460, %v1691
        %1693 = vmatmul.bf16.gmra.mxu0 %v592
        %v1694 = vpop.f32.mrf.mxu0
        %v1695 = vadd.f32 %v460, %v1694
        %v1696 = vpop.f32.mrf.mxu0
        %v1697 = vadd.f32 %v460, %v1696
        %1698 = vmatmul.bf16.gmra.mxu0 %v594
        %v1699 = vpop.f32.mrf.mxu0
        %v1700 = vadd.f32 %v460, %v1699
        %v1701 = vpop.f32.mrf.mxu0
        %v1702 = vadd.f32 %v460, %v1701
        %1703 = vmatmul.bf16.gmra.mxu0 %v596
        %v1704 = vpop.f32.mrf.mxu0
        %v1705 = vadd.f32 %v460, %v1704
        %v1706 = vpop.f32.mrf.mxu0
        %v1707 = vadd.f32 %v460, %v1706
        %1708 = vmatmul.bf16.gmra.mxu0 %v598
        %v1709 = vpop.f32.mrf.mxu0
        %v1710 = vadd.f32 %v460, %v1709
        %v1711 = vpop.f32.mrf.mxu0
        %v1712 = vadd.f32 %v460, %v1711
        %1713 = vmatmul.bf16.gmra.mxu0 %v600
        %v1714 = vpop.f32.mrf.mxu0
        %v1715 = vadd.f32 %v460, %v1714
        %v1716 = vpop.f32.mrf.mxu0
        %v1717 = vadd.f32 %v460, %v1716
        %1718 = vdwg.mxu0
        %1719 = vmatpush.bf16.msra.mxu0 %v1140
        %1720 = vmatpush.bf16.msra.mxu0 %v1132
        %1721 = vmatpush.bf16.msra.mxu0 %v1124
        %1722 = vmatpush.bf16.msra.mxu0 %v1116
        %1723 = vmatpush.bf16.msra.mxu0 %v1108
        %1724 = vmatpush.bf16.msra.mxu0 %v1100
        %1725 = vmatpush.bf16.msra.mxu0 %v1092
        %1726 = vmatpush.bf16.msra.mxu0 %v1084
        %1727 = vmatmul.bf16.gmra.mxu0 %v571
        %v1728 = vpop.f32.mrf.mxu0
        %v1729 = vadd.f32 %v1640, %v1728
        %v1730 = vpop.f32.mrf.mxu0
        %v1731 = vadd.f32 %v1642, %v1730
        %1732 = vmatmul.bf16.gmra.mxu0 %v573
        %v1733 = vpop.f32.mrf.mxu0
        %v1734 = vadd.f32 %v1645, %v1733
        %v1735 = vpop.f32.mrf.mxu0
        %v1736 = vadd.f32 %v1647, %v1735
        %1737 = vmatmul.bf16.gmra.mxu0 %v575
        %v1738 = vpop.f32.mrf.mxu0
        %v1739 = vadd.f32 %v1650, %v1738
        %v1740 = vpop.f32.mrf.mxu0
        %v1741 = vadd.f32 %v1652, %v1740
        %1742 = vmatmul.bf16.gmra.mxu0 %v577
        %v1743 = vpop.f32.mrf.mxu0
        %v1744 = vadd.f32 %v1655, %v1743
        %v1745 = vpop.f32.mrf.mxu0
        %v1746 = vadd.f32 %v1657, %v1745
        %1747 = vmatmul.bf16.gmra.mxu0 %v579
        %v1748 = vpop.f32.mrf.mxu0
        %v1749 = vadd.f32 %v1660, %v1748
        %v1750 = vpop.f32.mrf.mxu0
        %v1751 = vadd.f32 %v1662, %v1750
        %1752 = vmatmul.bf16.gmra.mxu0 %v581
        %v1753 = vpop.f32.mrf.mxu0
        %v1754 = vadd.f32 %v1665, %v1753
        %v1755 = vpop.f32.mrf.mxu0
        %v1756 = vadd.f32 %v1667, %v1755
        %1757 = vmatmul.bf16.gmra.mxu0 %v583
        %v1758 = vpop.f32.mrf.mxu0
        %v1759 = vadd.f32 %v1670, %v1758
        %v1760 = vpop.f32.mrf.mxu0
        %v1761 = vadd.f32 %v1672, %v1760
        %1762 = vmatmul.bf16.gmra.mxu0 %v585
        %v1763 = vpop.f32.mrf.mxu0
        %v1764 = vadd.f32 %v1675, %v1763
        %v1765 = vpop.f32.mrf.mxu0
        %v1766 = vadd.f32 %v1677, %v1765
        %1767 = vmatmul.bf16.gmra.mxu0 %v587
        %v1768 = vpop.f32.mrf.mxu0
        %v1769 = vadd.f32 %v1680, %v1768
        %v1770 = vpop.f32.mrf.mxu0
        %v1771 = vadd.f32 %v1682, %v1770
        %1772 = vmatmul.bf16.gmra.mxu0 %v589
        %v1773 = vpop.f32.mrf.mxu0
        %v1774 = vadd.f32 %v1685, %v1773
        %v1775 = vpop.f32.mrf.mxu0
        %v1776 = vadd.f32 %v1687, %v1775
        %1777 = vmatmul.bf16.gmra.mxu0 %v591
        %v1778 = vpop.f32.mrf.mxu0
        %v1779 = vadd.f32 %v1690, %v1778
        %v1780 = vpop.f32.mrf.mxu0
        %v1781 = vadd.f32 %v1692, %v1780
        %1782 = vmatmul.bf16.gmra.mxu0 %v593
        %v1783 = vpop.f32.mrf.mxu0
        %v1784 = vadd.f32 %v1695, %v1783
        %v1785 = vpop.f32.mrf.mxu0
        %v1786 = vadd.f32 %v1697, %v1785
        %1787 = vmatmul.bf16.gmra.mxu0 %v595
        %v1788 = vpop.f32.mrf.mxu0
        %v1789 = vadd.f32 %v1700, %v1788
        %v1790 = vpop.f32.mrf.mxu0
        %v1791 = vadd.f32 %v1702, %v1790
        %1792 = vmatmul.bf16.gmra.mxu0 %v597
        %v1793 = vpop.f32.mrf.mxu0
        %v1794 = vadd.f32 %v1705, %v1793
        %v1795 = vpop.f32.mrf.mxu0
        %v1796 = vadd.f32 %v1707, %v1795
        %1797 = vmatmul.bf16.gmra.mxu0 %v599
        %v1798 = vpop.f32.mrf.mxu0
        %v1799 = vadd.f32 %v1710, %v1798
        %v1800 = vpop.f32.mrf.mxu0
        %v1801 = vadd.f32 %v1712, %v1800
        %1802 = vmatmul.bf16.gmra.mxu0 %v601
        %v1803 = vpop.f32.mrf.mxu0
        %v1804 = vadd.f32 %v1715, %v1803
        %v1805 = vpop.f32.mrf.mxu0
        %v1806 = vadd.f32 %v1717, %v1805
        %1807 = vdwg.mxu0
        %1808 = vmatpush.bf16.msra.mxu0 %v1077
        %1809 = vmatpush.bf16.msra.mxu0 %v1069
        %1810 = vmatpush.bf16.msra.mxu0 %v1061
        %1811 = vmatpush.bf16.msra.mxu0 %v1053
        %1812 = vmatpush.bf16.msra.mxu0 %v1045
        %1813 = vmatpush.bf16.msra.mxu0 %v1037
        %1814 = vmatpush.bf16.msra.mxu0 %v1029
        %1815 = vmatpush.bf16.msra.mxu0 %v1021
        %1816 = vmatmul.bf16.gmra.mxu0 %v570
        %v1817 = vpop.f32.mrf.mxu0
        %v1818 = vadd.f32 %v461, %v1817
        %v1819 = vpop.f32.mrf.mxu0
        %v1820 = vadd.f32 %v461, %v1819
        %1821 = vmatmul.bf16.gmra.mxu0 %v572
        %v1822 = vpop.f32.mrf.mxu0
        %v1823 = vadd.f32 %v461, %v1822
        %v1824 = vpop.f32.mrf.mxu0
        %v1825 = vadd.f32 %v461, %v1824
        %1826 = vmatmul.bf16.gmra.mxu0 %v574
        %v1827 = vpop.f32.mrf.mxu0
        %v1828 = vadd.f32 %v461, %v1827
        %v1829 = vpop.f32.mrf.mxu0
        %v1830 = vadd.f32 %v461, %v1829
        %1831 = vmatmul.bf16.gmra.mxu0 %v576
        %v1832 = vpop.f32.mrf.mxu0
        %v1833 = vadd.f32 %v461, %v1832
        %v1834 = vpop.f32.mrf.mxu0
        %v1835 = vadd.f32 %v461, %v1834
        %1836 = vmatmul.bf16.gmra.mxu0 %v578
        %v1837 = vpop.f32.mrf.mxu0
        %v1838 = vadd.f32 %v461, %v1837
        %v1839 = vpop.f32.mrf.mxu0
        %v1840 = vadd.f32 %v461, %v1839
        %1841 = vmatmul.bf16.gmra.mxu0 %v580
        %v1842 = vpop.f32.mrf.mxu0
        %v1843 = vadd.f32 %v461, %v1842
        %v1844 = vpop.f32.mrf.mxu0
        %v1845 = vadd.f32 %v461, %v1844
        %1846 = vmatmul.bf16.gmra.mxu0 %v582
        %v1847 = vpop.f32.mrf.mxu0
        %v1848 = vadd.f32 %v461, %v1847
        %v1849 = vpop.f32.mrf.mxu0
        %v1850 = vadd.f32 %v461, %v1849
        %1851 = vmatmul.bf16.gmra.mxu0 %v584
        %v1852 = vpop.f32.mrf.mxu0
        %v1853 = vadd.f32 %v461, %v1852
        %v1854 = vpop.f32.mrf.mxu0
        %v1855 = vadd.f32 %v461, %v1854
        %1856 = vmatmul.bf16.gmra.mxu0 %v586
        %v1857 = vpop.f32.mrf.mxu0
        %v1858 = vadd.f32 %v461, %v1857
        %v1859 = vpop.f32.mrf.mxu0
        %v1860 = vadd.f32 %v461, %v1859
        %1861 = vmatmul.bf16.gmra.mxu0 %v588
        %v1862 = vpop.f32.mrf.mxu0
        %v1863 = vadd.f32 %v461, %v1862
        %v1864 = vpop.f32.mrf.mxu0
        %v1865 = vadd.f32 %v461, %v1864
        %1866 = vmatmul.bf16.gmra.mxu0 %v590
        %v1867 = vpop.f32.mrf.mxu0
        %v1868 = vadd.f32 %v461, %v1867
        %v1869 = vpop.f32.mrf.mxu0
        %v1870 = vadd.f32 %v461, %v1869
        %1871 = vmatmul.bf16.gmra.mxu0 %v592
        %v1872 = vpop.f32.mrf.mxu0
        %v1873 = vadd.f32 %v461, %v1872
        %v1874 = vpop.f32.mrf.mxu0
        %v1875 = vadd.f32 %v461, %v1874
        %1876 = vmatmul.bf16.gmra.mxu0 %v594
        %v1877 = vpop.f32.mrf.mxu0
        %v1878 = vadd.f32 %v461, %v1877
        %v1879 = vpop.f32.mrf.mxu0
        %v1880 = vadd.f32 %v461, %v1879
        %1881 = vmatmul.bf16.gmra.mxu0 %v596
        %v1882 = vpop.f32.mrf.mxu0
        %v1883 = vadd.f32 %v461, %v1882
        %v1884 = vpop.f32.mrf.mxu0
        %v1885 = vadd.f32 %v461, %v1884
        %1886 = vmatmul.bf16.gmra.mxu0 %v598
        %v1887 = vpop.f32.mrf.mxu0
        %v1888 = vadd.f32 %v461, %v1887
        %v1889 = vpop.f32.mrf.mxu0
        %v1890 = vadd.f32 %v461, %v1889
        %1891 = vmatmul.bf16.gmra.mxu0 %v600
        %v1892 = vpop.f32.mrf.mxu0
        %v1893 = vadd.f32 %v461, %v1892
        %v1894 = vpop.f32.mrf.mxu0
        %v1895 = vadd.f32 %v461, %v1894
        %1896 = vdwg.mxu0
        %1897 = vmatpush.bf16.msra.mxu0 %v1141
        %1898 = vmatpush.bf16.msra.mxu0 %v1133
        %1899 = vmatpush.bf16.msra.mxu0 %v1125
        %1900 = vmatpush.bf16.msra.mxu0 %v1117
        %1901 = vmatpush.bf16.msra.mxu0 %v1109
        %1902 = vmatpush.bf16.msra.mxu0 %v1101
        %1903 = vmatpush.bf16.msra.mxu0 %v1093
        %1904 = vmatpush.bf16.msra.mxu0 %v1085
        %1905 = vmatmul.bf16.gmra.mxu0 %v571
        %v1906 = vpop.f32.mrf.mxu0
        %v1907 = vadd.f32 %v1818, %v1906
        %v1908 = vpop.f32.mrf.mxu0
        %v1909 = vadd.f32 %v1820, %v1908
        %1910 = vmatmul.bf16.gmra.mxu0 %v573
        %v1911 = vpop.f32.mrf.mxu0
        %v1912 = vadd.f32 %v1823, %v1911
        %v1913 = vpop.f32.mrf.mxu0
        %v1914 = vadd.f32 %v1825, %v1913
        %1915 = vmatmul.bf16.gmra.mxu0 %v575
        %v1916 = vpop.f32.mrf.mxu0
        %v1917 = vadd.f32 %v1828, %v1916
        %v1918 = vpop.f32.mrf.mxu0
        %v1919 = vadd.f32 %v1830, %v1918
        %1920 = vmatmul.bf16.gmra.mxu0 %v577
        %v1921 = vpop.f32.mrf.mxu0
        %v1922 = vadd.f32 %v1833, %v1921
        %v1923 = vpop.f32.mrf.mxu0
        %v1924 = vadd.f32 %v1835, %v1923
        %1925 = vmatmul.bf16.gmra.mxu0 %v579
        %v1926 = vpop.f32.mrf.mxu0
        %v1927 = vadd.f32 %v1838, %v1926
        %v1928 = vpop.f32.mrf.mxu0
        %v1929 = vadd.f32 %v1840, %v1928
        %1930 = vmatmul.bf16.gmra.mxu0 %v581
        %v1931 = vpop.f32.mrf.mxu0
        %v1932 = vadd.f32 %v1843, %v1931
        %v1933 = vpop.f32.mrf.mxu0
        %v1934 = vadd.f32 %v1845, %v1933
        %1935 = vmatmul.bf16.gmra.mxu0 %v583
        %v1936 = vpop.f32.mrf.mxu0
        %v1937 = vadd.f32 %v1848, %v1936
        %v1938 = vpop.f32.mrf.mxu0
        %v1939 = vadd.f32 %v1850, %v1938
        %1940 = vmatmul.bf16.gmra.mxu0 %v585
        %v1941 = vpop.f32.mrf.mxu0
        %v1942 = vadd.f32 %v1853, %v1941
        %v1943 = vpop.f32.mrf.mxu0
        %v1944 = vadd.f32 %v1855, %v1943
        %1945 = vmatmul.bf16.gmra.mxu0 %v587
        %v1946 = vpop.f32.mrf.mxu0
        %v1947 = vadd.f32 %v1858, %v1946
        %v1948 = vpop.f32.mrf.mxu0
        %v1949 = vadd.f32 %v1860, %v1948
        %1950 = vmatmul.bf16.gmra.mxu0 %v589
        %v1951 = vpop.f32.mrf.mxu0
        %v1952 = vadd.f32 %v1863, %v1951
        %v1953 = vpop.f32.mrf.mxu0
        %v1954 = vadd.f32 %v1865, %v1953
        %1955 = vmatmul.bf16.gmra.mxu0 %v591
        %v1956 = vpop.f32.mrf.mxu0
        %v1957 = vadd.f32 %v1868, %v1956
        %v1958 = vpop.f32.mrf.mxu0
        %v1959 = vadd.f32 %v1870, %v1958
        %1960 = vmatmul.bf16.gmra.mxu0 %v593
        %v1961 = vpop.f32.mrf.mxu0
        %v1962 = vadd.f32 %v1873, %v1961
        %v1963 = vpop.f32.mrf.mxu0
        %v1964 = vadd.f32 %v1875, %v1963
        %1965 = vmatmul.bf16.gmra.mxu0 %v595
        %v1966 = vpop.f32.mrf.mxu0
        %v1967 = vadd.f32 %v1878, %v1966
        %v1968 = vpop.f32.mrf.mxu0
        %v1969 = vadd.f32 %v1880, %v1968
        %1970 = vmatmul.bf16.gmra.mxu0 %v597
        %v1971 = vpop.f32.mrf.mxu0
        %v1972 = vadd.f32 %v1883, %v1971
        %v1973 = vpop.f32.mrf.mxu0
        %v1974 = vadd.f32 %v1885, %v1973
        %1975 = vmatmul.bf16.gmra.mxu0 %v599
        %v1976 = vpop.f32.mrf.mxu0
        %v1977 = vadd.f32 %v1888, %v1976
        %v1978 = vpop.f32.mrf.mxu0
        %v1979 = vadd.f32 %v1890, %v1978
        %1980 = vmatmul.bf16.gmra.mxu0 %v601
        %v1981 = vpop.f32.mrf.mxu0
        %v1982 = vadd.f32 %v1893, %v1981
        %v1983 = vpop.f32.mrf.mxu0
        %v1984 = vadd.f32 %v1895, %v1983
        %1985 = vdwg.mxu0
        %1986 = vmatpush.bf16.msra.mxu0 %v1078
        %1987 = vmatpush.bf16.msra.mxu0 %v1070
        %1988 = vmatpush.bf16.msra.mxu0 %v1062
        %1989 = vmatpush.bf16.msra.mxu0 %v1054
        %1990 = vmatpush.bf16.msra.mxu0 %v1046
        %1991 = vmatpush.bf16.msra.mxu0 %v1038
        %1992 = vmatpush.bf16.msra.mxu0 %v1030
        %1993 = vmatpush.bf16.msra.mxu0 %v1022
        %1994 = vmatmul.bf16.gmra.mxu0 %v570
        %v1995 = vpop.f32.mrf.mxu0
        %v1996 = vadd.f32 %v462, %v1995
        %v1997 = vpop.f32.mrf.mxu0
        %v1998 = vadd.f32 %v462, %v1997
        %1999 = vmatmul.bf16.gmra.mxu0 %v572
        %v2000 = vpop.f32.mrf.mxu0
        %v2001 = vadd.f32 %v462, %v2000
        %v2002 = vpop.f32.mrf.mxu0
        %v2003 = vadd.f32 %v462, %v2002
        %2004 = vmatmul.bf16.gmra.mxu0 %v574
        %v2005 = vpop.f32.mrf.mxu0
        %v2006 = vadd.f32 %v462, %v2005
        %v2007 = vpop.f32.mrf.mxu0
        %v2008 = vadd.f32 %v462, %v2007
        %2009 = vmatmul.bf16.gmra.mxu0 %v576
        %v2010 = vpop.f32.mrf.mxu0
        %v2011 = vadd.f32 %v462, %v2010
        %v2012 = vpop.f32.mrf.mxu0
        %v2013 = vadd.f32 %v462, %v2012
        %2014 = vmatmul.bf16.gmra.mxu0 %v578
        %v2015 = vpop.f32.mrf.mxu0
        %v2016 = vadd.f32 %v462, %v2015
        %v2017 = vpop.f32.mrf.mxu0
        %v2018 = vadd.f32 %v462, %v2017
        %2019 = vmatmul.bf16.gmra.mxu0 %v580
        %v2020 = vpop.f32.mrf.mxu0
        %v2021 = vadd.f32 %v462, %v2020
        %v2022 = vpop.f32.mrf.mxu0
        %v2023 = vadd.f32 %v462, %v2022
        %2024 = vmatmul.bf16.gmra.mxu0 %v582
        %v2025 = vpop.f32.mrf.mxu0
        %v2026 = vadd.f32 %v462, %v2025
        %v2027 = vpop.f32.mrf.mxu0
        %v2028 = vadd.f32 %v462, %v2027
        %2029 = vmatmul.bf16.gmra.mxu0 %v584
        %v2030 = vpop.f32.mrf.mxu0
        %v2031 = vadd.f32 %v462, %v2030
        %v2032 = vpop.f32.mrf.mxu0
        %v2033 = vadd.f32 %v462, %v2032
        %2034 = vmatmul.bf16.gmra.mxu0 %v586
        %v2035 = vpop.f32.mrf.mxu0
        %v2036 = vadd.f32 %v462, %v2035
        %v2037 = vpop.f32.mrf.mxu0
        %v2038 = vadd.f32 %v462, %v2037
        %2039 = vmatmul.bf16.gmra.mxu0 %v588
        %v2040 = vpop.f32.mrf.mxu0
        %v2041 = vadd.f32 %v462, %v2040
        %v2042 = vpop.f32.mrf.mxu0
        %v2043 = vadd.f32 %v462, %v2042
        %2044 = vmatmul.bf16.gmra.mxu0 %v590
        %v2045 = vpop.f32.mrf.mxu0
        %v2046 = vadd.f32 %v462, %v2045
        %v2047 = vpop.f32.mrf.mxu0
        %v2048 = vadd.f32 %v462, %v2047
        %2049 = vmatmul.bf16.gmra.mxu0 %v592
        %v2050 = vpop.f32.mrf.mxu0
        %v2051 = vadd.f32 %v462, %v2050
        %v2052 = vpop.f32.mrf.mxu0
        %v2053 = vadd.f32 %v462, %v2052
        %2054 = vmatmul.bf16.gmra.mxu0 %v594
        %v2055 = vpop.f32.mrf.mxu0
        %v2056 = vadd.f32 %v462, %v2055
        %v2057 = vpop.f32.mrf.mxu0
        %v2058 = vadd.f32 %v462, %v2057
        %2059 = vmatmul.bf16.gmra.mxu0 %v596
        %v2060 = vpop.f32.mrf.mxu0
        %v2061 = vadd.f32 %v462, %v2060
        %v2062 = vpop.f32.mrf.mxu0
        %v2063 = vadd.f32 %v462, %v2062
        %2064 = vmatmul.bf16.gmra.mxu0 %v598
        %v2065 = vpop.f32.mrf.mxu0
        %v2066 = vadd.f32 %v462, %v2065
        %v2067 = vpop.f32.mrf.mxu0
        %v2068 = vadd.f32 %v462, %v2067
        %2069 = vmatmul.bf16.gmra.mxu0 %v600
        %v2070 = vpop.f32.mrf.mxu0
        %v2071 = vadd.f32 %v462, %v2070
        %v2072 = vpop.f32.mrf.mxu0
        %v2073 = vadd.f32 %v462, %v2072
        %2074 = vdwg.mxu0
        %2075 = vmatpush.bf16.msra.mxu0 %v1142
        %2076 = vmatpush.bf16.msra.mxu0 %v1134
        %2077 = vmatpush.bf16.msra.mxu0 %v1126
        %2078 = vmatpush.bf16.msra.mxu0 %v1118
        %2079 = vmatpush.bf16.msra.mxu0 %v1110
        %2080 = vmatpush.bf16.msra.mxu0 %v1102
        %2081 = vmatpush.bf16.msra.mxu0 %v1094
        %2082 = vmatpush.bf16.msra.mxu0 %v1086
        %2083 = vmatmul.bf16.gmra.mxu0 %v571
        %v2084 = vpop.f32.mrf.mxu0
        %v2085 = vadd.f32 %v1996, %v2084
        %v2086 = vpop.f32.mrf.mxu0
        %v2087 = vadd.f32 %v1998, %v2086
        %2088 = vmatmul.bf16.gmra.mxu0 %v573
        %v2089 = vpop.f32.mrf.mxu0
        %v2090 = vadd.f32 %v2001, %v2089
        %v2091 = vpop.f32.mrf.mxu0
        %v2092 = vadd.f32 %v2003, %v2091
        %2093 = vmatmul.bf16.gmra.mxu0 %v575
        %v2094 = vpop.f32.mrf.mxu0
        %v2095 = vadd.f32 %v2006, %v2094
        %v2096 = vpop.f32.mrf.mxu0
        %v2097 = vadd.f32 %v2008, %v2096
        %2098 = vmatmul.bf16.gmra.mxu0 %v577
        %v2099 = vpop.f32.mrf.mxu0
        %v2100 = vadd.f32 %v2011, %v2099
        %v2101 = vpop.f32.mrf.mxu0
        %v2102 = vadd.f32 %v2013, %v2101
        %2103 = vmatmul.bf16.gmra.mxu0 %v579
        %v2104 = vpop.f32.mrf.mxu0
        %v2105 = vadd.f32 %v2016, %v2104
        %v2106 = vpop.f32.mrf.mxu0
        %v2107 = vadd.f32 %v2018, %v2106
        %2108 = vmatmul.bf16.gmra.mxu0 %v581
        %v2109 = vpop.f32.mrf.mxu0
        %v2110 = vadd.f32 %v2021, %v2109
        %v2111 = vpop.f32.mrf.mxu0
        %v2112 = vadd.f32 %v2023, %v2111
        %2113 = vmatmul.bf16.gmra.mxu0 %v583
        %v2114 = vpop.f32.mrf.mxu0
        %v2115 = vadd.f32 %v2026, %v2114
        %v2116 = vpop.f32.mrf.mxu0
        %v2117 = vadd.f32 %v2028, %v2116
        %2118 = vmatmul.bf16.gmra.mxu0 %v585
        %v2119 = vpop.f32.mrf.mxu0
        %v2120 = vadd.f32 %v2031, %v2119
        %v2121 = vpop.f32.mrf.mxu0
        %v2122 = vadd.f32 %v2033, %v2121
        %2123 = vmatmul.bf16.gmra.mxu0 %v587
        %v2124 = vpop.f32.mrf.mxu0
        %v2125 = vadd.f32 %v2036, %v2124
        %v2126 = vpop.f32.mrf.mxu0
        %v2127 = vadd.f32 %v2038, %v2126
        %2128 = vmatmul.bf16.gmra.mxu0 %v589
        %v2129 = vpop.f32.mrf.mxu0
        %v2130 = vadd.f32 %v2041, %v2129
        %v2131 = vpop.f32.mrf.mxu0
        %v2132 = vadd.f32 %v2043, %v2131
        %2133 = vmatmul.bf16.gmra.mxu0 %v591
        %v2134 = vpop.f32.mrf.mxu0
        %v2135 = vadd.f32 %v2046, %v2134
        %v2136 = vpop.f32.mrf.mxu0
        %v2137 = vadd.f32 %v2048, %v2136
        %2138 = vmatmul.bf16.gmra.mxu0 %v593
        %v2139 = vpop.f32.mrf.mxu0
        %v2140 = vadd.f32 %v2051, %v2139
        %v2141 = vpop.f32.mrf.mxu0
        %v2142 = vadd.f32 %v2053, %v2141
        %2143 = vmatmul.bf16.gmra.mxu0 %v595
        %v2144 = vpop.f32.mrf.mxu0
        %v2145 = vadd.f32 %v2056, %v2144
        %v2146 = vpop.f32.mrf.mxu0
        %v2147 = vadd.f32 %v2058, %v2146
        %2148 = vmatmul.bf16.gmra.mxu0 %v597
        %v2149 = vpop.f32.mrf.mxu0
        %v2150 = vadd.f32 %v2061, %v2149
        %v2151 = vpop.f32.mrf.mxu0
        %v2152 = vadd.f32 %v2063, %v2151
        %2153 = vmatmul.bf16.gmra.mxu0 %v599
        %v2154 = vpop.f32.mrf.mxu0
        %v2155 = vadd.f32 %v2066, %v2154
        %v2156 = vpop.f32.mrf.mxu0
        %v2157 = vadd.f32 %v2068, %v2156
        %2158 = vmatmul.bf16.gmra.mxu0 %v601
        %v2159 = vpop.f32.mrf.mxu0
        %v2160 = vadd.f32 %v2071, %v2159
        %v2161 = vpop.f32.mrf.mxu0
        %v2162 = vadd.f32 %v2073, %v2161
        %2163 = vdwg.mxu0
        %2164 = vmatpush.bf16.msra.mxu0 %v1079
        %2165 = vmatpush.bf16.msra.mxu0 %v1071
        %2166 = vmatpush.bf16.msra.mxu0 %v1063
        %2167 = vmatpush.bf16.msra.mxu0 %v1055
        %2168 = vmatpush.bf16.msra.mxu0 %v1047
        %2169 = vmatpush.bf16.msra.mxu0 %v1039
        %2170 = vmatpush.bf16.msra.mxu0 %v1031
        %2171 = vmatpush.bf16.msra.mxu0 %v1023
        %2172 = vmatmul.bf16.gmra.mxu0 %v570
        %v2173 = vpop.f32.mrf.mxu0
        %v2174 = vadd.f32 %v463, %v2173
        %v2175 = vpop.f32.mrf.mxu0
        %v2176 = vadd.f32 %v463, %v2175
        %2177 = vmatmul.bf16.gmra.mxu0 %v572
        %v2178 = vpop.f32.mrf.mxu0
        %v2179 = vadd.f32 %v463, %v2178
        %v2180 = vpop.f32.mrf.mxu0
        %v2181 = vadd.f32 %v463, %v2180
        %2182 = vmatmul.bf16.gmra.mxu0 %v574
        %v2183 = vpop.f32.mrf.mxu0
        %v2184 = vadd.f32 %v463, %v2183
        %v2185 = vpop.f32.mrf.mxu0
        %v2186 = vadd.f32 %v463, %v2185
        %2187 = vmatmul.bf16.gmra.mxu0 %v576
        %v2188 = vpop.f32.mrf.mxu0
        %v2189 = vadd.f32 %v463, %v2188
        %v2190 = vpop.f32.mrf.mxu0
        %v2191 = vadd.f32 %v463, %v2190
        %2192 = vmatmul.bf16.gmra.mxu0 %v578
        %v2193 = vpop.f32.mrf.mxu0
        %v2194 = vadd.f32 %v463, %v2193
        %v2195 = vpop.f32.mrf.mxu0
        %v2196 = vadd.f32 %v463, %v2195
        %2197 = vmatmul.bf16.gmra.mxu0 %v580
        %v2198 = vpop.f32.mrf.mxu0
        %v2199 = vadd.f32 %v463, %v2198
        %v2200 = vpop.f32.mrf.mxu0
        %v2201 = vadd.f32 %v463, %v2200
        %2202 = vmatmul.bf16.gmra.mxu0 %v582
        %v2203 = vpop.f32.mrf.mxu0
        %v2204 = vadd.f32 %v463, %v2203
        %v2205 = vpop.f32.mrf.mxu0
        %v2206 = vadd.f32 %v463, %v2205
        %2207 = vmatmul.bf16.gmra.mxu0 %v584
        %v2208 = vpop.f32.mrf.mxu0
        %v2209 = vadd.f32 %v463, %v2208
        %v2210 = vpop.f32.mrf.mxu0
        %v2211 = vadd.f32 %v463, %v2210
        %2212 = vmatmul.bf16.gmra.mxu0 %v586
        %v2213 = vpop.f32.mrf.mxu0
        %v2214 = vadd.f32 %v463, %v2213
        %v2215 = vpop.f32.mrf.mxu0
        %v2216 = vadd.f32 %v463, %v2215
        %2217 = vmatmul.bf16.gmra.mxu0 %v588
        %v2218 = vpop.f32.mrf.mxu0
        %v2219 = vadd.f32 %v463, %v2218
        %v2220 = vpop.f32.mrf.mxu0
        %v2221 = vadd.f32 %v463, %v2220
        %2222 = vmatmul.bf16.gmra.mxu0 %v590
        %v2223 = vpop.f32.mrf.mxu0
        %v2224 = vadd.f32 %v463, %v2223
        %v2225 = vpop.f32.mrf.mxu0
        %v2226 = vadd.f32 %v463, %v2225
        %2227 = vmatmul.bf16.gmra.mxu0 %v592
        %v2228 = vpop.f32.mrf.mxu0
        %v2229 = vadd.f32 %v463, %v2228
        %v2230 = vpop.f32.mrf.mxu0
        %v2231 = vadd.f32 %v463, %v2230
        %2232 = vmatmul.bf16.gmra.mxu0 %v594
        %v2233 = vpop.f32.mrf.mxu0
        %v2234 = vadd.f32 %v463, %v2233
        %v2235 = vpop.f32.mrf.mxu0
        %v2236 = vadd.f32 %v463, %v2235
        %2237 = vmatmul.bf16.gmra.mxu0 %v596
        %v2238 = vpop.f32.mrf.mxu0
        %v2239 = vadd.f32 %v463, %v2238
        %v2240 = vpop.f32.mrf.mxu0
        %v2241 = vadd.f32 %v463, %v2240
        %2242 = vmatmul.bf16.gmra.mxu0 %v598
        %v2243 = vpop.f32.mrf.mxu0
        %v2244 = vadd.f32 %v463, %v2243
        %v2245 = vpop.f32.mrf.mxu0
        %v2246 = vadd.f32 %v463, %v2245
        %2247 = vmatmul.bf16.gmra.mxu0 %v600
        %v2248 = vpop.f32.mrf.mxu0
        %v2249 = vadd.f32 %v463, %v2248
        %v2250 = vpop.f32.mrf.mxu0
        %v2251 = vadd.f32 %v463, %v2250
        %2252 = vdwg.mxu0
        %2253 = vmatpush.bf16.msra.mxu0 %v1143
        %2254 = vmatpush.bf16.msra.mxu0 %v1135
        %2255 = vmatpush.bf16.msra.mxu0 %v1127
        %2256 = vmatpush.bf16.msra.mxu0 %v1119
        %2257 = vmatpush.bf16.msra.mxu0 %v1111
        %2258 = vmatpush.bf16.msra.mxu0 %v1103
        %2259 = vmatpush.bf16.msra.mxu0 %v1095
        %2260 = vmatpush.bf16.msra.mxu0 %v1087
        %2261 = vmatmul.bf16.gmra.mxu0 %v571
        %v2262 = vpop.f32.mrf.mxu0
        %v2263 = vadd.f32 %v2174, %v2262
        %v2264 = vpop.f32.mrf.mxu0
        %v2265 = vadd.f32 %v2176, %v2264
        %2266 = vmatmul.bf16.gmra.mxu0 %v573
        %v2267 = vpop.f32.mrf.mxu0
        %v2268 = vadd.f32 %v2179, %v2267
        %v2269 = vpop.f32.mrf.mxu0
        %v2270 = vadd.f32 %v2181, %v2269
        %2271 = vmatmul.bf16.gmra.mxu0 %v575
        %v2272 = vpop.f32.mrf.mxu0
        %v2273 = vadd.f32 %v2184, %v2272
        %v2274 = vpop.f32.mrf.mxu0
        %v2275 = vadd.f32 %v2186, %v2274
        %2276 = vmatmul.bf16.gmra.mxu0 %v577
        %v2277 = vpop.f32.mrf.mxu0
        %v2278 = vadd.f32 %v2189, %v2277
        %v2279 = vpop.f32.mrf.mxu0
        %v2280 = vadd.f32 %v2191, %v2279
        %2281 = vmatmul.bf16.gmra.mxu0 %v579
        %v2282 = vpop.f32.mrf.mxu0
        %v2283 = vadd.f32 %v2194, %v2282
        %v2284 = vpop.f32.mrf.mxu0
        %v2285 = vadd.f32 %v2196, %v2284
        %2286 = vmatmul.bf16.gmra.mxu0 %v581
        %v2287 = vpop.f32.mrf.mxu0
        %v2288 = vadd.f32 %v2199, %v2287
        %v2289 = vpop.f32.mrf.mxu0
        %v2290 = vadd.f32 %v2201, %v2289
        %2291 = vmatmul.bf16.gmra.mxu0 %v583
        %v2292 = vpop.f32.mrf.mxu0
        %v2293 = vadd.f32 %v2204, %v2292
        %v2294 = vpop.f32.mrf.mxu0
        %v2295 = vadd.f32 %v2206, %v2294
        %2296 = vmatmul.bf16.gmra.mxu0 %v585
        %v2297 = vpop.f32.mrf.mxu0
        %v2298 = vadd.f32 %v2209, %v2297
        %v2299 = vpop.f32.mrf.mxu0
        %v2300 = vadd.f32 %v2211, %v2299
        %2301 = vmatmul.bf16.gmra.mxu0 %v587
        %v2302 = vpop.f32.mrf.mxu0
        %v2303 = vadd.f32 %v2214, %v2302
        %v2304 = vpop.f32.mrf.mxu0
        %v2305 = vadd.f32 %v2216, %v2304
        %2306 = vmatmul.bf16.gmra.mxu0 %v589
        %v2307 = vpop.f32.mrf.mxu0
        %v2308 = vadd.f32 %v2219, %v2307
        %v2309 = vpop.f32.mrf.mxu0
        %v2310 = vadd.f32 %v2221, %v2309
        %2311 = vmatmul.bf16.gmra.mxu0 %v591
        %v2312 = vpop.f32.mrf.mxu0
        %v2313 = vadd.f32 %v2224, %v2312
        %v2314 = vpop.f32.mrf.mxu0
        %v2315 = vadd.f32 %v2226, %v2314
        %2316 = vmatmul.bf16.gmra.mxu0 %v593
        %v2317 = vpop.f32.mrf.mxu0
        %v2318 = vadd.f32 %v2229, %v2317
        %v2319 = vpop.f32.mrf.mxu0
        %v2320 = vadd.f32 %v2231, %v2319
        %2321 = vmatmul.bf16.gmra.mxu0 %v595
        %v2322 = vpop.f32.mrf.mxu0
        %v2323 = vadd.f32 %v2234, %v2322
        %v2324 = vpop.f32.mrf.mxu0
        %v2325 = vadd.f32 %v2236, %v2324
        %2326 = vmatmul.bf16.gmra.mxu0 %v597
        %v2327 = vpop.f32.mrf.mxu0
        %v2328 = vadd.f32 %v2239, %v2327
        %v2329 = vpop.f32.mrf.mxu0
        %v2330 = vadd.f32 %v2241, %v2329
        %2331 = vmatmul.bf16.gmra.mxu0 %v599
        %v2332 = vpop.f32.mrf.mxu0
        %v2333 = vadd.f32 %v2244, %v2332
        %v2334 = vpop.f32.mrf.mxu0
        %v2335 = vadd.f32 %v2246, %v2334
        %2336 = vmatmul.bf16.gmra.mxu0 %v601
        %v2337 = vpop.f32.mrf.mxu0
        %v2338 = vadd.f32 %v2249, %v2337
        %v2339 = vpop.f32.mrf.mxu0
        %v2340 = vadd.f32 %v2251, %v2339
        %2341 = vdwg.mxu0
        %2342 = vmatpush.bf16.msra.mxu0 %v1080
        %2343 = vmatpush.bf16.msra.mxu0 %v1072
        %2344 = vmatpush.bf16.msra.mxu0 %v1064
        %2345 = vmatpush.bf16.msra.mxu0 %v1056
        %2346 = vmatpush.bf16.msra.mxu0 %v1048
        %2347 = vmatpush.bf16.msra.mxu0 %v1040
        %2348 = vmatpush.bf16.msra.mxu0 %v1032
        %2349 = vmatpush.bf16.msra.mxu0 %v1024
        %2350 = vmatmul.bf16.gmra.mxu0 %v570
        %v2351 = vpop.f32.mrf.mxu0
        %v2352 = vadd.f32 %v464, %v2351
        %v2353 = vpop.f32.mrf.mxu0
        %v2354 = vadd.f32 %v464, %v2353
        %2355 = vmatmul.bf16.gmra.mxu0 %v572
        %v2356 = vpop.f32.mrf.mxu0
        %v2357 = vadd.f32 %v464, %v2356
        %v2358 = vpop.f32.mrf.mxu0
        %v2359 = vadd.f32 %v464, %v2358
        %2360 = vmatmul.bf16.gmra.mxu0 %v574
        %v2361 = vpop.f32.mrf.mxu0
        %v2362 = vadd.f32 %v464, %v2361
        %v2363 = vpop.f32.mrf.mxu0
        %v2364 = vadd.f32 %v464, %v2363
        %2365 = vmatmul.bf16.gmra.mxu0 %v576
        %v2366 = vpop.f32.mrf.mxu0
        %v2367 = vadd.f32 %v464, %v2366
        %v2368 = vpop.f32.mrf.mxu0
        %v2369 = vadd.f32 %v464, %v2368
        %2370 = vmatmul.bf16.gmra.mxu0 %v578
        %v2371 = vpop.f32.mrf.mxu0
        %v2372 = vadd.f32 %v464, %v2371
        %v2373 = vpop.f32.mrf.mxu0
        %v2374 = vadd.f32 %v464, %v2373
        %2375 = vmatmul.bf16.gmra.mxu0 %v580
        %v2376 = vpop.f32.mrf.mxu0
        %v2377 = vadd.f32 %v464, %v2376
        %v2378 = vpop.f32.mrf.mxu0
        %v2379 = vadd.f32 %v464, %v2378
        %2380 = vmatmul.bf16.gmra.mxu0 %v582
        %v2381 = vpop.f32.mrf.mxu0
        %v2382 = vadd.f32 %v464, %v2381
        %v2383 = vpop.f32.mrf.mxu0
        %v2384 = vadd.f32 %v464, %v2383
        %2385 = vmatmul.bf16.gmra.mxu0 %v584
        %v2386 = vpop.f32.mrf.mxu0
        %v2387 = vadd.f32 %v464, %v2386
        %v2388 = vpop.f32.mrf.mxu0
        %v2389 = vadd.f32 %v464, %v2388
        %2390 = vmatmul.bf16.gmra.mxu0 %v586
        %v2391 = vpop.f32.mrf.mxu0
        %v2392 = vadd.f32 %v464, %v2391
        %v2393 = vpop.f32.mrf.mxu0
        %v2394 = vadd.f32 %v464, %v2393
        %2395 = vmatmul.bf16.gmra.mxu0 %v588
        %v2396 = vpop.f32.mrf.mxu0
        %v2397 = vadd.f32 %v464, %v2396
        %v2398 = vpop.f32.mrf.mxu0
        %v2399 = vadd.f32 %v464, %v2398
        %2400 = vmatmul.bf16.gmra.mxu0 %v590
        %v2401 = vpop.f32.mrf.mxu0
        %v2402 = vadd.f32 %v464, %v2401
        %v2403 = vpop.f32.mrf.mxu0
        %v2404 = vadd.f32 %v464, %v2403
        %2405 = vmatmul.bf16.gmra.mxu0 %v592
        %v2406 = vpop.f32.mrf.mxu0
        %v2407 = vadd.f32 %v464, %v2406
        %v2408 = vpop.f32.mrf.mxu0
        %v2409 = vadd.f32 %v464, %v2408
        %2410 = vmatmul.bf16.gmra.mxu0 %v594
        %v2411 = vpop.f32.mrf.mxu0
        %v2412 = vadd.f32 %v464, %v2411
        %v2413 = vpop.f32.mrf.mxu0
        %v2414 = vadd.f32 %v464, %v2413
        %2415 = vmatmul.bf16.gmra.mxu0 %v596
        %v2416 = vpop.f32.mrf.mxu0
        %v2417 = vadd.f32 %v464, %v2416
        %v2418 = vpop.f32.mrf.mxu0
        %v2419 = vadd.f32 %v464, %v2418
        %2420 = vmatmul.bf16.gmra.mxu0 %v598
        %v2421 = vpop.f32.mrf.mxu0
        %v2422 = vadd.f32 %v464, %v2421
        %v2423 = vpop.f32.mrf.mxu0
        %v2424 = vadd.f32 %v464, %v2423
        %2425 = vmatmul.bf16.gmra.mxu0 %v600
        %v2426 = vpop.f32.mrf.mxu0
        %v2427 = vadd.f32 %v464, %v2426
        %v2428 = vpop.f32.mrf.mxu0
        %v2429 = vadd.f32 %v464, %v2428
        %2430 = vdwg.mxu0
        %2431 = vmatpush.bf16.msra.mxu0 %v1144
        %2432 = vmatpush.bf16.msra.mxu0 %v1136
        %2433 = vmatpush.bf16.msra.mxu0 %v1128
        %2434 = vmatpush.bf16.msra.mxu0 %v1120
        %2435 = vmatpush.bf16.msra.mxu0 %v1112
        %2436 = vmatpush.bf16.msra.mxu0 %v1104
        %2437 = vmatpush.bf16.msra.mxu0 %v1096
        %2438 = vmatpush.bf16.msra.mxu0 %v1088
        %2439 = vmatmul.bf16.gmra.mxu0 %v571
        %v2440 = vpop.f32.mrf.mxu0
        %v2441 = vadd.f32 %v2352, %v2440
        %v2442 = vpop.f32.mrf.mxu0
        %v2443 = vadd.f32 %v2354, %v2442
        %2444 = vmatmul.bf16.gmra.mxu0 %v573
        %v2445 = vpop.f32.mrf.mxu0
        %v2446 = vadd.f32 %v2357, %v2445
        %v2447 = vpop.f32.mrf.mxu0
        %v2448 = vadd.f32 %v2359, %v2447
        %2449 = vmatmul.bf16.gmra.mxu0 %v575
        %v2450 = vpop.f32.mrf.mxu0
        %v2451 = vadd.f32 %v2362, %v2450
        %v2452 = vpop.f32.mrf.mxu0
        %v2453 = vadd.f32 %v2364, %v2452
        %2454 = vmatmul.bf16.gmra.mxu0 %v577
        %v2455 = vpop.f32.mrf.mxu0
        %v2456 = vadd.f32 %v2367, %v2455
        %v2457 = vpop.f32.mrf.mxu0
        %v2458 = vadd.f32 %v2369, %v2457
        %2459 = vmatmul.bf16.gmra.mxu0 %v579
        %v2460 = vpop.f32.mrf.mxu0
        %v2461 = vadd.f32 %v2372, %v2460
        %v2462 = vpop.f32.mrf.mxu0
        %v2463 = vadd.f32 %v2374, %v2462
        %2464 = vmatmul.bf16.gmra.mxu0 %v581
        %v2465 = vpop.f32.mrf.mxu0
        %v2466 = vadd.f32 %v2377, %v2465
        %v2467 = vpop.f32.mrf.mxu0
        %v2468 = vadd.f32 %v2379, %v2467
        %2469 = vmatmul.bf16.gmra.mxu0 %v583
        %v2470 = vpop.f32.mrf.mxu0
        %v2471 = vadd.f32 %v2382, %v2470
        %v2472 = vpop.f32.mrf.mxu0
        %v2473 = vadd.f32 %v2384, %v2472
        %2474 = vmatmul.bf16.gmra.mxu0 %v585
        %v2475 = vpop.f32.mrf.mxu0
        %v2476 = vadd.f32 %v2387, %v2475
        %v2477 = vpop.f32.mrf.mxu0
        %v2478 = vadd.f32 %v2389, %v2477
        %2479 = vmatmul.bf16.gmra.mxu0 %v587
        %v2480 = vpop.f32.mrf.mxu0
        %v2481 = vadd.f32 %v2392, %v2480
        %v2482 = vpop.f32.mrf.mxu0
        %v2483 = vadd.f32 %v2394, %v2482
        %2484 = vmatmul.bf16.gmra.mxu0 %v589
        %v2485 = vpop.f32.mrf.mxu0
        %v2486 = vadd.f32 %v2397, %v2485
        %v2487 = vpop.f32.mrf.mxu0
        %v2488 = vadd.f32 %v2399, %v2487
        %2489 = vmatmul.bf16.gmra.mxu0 %v591
        %v2490 = vpop.f32.mrf.mxu0
        %v2491 = vadd.f32 %v2402, %v2490
        %v2492 = vpop.f32.mrf.mxu0
        %v2493 = vadd.f32 %v2404, %v2492
        %2494 = vmatmul.bf16.gmra.mxu0 %v593
        %v2495 = vpop.f32.mrf.mxu0
        %v2496 = vadd.f32 %v2407, %v2495
        %v2497 = vpop.f32.mrf.mxu0
        %v2498 = vadd.f32 %v2409, %v2497
        %2499 = vmatmul.bf16.gmra.mxu0 %v595
        %v2500 = vpop.f32.mrf.mxu0
        %v2501 = vadd.f32 %v2412, %v2500
        %v2502 = vpop.f32.mrf.mxu0
        %v2503 = vadd.f32 %v2414, %v2502
        %2504 = vmatmul.bf16.gmra.mxu0 %v597
        %v2505 = vpop.f32.mrf.mxu0
        %v2506 = vadd.f32 %v2417, %v2505
        %v2507 = vpop.f32.mrf.mxu0
        %v2508 = vadd.f32 %v2419, %v2507
        %2509 = vmatmul.bf16.gmra.mxu0 %v599
        %v2510 = vpop.f32.mrf.mxu0
        %v2511 = vadd.f32 %v2422, %v2510
        %v2512 = vpop.f32.mrf.mxu0
        %v2513 = vadd.f32 %v2424, %v2512
        %2514 = vmatmul.bf16.gmra.mxu0 %v601
        %v2515 = vpop.f32.mrf.mxu0
        %v2516 = vadd.f32 %v2427, %v2515
        %v2517 = vpop.f32.mrf.mxu0
        %v2518 = vadd.f32 %v2429, %v2517
        %2519 = vdwg.mxu0
        %2520 = vmatpush.bf16.msra.mxu0 %v1081
        %2521 = vmatpush.bf16.msra.mxu0 %v1073
        %2522 = vmatpush.bf16.msra.mxu0 %v1065
        %2523 = vmatpush.bf16.msra.mxu0 %v1057
        %2524 = vmatpush.bf16.msra.mxu0 %v1049
        %2525 = vmatpush.bf16.msra.mxu0 %v1041
        %2526 = vmatpush.bf16.msra.mxu0 %v1033
        %2527 = vmatpush.bf16.msra.mxu0 %v1025
        %2528 = vmatmul.bf16.gmra.mxu0 %v570
        %v2529 = vpop.f32.mrf.mxu0
        %v2530 = vadd.f32 %v465, %v2529
        %v2531 = vpop.f32.mrf.mxu0
        %v2532 = vadd.f32 %v465, %v2531
        %2533 = vmatmul.bf16.gmra.mxu0 %v572
        %v2534 = vpop.f32.mrf.mxu0
        %v2535 = vadd.f32 %v465, %v2534
        %v2536 = vpop.f32.mrf.mxu0
        %v2537 = vadd.f32 %v465, %v2536
        %2538 = vmatmul.bf16.gmra.mxu0 %v574
        %v2539 = vpop.f32.mrf.mxu0
        %v2540 = vadd.f32 %v465, %v2539
        %v2541 = vpop.f32.mrf.mxu0
        %v2542 = vadd.f32 %v465, %v2541
        %2543 = vmatmul.bf16.gmra.mxu0 %v576
        %v2544 = vpop.f32.mrf.mxu0
        %v2545 = vadd.f32 %v465, %v2544
        %v2546 = vpop.f32.mrf.mxu0
        %v2547 = vadd.f32 %v465, %v2546
        %2548 = vmatmul.bf16.gmra.mxu0 %v578
        %v2549 = vpop.f32.mrf.mxu0
        %v2550 = vadd.f32 %v465, %v2549
        %v2551 = vpop.f32.mrf.mxu0
        %v2552 = vadd.f32 %v465, %v2551
        %2553 = vmatmul.bf16.gmra.mxu0 %v580
        %v2554 = vpop.f32.mrf.mxu0
        %v2555 = vadd.f32 %v465, %v2554
        %v2556 = vpop.f32.mrf.mxu0
        %v2557 = vadd.f32 %v465, %v2556
        %2558 = vmatmul.bf16.gmra.mxu0 %v582
        %v2559 = vpop.f32.mrf.mxu0
        %v2560 = vadd.f32 %v465, %v2559
        %v2561 = vpop.f32.mrf.mxu0
        %v2562 = vadd.f32 %v465, %v2561
        %2563 = vmatmul.bf16.gmra.mxu0 %v584
        %v2564 = vpop.f32.mrf.mxu0
        %v2565 = vadd.f32 %v465, %v2564
        %v2566 = vpop.f32.mrf.mxu0
        %v2567 = vadd.f32 %v465, %v2566
        %2568 = vmatmul.bf16.gmra.mxu0 %v586
        %v2569 = vpop.f32.mrf.mxu0
        %v2570 = vadd.f32 %v465, %v2569
        %v2571 = vpop.f32.mrf.mxu0
        %v2572 = vadd.f32 %v465, %v2571
        %2573 = vmatmul.bf16.gmra.mxu0 %v588
        %v2574 = vpop.f32.mrf.mxu0
        %v2575 = vadd.f32 %v465, %v2574
        %v2576 = vpop.f32.mrf.mxu0
        %v2577 = vadd.f32 %v465, %v2576
        %2578 = vmatmul.bf16.gmra.mxu0 %v590
        %v2579 = vpop.f32.mrf.mxu0
        %v2580 = vadd.f32 %v465, %v2579
        %v2581 = vpop.f32.mrf.mxu0
        %v2582 = vadd.f32 %v465, %v2581
        %2583 = vmatmul.bf16.gmra.mxu0 %v592
        %v2584 = vpop.f32.mrf.mxu0
        %v2585 = vadd.f32 %v465, %v2584
        %v2586 = vpop.f32.mrf.mxu0
        %v2587 = vadd.f32 %v465, %v2586
        %2588 = vmatmul.bf16.gmra.mxu0 %v594
        %v2589 = vpop.f32.mrf.mxu0
        %v2590 = vadd.f32 %v465, %v2589
        %v2591 = vpop.f32.mrf.mxu0
        %v2592 = vadd.f32 %v465, %v2591
        %2593 = vmatmul.bf16.gmra.mxu0 %v596
        %v2594 = vpop.f32.mrf.mxu0
        %v2595 = vadd.f32 %v465, %v2594
        %v2596 = vpop.f32.mrf.mxu0
        %v2597 = vadd.f32 %v465, %v2596
        %2598 = vmatmul.bf16.gmra.mxu0 %v598
        %v2599 = vpop.f32.mrf.mxu0
        %v2600 = vadd.f32 %v465, %v2599
        %v2601 = vpop.f32.mrf.mxu0
        %v2602 = vadd.f32 %v465, %v2601
        %2603 = vmatmul.bf16.gmra.mxu0 %v600
        %v2604 = vpop.f32.mrf.mxu0
        %v2605 = vadd.f32 %v465, %v2604
        %v2606 = vpop.f32.mrf.mxu0
        %v2607 = vadd.f32 %v465, %v2606
        %2608 = vdwg.mxu0
        %2609 = vmatpush.bf16.msra.mxu0 %v1145
        %2610 = vmatpush.bf16.msra.mxu0 %v1137
        %2611 = vmatpush.bf16.msra.mxu0 %v1129
        %2612 = vmatpush.bf16.msra.mxu0 %v1121
        %2613 = vmatpush.bf16.msra.mxu0 %v1113
        %2614 = vmatpush.bf16.msra.mxu0 %v1105
        %2615 = vmatpush.bf16.msra.mxu0 %v1097
        %2616 = vmatpush.bf16.msra.mxu0 %v1089
        %2617 = vmatmul.bf16.gmra.mxu0 %v571
        %v2618 = vpop.f32.mrf.mxu0
        %v2619 = vadd.f32 %v2530, %v2618
        %v2620 = vpop.f32.mrf.mxu0
        %v2621 = vadd.f32 %v2532, %v2620
        %2622 = vmatmul.bf16.gmra.mxu0 %v573
        %v2623 = vpop.f32.mrf.mxu0
        %v2624 = vadd.f32 %v2535, %v2623
        %v2625 = vpop.f32.mrf.mxu0
        %v2626 = vadd.f32 %v2537, %v2625
        %2627 = vmatmul.bf16.gmra.mxu0 %v575
        %v2628 = vpop.f32.mrf.mxu0
        %v2629 = vadd.f32 %v2540, %v2628
        %v2630 = vpop.f32.mrf.mxu0
        %v2631 = vadd.f32 %v2542, %v2630
        %2632 = vmatmul.bf16.gmra.mxu0 %v577
        %v2633 = vpop.f32.mrf.mxu0
        %v2634 = vadd.f32 %v2545, %v2633
        %v2635 = vpop.f32.mrf.mxu0
        %v2636 = vadd.f32 %v2547, %v2635
        %2637 = vmatmul.bf16.gmra.mxu0 %v579
        %v2638 = vpop.f32.mrf.mxu0
        %v2639 = vadd.f32 %v2550, %v2638
        %v2640 = vpop.f32.mrf.mxu0
        %v2641 = vadd.f32 %v2552, %v2640
        %2642 = vmatmul.bf16.gmra.mxu0 %v581
        %v2643 = vpop.f32.mrf.mxu0
        %v2644 = vadd.f32 %v2555, %v2643
        %v2645 = vpop.f32.mrf.mxu0
        %v2646 = vadd.f32 %v2557, %v2645
        %2647 = vmatmul.bf16.gmra.mxu0 %v583
        %v2648 = vpop.f32.mrf.mxu0
        %v2649 = vadd.f32 %v2560, %v2648
        %v2650 = vpop.f32.mrf.mxu0
        %v2651 = vadd.f32 %v2562, %v2650
        %2652 = vmatmul.bf16.gmra.mxu0 %v585
        %v2653 = vpop.f32.mrf.mxu0
        %v2654 = vadd.f32 %v2565, %v2653
        %v2655 = vpop.f32.mrf.mxu0
        %v2656 = vadd.f32 %v2567, %v2655
        %2657 = vmatmul.bf16.gmra.mxu0 %v587
        %v2658 = vpop.f32.mrf.mxu0
        %v2659 = vadd.f32 %v2570, %v2658
        %v2660 = vpop.f32.mrf.mxu0
        %v2661 = vadd.f32 %v2572, %v2660
        %2662 = vmatmul.bf16.gmra.mxu0 %v589
        %v2663 = vpop.f32.mrf.mxu0
        %v2664 = vadd.f32 %v2575, %v2663
        %v2665 = vpop.f32.mrf.mxu0
        %v2666 = vadd.f32 %v2577, %v2665
        %2667 = vmatmul.bf16.gmra.mxu0 %v591
        %v2668 = vpop.f32.mrf.mxu0
        %v2669 = vadd.f32 %v2580, %v2668
        %v2670 = vpop.f32.mrf.mxu0
        %v2671 = vadd.f32 %v2582, %v2670
        %2672 = vmatmul.bf16.gmra.mxu0 %v593
        %v2673 = vpop.f32.mrf.mxu0
        %v2674 = vadd.f32 %v2585, %v2673
        %v2675 = vpop.f32.mrf.mxu0
        %v2676 = vadd.f32 %v2587, %v2675
        %2677 = vmatmul.bf16.gmra.mxu0 %v595
        %v2678 = vpop.f32.mrf.mxu0
        %v2679 = vadd.f32 %v2590, %v2678
        %v2680 = vpop.f32.mrf.mxu0
        %v2681 = vadd.f32 %v2592, %v2680
        %2682 = vmatmul.bf16.gmra.mxu0 %v597
        %v2683 = vpop.f32.mrf.mxu0
        %v2684 = vadd.f32 %v2595, %v2683
        %v2685 = vpop.f32.mrf.mxu0
        %v2686 = vadd.f32 %v2597, %v2685
        %2687 = vmatmul.bf16.gmra.mxu0 %v599
        %v2688 = vpop.f32.mrf.mxu0
        %v2689 = vadd.f32 %v2600, %v2688
        %v2690 = vpop.f32.mrf.mxu0
        %v2691 = vadd.f32 %v2602, %v2690
        %2692 = vmatmul.bf16.gmra.mxu0 %v601
        %v2693 = vpop.f32.mrf.mxu0
        %v2694 = vadd.f32 %v2605, %v2693
        %v2695 = vpop.f32.mrf.mxu0
        %v2696 = vadd.f32 %v2607, %v2695
        %2697 = vdwg.mxu0
        %v2698 = vmax.f32 %v1373, 0.0
        %v2699 = vmax.f32 %v1551, 0.0
        %v2700 = vmax.f32 %v1729, 0.0
        %v2701 = vmax.f32 %v1907, 0.0
        %v2702 = vmax.f32 %v2085, 0.0
        %v2703 = vmax.f32 %v2263, 0.0
        %v2704 = vmax.f32 %v2441, 0.0
        %v2705 = vmax.f32 %v2619, 0.0
        %v2706 = vmax.f32 %v1375, 0.0
        %v2707 = vmax.f32 %v1553, 0.0
        %v2708 = vmax.f32 %v1731, 0.0
        %v2709 = vmax.f32 %v1909, 0.0
        %v2710 = vmax.f32 %v2087, 0.0
        %v2711 = vmax.f32 %v2265, 0.0
        %v2712 = vmax.f32 %v2443, 0.0
        %v2713 = vmax.f32 %v2621, 0.0
        %v2714 = vmax.f32 %v1378, 0.0
        %v2715 = vmax.f32 %v1556, 0.0
        %v2716 = vmax.f32 %v1734, 0.0
        %v2717 = vmax.f32 %v1912, 0.0
        %v2718 = vmax.f32 %v2090, 0.0
        %v2719 = vmax.f32 %v2268, 0.0
        %v2720 = vmax.f32 %v2446, 0.0
        %v2721 = vmax.f32 %v2624, 0.0
        %v2722 = vmax.f32 %v1380, 0.0
        %v2723 = vmax.f32 %v1558, 0.0
        %v2724 = vmax.f32 %v1736, 0.0
        %v2725 = vmax.f32 %v1914, 0.0
        %v2726 = vmax.f32 %v2092, 0.0
        %v2727 = vmax.f32 %v2270, 0.0
        %v2728 = vmax.f32 %v2448, 0.0
        %v2729 = vmax.f32 %v2626, 0.0
        %v2730 = vmax.f32 %v1383, 0.0
        %v2731 = vmax.f32 %v1561, 0.0
        %v2732 = vmax.f32 %v1739, 0.0
        %v2733 = vmax.f32 %v1917, 0.0
        %v2734 = vmax.f32 %v2095, 0.0
        %v2735 = vmax.f32 %v2273, 0.0
        %v2736 = vmax.f32 %v2451, 0.0
        %v2737 = vmax.f32 %v2629, 0.0
        %v2738 = vmax.f32 %v1385, 0.0
        %v2739 = vmax.f32 %v1563, 0.0
        %v2740 = vmax.f32 %v1741, 0.0
        %v2741 = vmax.f32 %v1919, 0.0
        %v2742 = vmax.f32 %v2097, 0.0
        %v2743 = vmax.f32 %v2275, 0.0
        %v2744 = vmax.f32 %v2453, 0.0
        %v2745 = vmax.f32 %v2631, 0.0
        %v2746 = vmax.f32 %v1388, 0.0
        %v2747 = vmax.f32 %v1566, 0.0
        %v2748 = vmax.f32 %v1744, 0.0
        %v2749 = vmax.f32 %v1922, 0.0
        %v2750 = vmax.f32 %v2100, 0.0
        %v2751 = vmax.f32 %v2278, 0.0
        %v2752 = vmax.f32 %v2456, 0.0
        %v2753 = vmax.f32 %v2634, 0.0
        %v2754 = vmax.f32 %v1390, 0.0
        %v2755 = vmax.f32 %v1568, 0.0
        %v2756 = vmax.f32 %v1746, 0.0
        %v2757 = vmax.f32 %v1924, 0.0
        %v2758 = vmax.f32 %v2102, 0.0
        %v2759 = vmax.f32 %v2280, 0.0
        %v2760 = vmax.f32 %v2458, 0.0
        %v2761 = vmax.f32 %v2636, 0.0
        %v2762 = vmax.f32 %v1393, 0.0
        %v2763 = vmax.f32 %v1571, 0.0
        %v2764 = vmax.f32 %v1749, 0.0
        %v2765 = vmax.f32 %v1927, 0.0
        %v2766 = vmax.f32 %v2105, 0.0
        %v2767 = vmax.f32 %v2283, 0.0
        %v2768 = vmax.f32 %v2461, 0.0
        %v2769 = vmax.f32 %v2639, 0.0
        %v2770 = vmax.f32 %v1395, 0.0
        %v2771 = vmax.f32 %v1573, 0.0
        %v2772 = vmax.f32 %v1751, 0.0
        %v2773 = vmax.f32 %v1929, 0.0
        %v2774 = vmax.f32 %v2107, 0.0
        %v2775 = vmax.f32 %v2285, 0.0
        %v2776 = vmax.f32 %v2463, 0.0
        %v2777 = vmax.f32 %v2641, 0.0
        %v2778 = vmax.f32 %v1398, 0.0
        %v2779 = vmax.f32 %v1576, 0.0
        %v2780 = vmax.f32 %v1754, 0.0
        %v2781 = vmax.f32 %v1932, 0.0
        %v2782 = vmax.f32 %v2110, 0.0
        %v2783 = vmax.f32 %v2288, 0.0
        %v2784 = vmax.f32 %v2466, 0.0
        %v2785 = vmax.f32 %v2644, 0.0
        %v2786 = vmax.f32 %v1400, 0.0
        %v2787 = vmax.f32 %v1578, 0.0
        %v2788 = vmax.f32 %v1756, 0.0
        %v2789 = vmax.f32 %v1934, 0.0
        %v2790 = vmax.f32 %v2112, 0.0
        %v2791 = vmax.f32 %v2290, 0.0
        %v2792 = vmax.f32 %v2468, 0.0
        %v2793 = vmax.f32 %v2646, 0.0
        %v2794 = vmax.f32 %v1403, 0.0
        %v2795 = vmax.f32 %v1581, 0.0
        %v2796 = vmax.f32 %v1759, 0.0
        %v2797 = vmax.f32 %v1937, 0.0
        %v2798 = vmax.f32 %v2115, 0.0
        %v2799 = vmax.f32 %v2293, 0.0
        %v2800 = vmax.f32 %v2471, 0.0
        %v2801 = vmax.f32 %v2649, 0.0
        %v2802 = vmax.f32 %v1405, 0.0
        %v2803 = vmax.f32 %v1583, 0.0
        %v2804 = vmax.f32 %v1761, 0.0
        %v2805 = vmax.f32 %v1939, 0.0
        %v2806 = vmax.f32 %v2117, 0.0
        %v2807 = vmax.f32 %v2295, 0.0
        %v2808 = vmax.f32 %v2473, 0.0
        %v2809 = vmax.f32 %v2651, 0.0
        %v2810 = vmax.f32 %v1408, 0.0
        %v2811 = vmax.f32 %v1586, 0.0
        %v2812 = vmax.f32 %v1764, 0.0
        %v2813 = vmax.f32 %v1942, 0.0
        %v2814 = vmax.f32 %v2120, 0.0
        %v2815 = vmax.f32 %v2298, 0.0
        %v2816 = vmax.f32 %v2476, 0.0
        %v2817 = vmax.f32 %v2654, 0.0
        %v2818 = vmax.f32 %v1410, 0.0
        %v2819 = vmax.f32 %v1588, 0.0
        %v2820 = vmax.f32 %v1766, 0.0
        %v2821 = vmax.f32 %v1944, 0.0
        %v2822 = vmax.f32 %v2122, 0.0
        %v2823 = vmax.f32 %v2300, 0.0
        %v2824 = vmax.f32 %v2478, 0.0
        %v2825 = vmax.f32 %v2656, 0.0
        %v2826 = vmax.f32 %v1413, 0.0
        %v2827 = vmax.f32 %v1591, 0.0
        %v2828 = vmax.f32 %v1769, 0.0
        %v2829 = vmax.f32 %v1947, 0.0
        %v2830 = vmax.f32 %v2125, 0.0
        %v2831 = vmax.f32 %v2303, 0.0
        %v2832 = vmax.f32 %v2481, 0.0
        %v2833 = vmax.f32 %v2659, 0.0
        %v2834 = vmax.f32 %v1415, 0.0
        %v2835 = vmax.f32 %v1593, 0.0
        %v2836 = vmax.f32 %v1771, 0.0
        %v2837 = vmax.f32 %v1949, 0.0
        %v2838 = vmax.f32 %v2127, 0.0
        %v2839 = vmax.f32 %v2305, 0.0
        %v2840 = vmax.f32 %v2483, 0.0
        %v2841 = vmax.f32 %v2661, 0.0
        %v2842 = vmax.f32 %v1418, 0.0
        %v2843 = vmax.f32 %v1596, 0.0
        %v2844 = vmax.f32 %v1774, 0.0
        %v2845 = vmax.f32 %v1952, 0.0
        %v2846 = vmax.f32 %v2130, 0.0
        %v2847 = vmax.f32 %v2308, 0.0
        %v2848 = vmax.f32 %v2486, 0.0
        %v2849 = vmax.f32 %v2664, 0.0
        %v2850 = vmax.f32 %v1420, 0.0
        %v2851 = vmax.f32 %v1598, 0.0
        %v2852 = vmax.f32 %v1776, 0.0
        %v2853 = vmax.f32 %v1954, 0.0
        %v2854 = vmax.f32 %v2132, 0.0
        %v2855 = vmax.f32 %v2310, 0.0
        %v2856 = vmax.f32 %v2488, 0.0
        %v2857 = vmax.f32 %v2666, 0.0
        %v2858 = vmax.f32 %v1423, 0.0
        %v2859 = vmax.f32 %v1601, 0.0
        %v2860 = vmax.f32 %v1779, 0.0
        %v2861 = vmax.f32 %v1957, 0.0
        %v2862 = vmax.f32 %v2135, 0.0
        %v2863 = vmax.f32 %v2313, 0.0
        %v2864 = vmax.f32 %v2491, 0.0
        %v2865 = vmax.f32 %v2669, 0.0
        %v2866 = vmax.f32 %v1425, 0.0
        %v2867 = vmax.f32 %v1603, 0.0
        %v2868 = vmax.f32 %v1781, 0.0
        %v2869 = vmax.f32 %v1959, 0.0
        %v2870 = vmax.f32 %v2137, 0.0
        %v2871 = vmax.f32 %v2315, 0.0
        %v2872 = vmax.f32 %v2493, 0.0
        %v2873 = vmax.f32 %v2671, 0.0
        %v2874 = vmax.f32 %v1428, 0.0
        %v2875 = vmax.f32 %v1606, 0.0
        %v2876 = vmax.f32 %v1784, 0.0
        %v2877 = vmax.f32 %v1962, 0.0
        %v2878 = vmax.f32 %v2140, 0.0
        %v2879 = vmax.f32 %v2318, 0.0
        %v2880 = vmax.f32 %v2496, 0.0
        %v2881 = vmax.f32 %v2674, 0.0
        %v2882 = vmax.f32 %v1430, 0.0
        %v2883 = vmax.f32 %v1608, 0.0
        %v2884 = vmax.f32 %v1786, 0.0
        %v2885 = vmax.f32 %v1964, 0.0
        %v2886 = vmax.f32 %v2142, 0.0
        %v2887 = vmax.f32 %v2320, 0.0
        %v2888 = vmax.f32 %v2498, 0.0
        %v2889 = vmax.f32 %v2676, 0.0
        %v2890 = vmax.f32 %v1433, 0.0
        %v2891 = vmax.f32 %v1611, 0.0
        %v2892 = vmax.f32 %v1789, 0.0
        %v2893 = vmax.f32 %v1967, 0.0
        %v2894 = vmax.f32 %v2145, 0.0
        %v2895 = vmax.f32 %v2323, 0.0
        %v2896 = vmax.f32 %v2501, 0.0
        %v2897 = vmax.f32 %v2679, 0.0
        %v2898 = vmax.f32 %v1435, 0.0
        %v2899 = vmax.f32 %v1613, 0.0
        %v2900 = vmax.f32 %v1791, 0.0
        %v2901 = vmax.f32 %v1969, 0.0
        %v2902 = vmax.f32 %v2147, 0.0
        %v2903 = vmax.f32 %v2325, 0.0
        %v2904 = vmax.f32 %v2503, 0.0
        %v2905 = vmax.f32 %v2681, 0.0
        %v2906 = vmax.f32 %v1438, 0.0
        %v2907 = vmax.f32 %v1616, 0.0
        %v2908 = vmax.f32 %v1794, 0.0
        %v2909 = vmax.f32 %v1972, 0.0
        %v2910 = vmax.f32 %v2150, 0.0
        %v2911 = vmax.f32 %v2328, 0.0
        %v2912 = vmax.f32 %v2506, 0.0
        %v2913 = vmax.f32 %v2684, 0.0
        %v2914 = vmax.f32 %v1440, 0.0
        %v2915 = vmax.f32 %v1618, 0.0
        %v2916 = vmax.f32 %v1796, 0.0
        %v2917 = vmax.f32 %v1974, 0.0
        %v2918 = vmax.f32 %v2152, 0.0
        %v2919 = vmax.f32 %v2330, 0.0
        %v2920 = vmax.f32 %v2508, 0.0
        %v2921 = vmax.f32 %v2686, 0.0
        %v2922 = vmax.f32 %v1443, 0.0
        %v2923 = vmax.f32 %v1621, 0.0
        %v2924 = vmax.f32 %v1799, 0.0
        %v2925 = vmax.f32 %v1977, 0.0
        %v2926 = vmax.f32 %v2155, 0.0
        %v2927 = vmax.f32 %v2333, 0.0
        %v2928 = vmax.f32 %v2511, 0.0
        %v2929 = vmax.f32 %v2689, 0.0
        %v2930 = vmax.f32 %v1445, 0.0
        %v2931 = vmax.f32 %v1623, 0.0
        %v2932 = vmax.f32 %v1801, 0.0
        %v2933 = vmax.f32 %v1979, 0.0
        %v2934 = vmax.f32 %v2157, 0.0
        %v2935 = vmax.f32 %v2335, 0.0
        %v2936 = vmax.f32 %v2513, 0.0
        %v2937 = vmax.f32 %v2691, 0.0
        %v2938 = vmax.f32 %v1448, 0.0
        %v2939 = vmax.f32 %v1626, 0.0
        %v2940 = vmax.f32 %v1804, 0.0
        %v2941 = vmax.f32 %v1982, 0.0
        %v2942 = vmax.f32 %v2160, 0.0
        %v2943 = vmax.f32 %v2338, 0.0
        %v2944 = vmax.f32 %v2516, 0.0
        %v2945 = vmax.f32 %v2694, 0.0
        %v2946 = vmax.f32 %v1450, 0.0
        %v2947 = vmax.f32 %v1628, 0.0
        %v2948 = vmax.f32 %v1806, 0.0
        %v2949 = vmax.f32 %v1984, 0.0
        %v2950 = vmax.f32 %v2162, 0.0
        %v2951 = vmax.f32 %v2340, 0.0
        %v2952 = vmax.f32 %v2518, 0.0
        %v2953 = vmax.f32 %v2696, 0.0
        %v2954 = vpack.c.bf16 %v2706, %v2698
        %v2955 = vpack.c.bf16 %v2707, %v2699
        %v2956 = vpack.c.bf16 %v2708, %v2700
        %v2957 = vpack.c.bf16 %v2709, %v2701
        %v2958 = vpack.c.bf16 %v2710, %v2702
        %v2959 = vpack.c.bf16 %v2711, %v2703
        %v2960 = vpack.c.bf16 %v2712, %v2704
        %v2961 = vpack.c.bf16 %v2713, %v2705
        %v2962 = vpack.c.bf16 %v2722, %v2714
        %v2963 = vpack.c.bf16 %v2723, %v2715
        %v2964 = vpack.c.bf16 %v2724, %v2716
        %v2965 = vpack.c.bf16 %v2725, %v2717
        %v2966 = vpack.c.bf16 %v2726, %v2718
        %v2967 = vpack.c.bf16 %v2727, %v2719
        %v2968 = vpack.c.bf16 %v2728, %v2720
        %v2969 = vpack.c.bf16 %v2729, %v2721
        %v2970 = vpack.c.bf16 %v2738, %v2730
        %v2971 = vpack.c.bf16 %v2739, %v2731
        %v2972 = vpack.c.bf16 %v2740, %v2732
        %v2973 = vpack.c.bf16 %v2741, %v2733
        %v2974 = vpack.c.bf16 %v2742, %v2734
        %v2975 = vpack.c.bf16 %v2743, %v2735
        %v2976 = vpack.c.bf16 %v2744, %v2736
        %v2977 = vpack.c.bf16 %v2745, %v2737
        %v2978 = vpack.c.bf16 %v2754, %v2746
        %v2979 = vpack.c.bf16 %v2755, %v2747
        %v2980 = vpack.c.bf16 %v2756, %v2748
        %v2981 = vpack.c.bf16 %v2757, %v2749
        %v2982 = vpack.c.bf16 %v2758, %v2750
        %v2983 = vpack.c.bf16 %v2759, %v2751
        %v2984 = vpack.c.bf16 %v2760, %v2752
        %v2985 = vpack.c.bf16 %v2761, %v2753
        %v2986 = vpack.c.bf16 %v2770, %v2762
        %v2987 = vpack.c.bf16 %v2771, %v2763
        %v2988 = vpack.c.bf16 %v2772, %v2764
        %v2989 = vpack.c.bf16 %v2773, %v2765
        %v2990 = vpack.c.bf16 %v2774, %v2766
        %v2991 = vpack.c.bf16 %v2775, %v2767
        %v2992 = vpack.c.bf16 %v2776, %v2768
        %v2993 = vpack.c.bf16 %v2777, %v2769
        %v2994 = vpack.c.bf16 %v2786, %v2778
        %v2995 = vpack.c.bf16 %v2787, %v2779
        %v2996 = vpack.c.bf16 %v2788, %v2780
        %v2997 = vpack.c.bf16 %v2789, %v2781
        %v2998 = vpack.c.bf16 %v2790, %v2782
        %v2999 = vpack.c.bf16 %v2791, %v2783
        %v3000 = vpack.c.bf16 %v2792, %v2784
        %v3001 = vpack.c.bf16 %v2793, %v2785
        %v3002 = vpack.c.bf16 %v2802, %v2794
        %v3003 = vpack.c.bf16 %v2803, %v2795
        %v3004 = vpack.c.bf16 %v2804, %v2796
        %v3005 = vpack.c.bf16 %v2805, %v2797
        %v3006 = vpack.c.bf16 %v2806, %v2798
        %v3007 = vpack.c.bf16 %v2807, %v2799
        %v3008 = vpack.c.bf16 %v2808, %v2800
        %v3009 = vpack.c.bf16 %v2809, %v2801
        %v3010 = vpack.c.bf16 %v2818, %v2810
        %v3011 = vpack.c.bf16 %v2819, %v2811
        %v3012 = vpack.c.bf16 %v2820, %v2812
        %v3013 = vpack.c.bf16 %v2821, %v2813
        %v3014 = vpack.c.bf16 %v2822, %v2814
        %v3015 = vpack.c.bf16 %v2823, %v2815
        %v3016 = vpack.c.bf16 %v2824, %v2816
        %v3017 = vpack.c.bf16 %v2825, %v2817
        %v3018 = vpack.c.bf16 %v2834, %v2826
        %v3019 = vpack.c.bf16 %v2835, %v2827
        %v3020 = vpack.c.bf16 %v2836, %v2828
        %v3021 = vpack.c.bf16 %v2837, %v2829
        %v3022 = vpack.c.bf16 %v2838, %v2830
        %v3023 = vpack.c.bf16 %v2839, %v2831
        %v3024 = vpack.c.bf16 %v2840, %v2832
        %v3025 = vpack.c.bf16 %v2841, %v2833
        %v3026 = vpack.c.bf16 %v2850, %v2842
        %v3027 = vpack.c.bf16 %v2851, %v2843
        %v3028 = vpack.c.bf16 %v2852, %v2844
        %v3029 = vpack.c.bf16 %v2853, %v2845
        %v3030 = vpack.c.bf16 %v2854, %v2846
        %v3031 = vpack.c.bf16 %v2855, %v2847
        %v3032 = vpack.c.bf16 %v2856, %v2848
        %v3033 = vpack.c.bf16 %v2857, %v2849
        %v3034 = vpack.c.bf16 %v2866, %v2858
        %v3035 = vpack.c.bf16 %v2867, %v2859
        %v3036 = vpack.c.bf16 %v2868, %v2860
        %v3037 = vpack.c.bf16 %v2869, %v2861
        %v3038 = vpack.c.bf16 %v2870, %v2862
        %v3039 = vpack.c.bf16 %v2871, %v2863
        %v3040 = vpack.c.bf16 %v2872, %v2864
        %v3041 = vpack.c.bf16 %v2873, %v2865
        %v3042 = vpack.c.bf16 %v2882, %v2874
        %v3043 = vpack.c.bf16 %v2883, %v2875
        %v3044 = vpack.c.bf16 %v2884, %v2876
        %v3045 = vpack.c.bf16 %v2885, %v2877
        %v3046 = vpack.c.bf16 %v2886, %v2878
        %v3047 = vpack.c.bf16 %v2887, %v2879
        %v3048 = vpack.c.bf16 %v2888, %v2880
        %v3049 = vpack.c.bf16 %v2889, %v2881
        %v3050 = vpack.c.bf16 %v2898, %v2890
        %v3051 = vpack.c.bf16 %v2899, %v2891
        %v3052 = vpack.c.bf16 %v2900, %v2892
        %v3053 = vpack.c.bf16 %v2901, %v2893
        %v3054 = vpack.c.bf16 %v2902, %v2894
        %v3055 = vpack.c.bf16 %v2903, %v2895
        %v3056 = vpack.c.bf16 %v2904, %v2896
        %v3057 = vpack.c.bf16 %v2905, %v2897
        %v3058 = vpack.c.bf16 %v2914, %v2906
        %v3059 = vpack.c.bf16 %v2915, %v2907
        %v3060 = vpack.c.bf16 %v2916, %v2908
        %v3061 = vpack.c.bf16 %v2917, %v2909
        %v3062 = vpack.c.bf16 %v2918, %v2910
        %v3063 = vpack.c.bf16 %v2919, %v2911
        %v3064 = vpack.c.bf16 %v2920, %v2912
        %v3065 = vpack.c.bf16 %v2921, %v2913
        %v3066 = vpack.c.bf16 %v2930, %v2922
        %v3067 = vpack.c.bf16 %v2931, %v2923
        %v3068 = vpack.c.bf16 %v2932, %v2924
        %v3069 = vpack.c.bf16 %v2933, %v2925
        %v3070 = vpack.c.bf16 %v2934, %v2926
        %v3071 = vpack.c.bf16 %v2935, %v2927
        %v3072 = vpack.c.bf16 %v2936, %v2928
        %v3073 = vpack.c.bf16 %v2937, %v2929
        %v3074 = vpack.c.bf16 %v2946, %v2938
        %v3075 = vpack.c.bf16 %v2947, %v2939
        %v3076 = vpack.c.bf16 %v2948, %v2940
        %v3077 = vpack.c.bf16 %v2949, %v2941
        %v3078 = vpack.c.bf16 %v2950, %v2942
        %v3079 = vpack.c.bf16 %v2951, %v2943
        %v3080 = vpack.c.bf16 %v2952, %v2944
        %v3081 = vpack.c.bf16 %v2953, %v2945
        %v3082 = vld [vmem:[#allocation8] sm:$0xf]
        %v3083 = vld [vmem:[#allocation8 + $0x4] sm:$0xf]
        %v3084 = vld [vmem:[#allocation8 + $0x8] sm:$0xf]
        %v3085 = vld [vmem:[#allocation8 + $0xc] sm:$0xf]
        %v3086 = vld [vmem:[#allocation8 + $0x10] sm:$0xf]
        %v3087 = vld [vmem:[#allocation8 + $0x14] sm:$0xf]
        %v3088 = vld [vmem:[#allocation8 + $0x18] sm:$0xf]
        %v3089 = vld [vmem:[#allocation8 + $0x1c] sm:$0xf]
        %v3090 = vld [vmem:[#allocation8 + $0x20] sm:$0xf]
        %v3091 = vld [vmem:[#allocation8 + $0x24] sm:$0xf]
        %v3092 = vld [vmem:[#allocation8 + $0x28] sm:$0xf]
        %v3093 = vld [vmem:[#allocation8 + $0x2c] sm:$0xf]
        %v3094 = vld [vmem:[#allocation8 + $0x30] sm:$0xf]
        %v3095 = vld [vmem:[#allocation8 + $0x34] sm:$0xf]
        %v3096 = vld [vmem:[#allocation8 + $0x38] sm:$0xf]
        %v3097 = vld [vmem:[#allocation8 + $0x3c] sm:$0xf]
        %v3098 = vld [vmem:[#allocation8 + $0x40] sm:$0xf]
        %v3099 = vld [vmem:[#allocation8 + $0x44] sm:$0xf]
        %v3100 = vld [vmem:[#allocation8 + $0x48] sm:$0xf]
        %v3101 = vld [vmem:[#allocation8 + $0x4c] sm:$0xf]
        %v3102 = vld [vmem:[#allocation8 + $0x50] sm:$0xf]
        %v3103 = vld [vmem:[#allocation8 + $0x54] sm:$0xf]
        %v3104 = vld [vmem:[#allocation8 + $0x58] sm:$0xf]
        %v3105 = vld [vmem:[#allocation8 + $0x5c] sm:$0xf]
        %v3106 = vld [vmem:[#allocation8 + $0x60] sm:$0xf]
        %v3107 = vld [vmem:[#allocation8 + $0x64] sm:$0xf]
        %v3108 = vld [vmem:[#allocation8 + $0x68] sm:$0xf]
        %v3109 = vld [vmem:[#allocation8 + $0x6c] sm:$0xf]
        %v3110 = vld [vmem:[#allocation8 + $0x70] sm:$0xf]
        %v3111 = vld [vmem:[#allocation8 + $0x74] sm:$0xf]
        %v3112 = vld [vmem:[#allocation8 + $0x78] sm:$0xf]
        %v3113 = vld [vmem:[#allocation8 + $0x7c] sm:$0xf]
        %v3114 = vld [vmem:[#allocation8 + $0x80] sm:$0xf]
        %v3115 = vld [vmem:[#allocation8 + $0x84] sm:$0xf]
        %v3116 = vld [vmem:[#allocation8 + $0x88] sm:$0xf]
        %v3117 = vld [vmem:[#allocation8 + $0x8c] sm:$0xf]
        %v3118 = vld [vmem:[#allocation8 + $0x90] sm:$0xf]
        %v3119 = vld [vmem:[#allocation8 + $0x94] sm:$0xf]
        %v3120 = vld [vmem:[#allocation8 + $0x98] sm:$0xf]
        %v3121 = vld [vmem:[#allocation8 + $0x9c] sm:$0xf]
        %v3122 = vld [vmem:[#allocation8 + $0xa0] sm:$0xf]
        %v3123 = vld [vmem:[#allocation8 + $0xa4] sm:$0xf]
        %v3124 = vld [vmem:[#allocation8 + $0xa8] sm:$0xf]
        %v3125 = vld [vmem:[#allocation8 + $0xac] sm:$0xf]
        %v3126 = vld [vmem:[#allocation8 + $0xb0] sm:$0xf]
        %v3127 = vld [vmem:[#allocation8 + $0xb4] sm:$0xf]
        %v3128 = vld [vmem:[#allocation8 + $0xb8] sm:$0xf]
        %v3129 = vld [vmem:[#allocation8 + $0xbc] sm:$0xf]
        %v3130 = vld [vmem:[#allocation8 + $0xc0] sm:$0xf]
        %v3131 = vld [vmem:[#allocation8 + $0xc4] sm:$0xf]
        %v3132 = vld [vmem:[#allocation8 + $0xc8] sm:$0xf]
        %v3133 = vld [vmem:[#allocation8 + $0xcc] sm:$0xf]
        %v3134 = vld [vmem:[#allocation8 + $0xd0] sm:$0xf]
        %v3135 = vld [vmem:[#allocation8 + $0xd4] sm:$0xf]
        %v3136 = vld [vmem:[#allocation8 + $0xd8] sm:$0xf]
        %v3137 = vld [vmem:[#allocation8 + $0xdc] sm:$0xf]
        %v3138 = vld [vmem:[#allocation8 + $0xe0] sm:$0xf]
        %v3139 = vld [vmem:[#allocation8 + $0xe4] sm:$0xf]
        %v3140 = vld [vmem:[#allocation8 + $0xe8] sm:$0xf]
        %v3141 = vld [vmem:[#allocation8 + $0xec] sm:$0xf]
        %v3142 = vld [vmem:[#allocation8 + $0xf0] sm:$0xf]
        %v3143 = vld [vmem:[#allocation8 + $0xf4] sm:$0xf]
        %v3144 = vld [vmem:[#allocation8 + $0xf8] sm:$0xf]
        %v3145 = vld [vmem:[#allocation8 + $0xfc] sm:$0xf]
        %v3146 = vld [vmem:[#allocation8 + $0x100] sm:$0xf]
        %v3147 = vld [vmem:[#allocation8 + $0x104] sm:$0xf]
        %v3148 = vld [vmem:[#allocation8 + $0x108] sm:$0xf]
        %v3149 = vld [vmem:[#allocation8 + $0x10c] sm:$0xf]
        %v3150 = vld [vmem:[#allocation8 + $0x110] sm:$0xf]
        %v3151 = vld [vmem:[#allocation8 + $0x114] sm:$0xf]
        %v3152 = vld [vmem:[#allocation8 + $0x118] sm:$0xf]
        %v3153 = vld [vmem:[#allocation8 + $0x11c] sm:$0xf]
        %v3154 = vld [vmem:[#allocation8 + $0x120] sm:$0xf]
        %v3155 = vld [vmem:[#allocation8 + $0x124] sm:$0xf]
        %v3156 = vld [vmem:[#allocation8 + $0x128] sm:$0xf]
        %v3157 = vld [vmem:[#allocation8 + $0x12c] sm:$0xf]
        %v3158 = vld [vmem:[#allocation8 + $0x130] sm:$0xf]
        %v3159 = vld [vmem:[#allocation8 + $0x134] sm:$0xf]
        %v3160 = vld [vmem:[#allocation8 + $0x138] sm:$0xf]
        %v3161 = vld [vmem:[#allocation8 + $0x13c] sm:$0xf]
        %v3162 = vld [vmem:[#allocation8 + $0x140] sm:$0xf]
        %v3163 = vld [vmem:[#allocation8 + $0x144] sm:$0xf]
        %v3164 = vld [vmem:[#allocation8 + $0x148] sm:$0xf]
        %v3165 = vld [vmem:[#allocation8 + $0x14c] sm:$0xf]
        %v3166 = vld [vmem:[#allocation8 + $0x150] sm:$0xf]
        %v3167 = vld [vmem:[#allocation8 + $0x154] sm:$0xf]
        %v3168 = vld [vmem:[#allocation8 + $0x158] sm:$0xf]
        %v3169 = vld [vmem:[#allocation8 + $0x15c] sm:$0xf]
        %v3170 = vld [vmem:[#allocation8 + $0x160] sm:$0xf]
        %v3171 = vld [vmem:[#allocation8 + $0x164] sm:$0xf]
        %v3172 = vld [vmem:[#allocation8 + $0x168] sm:$0xf]
        %v3173 = vld [vmem:[#allocation8 + $0x16c] sm:$0xf]
        %v3174 = vld [vmem:[#allocation8 + $0x170] sm:$0xf]
        %v3175 = vld [vmem:[#allocation8 + $0x174] sm:$0xf]
        %v3176 = vld [vmem:[#allocation8 + $0x178] sm:$0xf]
        %v3177 = vld [vmem:[#allocation8 + $0x17c] sm:$0xf]
        %v3178 = vld [vmem:[#allocation8 + $0x180] sm:$0xf]
        %v3179 = vld [vmem:[#allocation8 + $0x184] sm:$0xf]
        %v3180 = vld [vmem:[#allocation8 + $0x188] sm:$0xf]
        %v3181 = vld [vmem:[#allocation8 + $0x18c] sm:$0xf]
        %v3182 = vld [vmem:[#allocation8 + $0x190] sm:$0xf]
        %v3183 = vld [vmem:[#allocation8 + $0x194] sm:$0xf]
        %v3184 = vld [vmem:[#allocation8 + $0x198] sm:$0xf]
        %v3185 = vld [vmem:[#allocation8 + $0x19c] sm:$0xf]
        %v3186 = vld [vmem:[#allocation8 + $0x1a0] sm:$0xf]
        %v3187 = vld [vmem:[#allocation8 + $0x1a4] sm:$0xf]
        %v3188 = vld [vmem:[#allocation8 + $0x1a8] sm:$0xf]
        %v3189 = vld [vmem:[#allocation8 + $0x1ac] sm:$0xf]
        %v3190 = vld [vmem:[#allocation8 + $0x1b0] sm:$0xf]
        %v3191 = vld [vmem:[#allocation8 + $0x1b4] sm:$0xf]
        %v3192 = vld [vmem:[#allocation8 + $0x1b8] sm:$0xf]
        %v3193 = vld [vmem:[#allocation8 + $0x1bc] sm:$0xf]
        %v3194 = vld [vmem:[#allocation8 + $0x1c0] sm:$0xf]
        %v3195 = vld [vmem:[#allocation8 + $0x1c4] sm:$0xf]
        %v3196 = vld [vmem:[#allocation8 + $0x1c8] sm:$0xf]
        %v3197 = vld [vmem:[#allocation8 + $0x1cc] sm:$0xf]
        %v3198 = vld [vmem:[#allocation8 + $0x1d0] sm:$0xf]
        %v3199 = vld [vmem:[#allocation8 + $0x1d4] sm:$0xf]
        %v3200 = vld [vmem:[#allocation8 + $0x1d8] sm:$0xf]
        %v3201 = vld [vmem:[#allocation8 + $0x1dc] sm:$0xf]
        %v3202 = vld [vmem:[#allocation8 + $0x1e0] sm:$0xf]
        %v3203 = vld [vmem:[#allocation8 + $0x1e4] sm:$0xf]
        %v3204 = vld [vmem:[#allocation8 + $0x1e8] sm:$0xf]
        %v3205 = vld [vmem:[#allocation8 + $0x1ec] sm:$0xf]
        %v3206 = vld [vmem:[#allocation8 + $0x1f0] sm:$0xf]
        %v3207 = vld [vmem:[#allocation8 + $0x1f4] sm:$0xf]
        %v3208 = vld [vmem:[#allocation8 + $0x1f8] sm:$0xf]
        %v3209 = vld [vmem:[#allocation8 + $0x1fc] sm:$0xf]
        %v3210 = vld [vmem:[%s4] sm:$0x1]
        %v3212 = vperm.slane %v3210, 0
        %v3342 = vunpack.c.l.b16 %v3082
        %v3343 = vunpack.c.l.b16 %v3083
        %v3344 = vunpack.c.l.b16 %v3084
        %v3345 = vunpack.c.l.b16 %v3085
        %v3346 = vunpack.c.l.b16 %v3086
        %v3347 = vunpack.c.l.b16 %v3087
        %v3348 = vunpack.c.l.b16 %v3088
        %v3349 = vunpack.c.l.b16 %v3089
        %v3350 = vunpack.c.l.b16 %v3090
        %v3351 = vunpack.c.l.b16 %v3091
        %v3352 = vunpack.c.l.b16 %v3092
        %v3353 = vunpack.c.l.b16 %v3093
        %v3354 = vunpack.c.l.b16 %v3094
        %v3355 = vunpack.c.l.b16 %v3095
        %v3356 = vunpack.c.l.b16 %v3096
        %v3357 = vunpack.c.l.b16 %v3097
        %v3358 = vunpack.c.l.b16 %v3098
        %v3359 = vunpack.c.l.b16 %v3099
        %v3360 = vunpack.c.l.b16 %v3100
        %v3361 = vunpack.c.l.b16 %v3101
        %v3362 = vunpack.c.l.b16 %v3102
        %v3363 = vunpack.c.l.b16 %v3103
        %v3364 = vunpack.c.l.b16 %v3104
        %v3365 = vunpack.c.l.b16 %v3105
        %v3366 = vunpack.c.l.b16 %v3106
        %v3367 = vunpack.c.l.b16 %v3107
        %v3368 = vunpack.c.l.b16 %v3108
        %v3369 = vunpack.c.l.b16 %v3109
        %v3370 = vunpack.c.l.b16 %v3110
        %v3371 = vunpack.c.l.b16 %v3111
        %v3372 = vunpack.c.l.b16 %v3112
        %v3373 = vunpack.c.l.b16 %v3113
        %v3374 = vunpack.c.l.b16 %v3114
        %v3375 = vunpack.c.l.b16 %v3115
        %v3376 = vunpack.c.l.b16 %v3116
        %v3377 = vunpack.c.l.b16 %v3117
        %v3378 = vunpack.c.l.b16 %v3118
        %v3379 = vunpack.c.l.b16 %v3119
        %v3380 = vunpack.c.l.b16 %v3120
        %v3381 = vunpack.c.l.b16 %v3121
        %v3382 = vunpack.c.l.b16 %v3122
        %v3383 = vunpack.c.l.b16 %v3123
        %v3384 = vunpack.c.l.b16 %v3124
        %v3385 = vunpack.c.l.b16 %v3125
        %v3386 = vunpack.c.l.b16 %v3126
        %v3387 = vunpack.c.l.b16 %v3127
        %v3388 = vunpack.c.l.b16 %v3128
        %v3389 = vunpack.c.l.b16 %v3129
        %v3390 = vunpack.c.l.b16 %v3130
        %v3391 = vunpack.c.l.b16 %v3131
        %v3392 = vunpack.c.l.b16 %v3132
        %v3393 = vunpack.c.l.b16 %v3133
        %v3394 = vunpack.c.l.b16 %v3134
        %v3395 = vunpack.c.l.b16 %v3135
        %v3396 = vunpack.c.l.b16 %v3136
        %v3397 = vunpack.c.l.b16 %v3137
        %v3398 = vunpack.c.l.b16 %v3138
        %v3399 = vunpack.c.l.b16 %v3139
        %v3400 = vunpack.c.l.b16 %v3140
        %v3401 = vunpack.c.l.b16 %v3141
        %v3402 = vunpack.c.l.b16 %v3142
        %v3403 = vunpack.c.l.b16 %v3143
        %v3404 = vunpack.c.l.b16 %v3144
        %v3405 = vunpack.c.l.b16 %v3145
        %v3406 = vunpack.c.l.b16 %v3146
        %v3407 = vunpack.c.l.b16 %v3147
        %v3408 = vunpack.c.l.b16 %v3148
        %v3409 = vunpack.c.l.b16 %v3149
        %v3410 = vunpack.c.l.b16 %v3150
        %v3411 = vunpack.c.l.b16 %v3151
        %v3412 = vunpack.c.l.b16 %v3152
        %v3413 = vunpack.c.l.b16 %v3153
        %v3414 = vunpack.c.l.b16 %v3154
        %v3415 = vunpack.c.l.b16 %v3155
        %v3416 = vunpack.c.l.b16 %v3156
        %v3417 = vunpack.c.l.b16 %v3157
        %v3418 = vunpack.c.l.b16 %v3158
        %v3419 = vunpack.c.l.b16 %v3159
        %v3420 = vunpack.c.l.b16 %v3160
        %v3421 = vunpack.c.l.b16 %v3161
        %v3422 = vunpack.c.l.b16 %v3162
        %v3423 = vunpack.c.l.b16 %v3163
        %v3424 = vunpack.c.l.b16 %v3164
        %v3425 = vunpack.c.l.b16 %v3165
        %v3426 = vunpack.c.l.b16 %v3166
        %v3427 = vunpack.c.l.b16 %v3167
        %v3428 = vunpack.c.l.b16 %v3168
        %v3429 = vunpack.c.l.b16 %v3169
        %v3430 = vunpack.c.l.b16 %v3170
        %v3431 = vunpack.c.l.b16 %v3171
        %v3432 = vunpack.c.l.b16 %v3172
        %v3433 = vunpack.c.l.b16 %v3173
        %v3434 = vunpack.c.l.b16 %v3174
        %v3435 = vunpack.c.l.b16 %v3175
        %v3436 = vunpack.c.l.b16 %v3176
        %v3437 = vunpack.c.l.b16 %v3177
        %v3438 = vunpack.c.l.b16 %v3178
        %v3439 = vunpack.c.l.b16 %v3179
        %v3440 = vunpack.c.l.b16 %v3180
        %v3441 = vunpack.c.l.b16 %v3181
        %v3442 = vunpack.c.l.b16 %v3182
        %v3443 = vunpack.c.l.b16 %v3183
        %v3444 = vunpack.c.l.b16 %v3184
        %v3445 = vunpack.c.l.b16 %v3185
        %v3446 = vunpack.c.l.b16 %v3186
        %v3447 = vunpack.c.l.b16 %v3187
        %v3448 = vunpack.c.l.b16 %v3188
        %v3449 = vunpack.c.l.b16 %v3189
        %v3450 = vunpack.c.l.b16 %v3190
        %v3451 = vunpack.c.l.b16 %v3191
        %v3452 = vunpack.c.l.b16 %v3192
        %v3453 = vunpack.c.l.b16 %v3193
        %v3454 = vunpack.c.l.b16 %v3194
        %v3455 = vunpack.c.l.b16 %v3195
        %v3456 = vunpack.c.l.b16 %v3196
        %v3457 = vunpack.c.l.b16 %v3197
        %v3458 = vunpack.c.l.b16 %v3198
        %v3459 = vunpack.c.l.b16 %v3199
        %v3460 = vunpack.c.l.b16 %v3200
        %v3461 = vunpack.c.l.b16 %v3201
        %v3462 = vunpack.c.l.b16 %v3202
        %v3463 = vunpack.c.l.b16 %v3203
        %v3464 = vunpack.c.l.b16 %v3204
        %v3465 = vunpack.c.l.b16 %v3205
        %v3466 = vunpack.c.l.b16 %v3206
        %v3467 = vunpack.c.l.b16 %v3207
        %v3468 = vunpack.c.l.b16 %v3208
        %v3469 = vunpack.c.l.b16 %v3209
        %v3470 = vpack.c.b16 %v3343, %v3342
        %v3471 = vpack.c.b16 %v3345, %v3344
        %v3472 = vpack.c.b16 %v3347, %v3346
        %v3473 = vpack.c.b16 %v3349, %v3348
        %v3474 = vpack.c.b16 %v3351, %v3350
        %v3475 = vpack.c.b16 %v3353, %v3352
        %v3476 = vpack.c.b16 %v3355, %v3354
        %v3477 = vpack.c.b16 %v3357, %v3356
        %v3478 = vpack.c.b16 %v3359, %v3358
        %v3479 = vpack.c.b16 %v3361, %v3360
        %v3480 = vpack.c.b16 %v3363, %v3362
        %v3481 = vpack.c.b16 %v3365, %v3364
        %v3482 = vpack.c.b16 %v3367, %v3366
        %v3483 = vpack.c.b16 %v3369, %v3368
        %v3484 = vpack.c.b16 %v3371, %v3370
        %v3485 = vpack.c.b16 %v3373, %v3372
        %v3486 = vpack.c.b16 %v3375, %v3374
        %v3487 = vpack.c.b16 %v3377, %v3376
        %v3488 = vpack.c.b16 %v3379, %v3378
        %v3489 = vpack.c.b16 %v3381, %v3380
        %v3490 = vpack.c.b16 %v3383, %v3382
        %v3491 = vpack.c.b16 %v3385, %v3384
        %v3492 = vpack.c.b16 %v3387, %v3386
        %v3493 = vpack.c.b16 %v3389, %v3388
        %v3494 = vpack.c.b16 %v3391, %v3390
        %v3495 = vpack.c.b16 %v3393, %v3392
        %v3496 = vpack.c.b16 %v3395, %v3394
        %v3497 = vpack.c.b16 %v3397, %v3396
        %v3498 = vpack.c.b16 %v3399, %v3398
        %v3499 = vpack.c.b16 %v3401, %v3400
        %v3500 = vpack.c.b16 %v3403, %v3402
        %v3501 = vpack.c.b16 %v3405, %v3404
        %v3502 = vpack.c.b16 %v3407, %v3406
        %v3503 = vpack.c.b16 %v3409, %v3408
        %v3504 = vpack.c.b16 %v3411, %v3410
        %v3505 = vpack.c.b16 %v3413, %v3412
        %v3506 = vpack.c.b16 %v3415, %v3414
        %v3507 = vpack.c.b16 %v3417, %v3416
        %v3508 = vpack.c.b16 %v3419, %v3418
        %v3509 = vpack.c.b16 %v3421, %v3420
        %v3510 = vpack.c.b16 %v3423, %v3422
        %v3511 = vpack.c.b16 %v3425, %v3424
        %v3512 = vpack.c.b16 %v3427, %v3426
        %v3513 = vpack.c.b16 %v3429, %v3428
        %v3514 = vpack.c.b16 %v3431, %v3430
        %v3515 = vpack.c.b16 %v3433, %v3432
        %v3516 = vpack.c.b16 %v3435, %v3434
        %v3517 = vpack.c.b16 %v3437, %v3436
        %v3518 = vpack.c.b16 %v3439, %v3438
        %v3519 = vpack.c.b16 %v3441, %v3440
        %v3520 = vpack.c.b16 %v3443, %v3442
        %v3521 = vpack.c.b16 %v3445, %v3444
        %v3522 = vpack.c.b16 %v3447, %v3446
        %v3523 = vpack.c.b16 %v3449, %v3448
        %v3524 = vpack.c.b16 %v3451, %v3450
        %v3525 = vpack.c.b16 %v3453, %v3452
        %v3526 = vpack.c.b16 %v3455, %v3454
        %v3527 = vpack.c.b16 %v3457, %v3456
        %v3528 = vpack.c.b16 %v3459, %v3458
        %v3529 = vpack.c.b16 %v3461, %v3460
        %v3530 = vpack.c.b16 %v3463, %v3462
        %v3531 = vpack.c.b16 %v3465, %v3464
        %v3532 = vpack.c.b16 %v3467, %v3466
        %v3533 = vpack.c.b16 %v3469, %v3468
        %3598 = vmatpush.bf16.msra.mxu0 %v3477
        %3599 = vmatpush.bf16.msra.mxu0 %v3476
        %3600 = vmatpush.bf16.msra.mxu0 %v3475
        %3601 = vmatpush.bf16.msra.mxu0 %v3474
        %3602 = vmatpush.bf16.msra.mxu0 %v3473
        %3603 = vmatpush.bf16.msra.mxu0 %v3472
        %3604 = vmatpush.bf16.msra.mxu0 %v3471
        %3605 = vmatpush.bf16.msra.mxu0 %v3470
        %3606 = vmatmul.bf16.gmra.mxu0 %v2954
        %v3607 = vpop.f32.mrf.mxu0
        %v3608 = vadd.f32 %v3212, %v3607
        %v3609 = vpop.f32.mrf.mxu0
        %v3610 = vadd.f32 %v3212, %v3609
        %3611 = vmatmul.bf16.gmra.mxu0 %v2962
        %v3612 = vpop.f32.mrf.mxu0
        %v3613 = vadd.f32 %v3212, %v3612
        %v3614 = vpop.f32.mrf.mxu0
        %v3615 = vadd.f32 %v3212, %v3614
        %3616 = vmatmul.bf16.gmra.mxu0 %v2970
        %v3617 = vpop.f32.mrf.mxu0
        %v3618 = vadd.f32 %v3212, %v3617
        %v3619 = vpop.f32.mrf.mxu0
        %v3620 = vadd.f32 %v3212, %v3619
        %3621 = vmatmul.bf16.gmra.mxu0 %v2978
        %v3622 = vpop.f32.mrf.mxu0
        %v3623 = vadd.f32 %v3212, %v3622
        %v3624 = vpop.f32.mrf.mxu0
        %v3625 = vadd.f32 %v3212, %v3624
        %3626 = vmatmul.bf16.gmra.mxu0 %v2986
        %v3627 = vpop.f32.mrf.mxu0
        %v3628 = vadd.f32 %v3212, %v3627
        %v3629 = vpop.f32.mrf.mxu0
        %v3630 = vadd.f32 %v3212, %v3629
        %3631 = vmatmul.bf16.gmra.mxu0 %v2994
        %v3632 = vpop.f32.mrf.mxu0
        %v3633 = vadd.f32 %v3212, %v3632
        %v3634 = vpop.f32.mrf.mxu0
        %v3635 = vadd.f32 %v3212, %v3634
        %3636 = vmatmul.bf16.gmra.mxu0 %v3002
        %v3637 = vpop.f32.mrf.mxu0
        %v3638 = vadd.f32 %v3212, %v3637
        %v3639 = vpop.f32.mrf.mxu0
        %v3640 = vadd.f32 %v3212, %v3639
        %3641 = vmatmul.bf16.gmra.mxu0 %v3010
        %v3642 = vpop.f32.mrf.mxu0
        %v3643 = vadd.f32 %v3212, %v3642
        %v3644 = vpop.f32.mrf.mxu0
        %v3645 = vadd.f32 %v3212, %v3644
        %3646 = vmatmul.bf16.gmra.mxu0 %v3018
        %v3647 = vpop.f32.mrf.mxu0
        %v3648 = vadd.f32 %v3212, %v3647
        %v3649 = vpop.f32.mrf.mxu0
        %v3650 = vadd.f32 %v3212, %v3649
        %3651 = vmatmul.bf16.gmra.mxu0 %v3026
        %v3652 = vpop.f32.mrf.mxu0
        %v3653 = vadd.f32 %v3212, %v3652
        %v3654 = vpop.f32.mrf.mxu0
        %v3655 = vadd.f32 %v3212, %v3654
        %3656 = vmatmul.bf16.gmra.mxu0 %v3034
        %v3657 = vpop.f32.mrf.mxu0
        %v3658 = vadd.f32 %v3212, %v3657
        %v3659 = vpop.f32.mrf.mxu0
        %v3660 = vadd.f32 %v3212, %v3659
        %3661 = vmatmul.bf16.gmra.mxu0 %v3042
        %v3662 = vpop.f32.mrf.mxu0
        %v3663 = vadd.f32 %v3212, %v3662
        %v3664 = vpop.f32.mrf.mxu0
        %v3665 = vadd.f32 %v3212, %v3664
        %3666 = vmatmul.bf16.gmra.mxu0 %v3050
        %v3667 = vpop.f32.mrf.mxu0
        %v3668 = vadd.f32 %v3212, %v3667
        %v3669 = vpop.f32.mrf.mxu0
        %v3670 = vadd.f32 %v3212, %v3669
        %3671 = vmatmul.bf16.gmra.mxu0 %v3058
        %v3672 = vpop.f32.mrf.mxu0
        %v3673 = vadd.f32 %v3212, %v3672
        %v3674 = vpop.f32.mrf.mxu0
        %v3675 = vadd.f32 %v3212, %v3674
        %3676 = vmatmul.bf16.gmra.mxu0 %v3066
        %v3677 = vpop.f32.mrf.mxu0
        %v3678 = vadd.f32 %v3212, %v3677
        %v3679 = vpop.f32.mrf.mxu0
        %v3680 = vadd.f32 %v3212, %v3679
        %3681 = vmatmul.bf16.gmra.mxu0 %v3074
        %v3682 = vpop.f32.mrf.mxu0
        %v3683 = vadd.f32 %v3212, %v3682
        %v3684 = vpop.f32.mrf.mxu0
        %v3685 = vadd.f32 %v3212, %v3684
        %3686 = vdwg.mxu0
        %3687 = vmatpush.bf16.msra.mxu0 %v3485
        %3688 = vmatpush.bf16.msra.mxu0 %v3484
        %3689 = vmatpush.bf16.msra.mxu0 %v3483
        %3690 = vmatpush.bf16.msra.mxu0 %v3482
        %3691 = vmatpush.bf16.msra.mxu0 %v3481
        %3692 = vmatpush.bf16.msra.mxu0 %v3480
        %3693 = vmatpush.bf16.msra.mxu0 %v3479
        %3694 = vmatpush.bf16.msra.mxu0 %v3478
        %3695 = vmatmul.bf16.gmra.mxu0 %v2955
        %v3696 = vpop.f32.mrf.mxu0
        %v3697 = vadd.f32 %v3608, %v3696
        %v3698 = vpop.f32.mrf.mxu0
        %v3699 = vadd.f32 %v3610, %v3698
        %3700 = vmatmul.bf16.gmra.mxu0 %v2963
        %v3701 = vpop.f32.mrf.mxu0
        %v3702 = vadd.f32 %v3613, %v3701
        %v3703 = vpop.f32.mrf.mxu0
        %v3704 = vadd.f32 %v3615, %v3703
        %3705 = vmatmul.bf16.gmra.mxu0 %v2971
        %v3706 = vpop.f32.mrf.mxu0
        %v3707 = vadd.f32 %v3618, %v3706
        %v3708 = vpop.f32.mrf.mxu0
        %v3709 = vadd.f32 %v3620, %v3708
        %3710 = vmatmul.bf16.gmra.mxu0 %v2979
        %v3711 = vpop.f32.mrf.mxu0
        %v3712 = vadd.f32 %v3623, %v3711
        %v3713 = vpop.f32.mrf.mxu0
        %v3714 = vadd.f32 %v3625, %v3713
        %3715 = vmatmul.bf16.gmra.mxu0 %v2987
        %v3716 = vpop.f32.mrf.mxu0
        %v3717 = vadd.f32 %v3628, %v3716
        %v3718 = vpop.f32.mrf.mxu0
        %v3719 = vadd.f32 %v3630, %v3718
        %3720 = vmatmul.bf16.gmra.mxu0 %v2995
        %v3721 = vpop.f32.mrf.mxu0
        %v3722 = vadd.f32 %v3633, %v3721
        %v3723 = vpop.f32.mrf.mxu0
        %v3724 = vadd.f32 %v3635, %v3723
        %3725 = vmatmul.bf16.gmra.mxu0 %v3003
        %v3726 = vpop.f32.mrf.mxu0
        %v3727 = vadd.f32 %v3638, %v3726
        %v3728 = vpop.f32.mrf.mxu0
        %v3729 = vadd.f32 %v3640, %v3728
        %3730 = vmatmul.bf16.gmra.mxu0 %v3011
        %v3731 = vpop.f32.mrf.mxu0
        %v3732 = vadd.f32 %v3643, %v3731
        %v3733 = vpop.f32.mrf.mxu0
        %v3734 = vadd.f32 %v3645, %v3733
        %3735 = vmatmul.bf16.gmra.mxu0 %v3019
        %v3736 = vpop.f32.mrf.mxu0
        %v3737 = vadd.f32 %v3648, %v3736
        %v3738 = vpop.f32.mrf.mxu0
        %v3739 = vadd.f32 %v3650, %v3738
        %3740 = vmatmul.bf16.gmra.mxu0 %v3027
        %v3741 = vpop.f32.mrf.mxu0
        %v3742 = vadd.f32 %v3653, %v3741
        %v3743 = vpop.f32.mrf.mxu0
        %v3744 = vadd.f32 %v3655, %v3743
        %3745 = vmatmul.bf16.gmra.mxu0 %v3035
        %v3746 = vpop.f32.mrf.mxu0
        %v3747 = vadd.f32 %v3658, %v3746
        %v3748 = vpop.f32.mrf.mxu0
        %v3749 = vadd.f32 %v3660, %v3748
        %3750 = vmatmul.bf16.gmra.mxu0 %v3043
        %v3751 = vpop.f32.mrf.mxu0
        %v3752 = vadd.f32 %v3663, %v3751
        %v3753 = vpop.f32.mrf.mxu0
        %v3754 = vadd.f32 %v3665, %v3753
        %3755 = vmatmul.bf16.gmra.mxu0 %v3051
        %v3756 = vpop.f32.mrf.mxu0
        %v3757 = vadd.f32 %v3668, %v3756
        %v3758 = vpop.f32.mrf.mxu0
        %v3759 = vadd.f32 %v3670, %v3758
        %3760 = vmatmul.bf16.gmra.mxu0 %v3059
        %v3761 = vpop.f32.mrf.mxu0
        %v3762 = vadd.f32 %v3673, %v3761
        %v3763 = vpop.f32.mrf.mxu0
        %v3764 = vadd.f32 %v3675, %v3763
        %3765 = vmatmul.bf16.gmra.mxu0 %v3067
        %v3766 = vpop.f32.mrf.mxu0
        %v3767 = vadd.f32 %v3678, %v3766
        %v3768 = vpop.f32.mrf.mxu0
        %v3769 = vadd.f32 %v3680, %v3768
        %3770 = vmatmul.bf16.gmra.mxu0 %v3075
        %v3771 = vpop.f32.mrf.mxu0
        %v3772 = vadd.f32 %v3683, %v3771
        %v3773 = vpop.f32.mrf.mxu0
        %v3774 = vadd.f32 %v3685, %v3773
        %3775 = vdwg.mxu0
        %3776 = vmatpush.bf16.msra.mxu0 %v3493
        %3777 = vmatpush.bf16.msra.mxu0 %v3492
        %3778 = vmatpush.bf16.msra.mxu0 %v3491
        %3779 = vmatpush.bf16.msra.mxu0 %v3490
        %3780 = vmatpush.bf16.msra.mxu0 %v3489
        %3781 = vmatpush.bf16.msra.mxu0 %v3488
        %3782 = vmatpush.bf16.msra.mxu0 %v3487
        %3783 = vmatpush.bf16.msra.mxu0 %v3486
        %3784 = vmatmul.bf16.gmra.mxu0 %v2956
        %v3785 = vpop.f32.mrf.mxu0
        %v3786 = vadd.f32 %v3697, %v3785
        %v3787 = vpop.f32.mrf.mxu0
        %v3788 = vadd.f32 %v3699, %v3787
        %3789 = vmatmul.bf16.gmra.mxu0 %v2964
        %v3790 = vpop.f32.mrf.mxu0
        %v3791 = vadd.f32 %v3702, %v3790
        %v3792 = vpop.f32.mrf.mxu0
        %v3793 = vadd.f32 %v3704, %v3792
        %3794 = vmatmul.bf16.gmra.mxu0 %v2972
        %v3795 = vpop.f32.mrf.mxu0
        %v3796 = vadd.f32 %v3707, %v3795
        %v3797 = vpop.f32.mrf.mxu0
        %v3798 = vadd.f32 %v3709, %v3797
        %3799 = vmatmul.bf16.gmra.mxu0 %v2980
        %v3800 = vpop.f32.mrf.mxu0
        %v3801 = vadd.f32 %v3712, %v3800
        %v3802 = vpop.f32.mrf.mxu0
        %v3803 = vadd.f32 %v3714, %v3802
        %3804 = vmatmul.bf16.gmra.mxu0 %v2988
        %v3805 = vpop.f32.mrf.mxu0
        %v3806 = vadd.f32 %v3717, %v3805
        %v3807 = vpop.f32.mrf.mxu0
        %v3808 = vadd.f32 %v3719, %v3807
        %3809 = vmatmul.bf16.gmra.mxu0 %v2996
        %v3810 = vpop.f32.mrf.mxu0
        %v3811 = vadd.f32 %v3722, %v3810
        %v3812 = vpop.f32.mrf.mxu0
        %v3813 = vadd.f32 %v3724, %v3812
        %3814 = vmatmul.bf16.gmra.mxu0 %v3004
        %v3815 = vpop.f32.mrf.mxu0
        %v3816 = vadd.f32 %v3727, %v3815
        %v3817 = vpop.f32.mrf.mxu0
        %v3818 = vadd.f32 %v3729, %v3817
        %3819 = vmatmul.bf16.gmra.mxu0 %v3012
        %v3820 = vpop.f32.mrf.mxu0
        %v3821 = vadd.f32 %v3732, %v3820
        %v3822 = vpop.f32.mrf.mxu0
        %v3823 = vadd.f32 %v3734, %v3822
        %3824 = vmatmul.bf16.gmra.mxu0 %v3020
        %v3825 = vpop.f32.mrf.mxu0
        %v3826 = vadd.f32 %v3737, %v3825
        %v3827 = vpop.f32.mrf.mxu0
        %v3828 = vadd.f32 %v3739, %v3827
        %3829 = vmatmul.bf16.gmra.mxu0 %v3028
        %v3830 = vpop.f32.mrf.mxu0
        %v3831 = vadd.f32 %v3742, %v3830
        %v3832 = vpop.f32.mrf.mxu0
        %v3833 = vadd.f32 %v3744, %v3832
        %3834 = vmatmul.bf16.gmra.mxu0 %v3036
        %v3835 = vpop.f32.mrf.mxu0
        %v3836 = vadd.f32 %v3747, %v3835
        %v3837 = vpop.f32.mrf.mxu0
        %v3838 = vadd.f32 %v3749, %v3837
        %3839 = vmatmul.bf16.gmra.mxu0 %v3044
        %v3840 = vpop.f32.mrf.mxu0
        %v3841 = vadd.f32 %v3752, %v3840
        %v3842 = vpop.f32.mrf.mxu0
        %v3843 = vadd.f32 %v3754, %v3842
        %3844 = vmatmul.bf16.gmra.mxu0 %v3052
        %v3845 = vpop.f32.mrf.mxu0
        %v3846 = vadd.f32 %v3757, %v3845
        %v3847 = vpop.f32.mrf.mxu0
        %v3848 = vadd.f32 %v3759, %v3847
        %3849 = vmatmul.bf16.gmra.mxu0 %v3060
        %v3850 = vpop.f32.mrf.mxu0
        %v3851 = vadd.f32 %v3762, %v3850
        %v3852 = vpop.f32.mrf.mxu0
        %v3853 = vadd.f32 %v3764, %v3852
        %3854 = vmatmul.bf16.gmra.mxu0 %v3068
        %v3855 = vpop.f32.mrf.mxu0
        %v3856 = vadd.f32 %v3767, %v3855
        %v3857 = vpop.f32.mrf.mxu0
        %v3858 = vadd.f32 %v3769, %v3857
        %3859 = vmatmul.bf16.gmra.mxu0 %v3076
        %v3860 = vpop.f32.mrf.mxu0
        %v3861 = vadd.f32 %v3772, %v3860
        %v3862 = vpop.f32.mrf.mxu0
        %v3863 = vadd.f32 %v3774, %v3862
        %3864 = vdwg.mxu0
        %3865 = vmatpush.bf16.msra.mxu0 %v3501
        %3866 = vmatpush.bf16.msra.mxu0 %v3500
        %3867 = vmatpush.bf16.msra.mxu0 %v3499
        %3868 = vmatpush.bf16.msra.mxu0 %v3498
        %3869 = vmatpush.bf16.msra.mxu0 %v3497
        %3870 = vmatpush.bf16.msra.mxu0 %v3496
        %3871 = vmatpush.bf16.msra.mxu0 %v3495
        %3872 = vmatpush.bf16.msra.mxu0 %v3494
        %3873 = vmatmul.bf16.gmra.mxu0 %v2957
        %v3874 = vpop.f32.mrf.mxu0
        %v3875 = vadd.f32 %v3786, %v3874
        %v3876 = vpop.f32.mrf.mxu0
        %v3877 = vadd.f32 %v3788, %v3876
        %3878 = vmatmul.bf16.gmra.mxu0 %v2965
        %v3879 = vpop.f32.mrf.mxu0
        %v3880 = vadd.f32 %v3791, %v3879
        %v3881 = vpop.f32.mrf.mxu0
        %v3882 = vadd.f32 %v3793, %v3881
        %3883 = vmatmul.bf16.gmra.mxu0 %v2973
        %v3884 = vpop.f32.mrf.mxu0
        %v3885 = vadd.f32 %v3796, %v3884
        %v3886 = vpop.f32.mrf.mxu0
        %v3887 = vadd.f32 %v3798, %v3886
        %3888 = vmatmul.bf16.gmra.mxu0 %v2981
        %v3889 = vpop.f32.mrf.mxu0
        %v3890 = vadd.f32 %v3801, %v3889
        %v3891 = vpop.f32.mrf.mxu0
        %v3892 = vadd.f32 %v3803, %v3891
        %3893 = vmatmul.bf16.gmra.mxu0 %v2989
        %v3894 = vpop.f32.mrf.mxu0
        %v3895 = vadd.f32 %v3806, %v3894
        %v3896 = vpop.f32.mrf.mxu0
        %v3897 = vadd.f32 %v3808, %v3896
        %3898 = vmatmul.bf16.gmra.mxu0 %v2997
        %v3899 = vpop.f32.mrf.mxu0
        %v3900 = vadd.f32 %v3811, %v3899
        %v3901 = vpop.f32.mrf.mxu0
        %v3902 = vadd.f32 %v3813, %v3901
        %3903 = vmatmul.bf16.gmra.mxu0 %v3005
        %v3904 = vpop.f32.mrf.mxu0
        %v3905 = vadd.f32 %v3816, %v3904
        %v3906 = vpop.f32.mrf.mxu0
        %v3907 = vadd.f32 %v3818, %v3906
        %3908 = vmatmul.bf16.gmra.mxu0 %v3013
        %v3909 = vpop.f32.mrf.mxu0
        %v3910 = vadd.f32 %v3821, %v3909
        %v3911 = vpop.f32.mrf.mxu0
        %v3912 = vadd.f32 %v3823, %v3911
        %3913 = vmatmul.bf16.gmra.mxu0 %v3021
        %v3914 = vpop.f32.mrf.mxu0
        %v3915 = vadd.f32 %v3826, %v3914
        %v3916 = vpop.f32.mrf.mxu0
        %v3917 = vadd.f32 %v3828, %v3916
        %3918 = vmatmul.bf16.gmra.mxu0 %v3029
        %v3919 = vpop.f32.mrf.mxu0
        %v3920 = vadd.f32 %v3831, %v3919
        %v3921 = vpop.f32.mrf.mxu0
        %v3922 = vadd.f32 %v3833, %v3921
        %3923 = vmatmul.bf16.gmra.mxu0 %v3037
        %v3924 = vpop.f32.mrf.mxu0
        %v3925 = vadd.f32 %v3836, %v3924
        %v3926 = vpop.f32.mrf.mxu0
        %v3927 = vadd.f32 %v3838, %v3926
        %3928 = vmatmul.bf16.gmra.mxu0 %v3045
        %v3929 = vpop.f32.mrf.mxu0
        %v3930 = vadd.f32 %v3841, %v3929
        %v3931 = vpop.f32.mrf.mxu0
        %v3932 = vadd.f32 %v3843, %v3931
        %3933 = vmatmul.bf16.gmra.mxu0 %v3053
        %v3934 = vpop.f32.mrf.mxu0
        %v3935 = vadd.f32 %v3846, %v3934
        %v3936 = vpop.f32.mrf.mxu0
        %v3937 = vadd.f32 %v3848, %v3936
        %3938 = vmatmul.bf16.gmra.mxu0 %v3061
        %v3939 = vpop.f32.mrf.mxu0
        %v3940 = vadd.f32 %v3851, %v3939
        %v3941 = vpop.f32.mrf.mxu0
        %v3942 = vadd.f32 %v3853, %v3941
        %3943 = vmatmul.bf16.gmra.mxu0 %v3069
        %v3944 = vpop.f32.mrf.mxu0
        %v3945 = vadd.f32 %v3856, %v3944
        %v3946 = vpop.f32.mrf.mxu0
        %v3947 = vadd.f32 %v3858, %v3946
        %3948 = vmatmul.bf16.gmra.mxu0 %v3077
        %v3949 = vpop.f32.mrf.mxu0
        %v3950 = vadd.f32 %v3861, %v3949
        %v3951 = vpop.f32.mrf.mxu0
        %v3952 = vadd.f32 %v3863, %v3951
        %3953 = vdwg.mxu0
        %3954 = vmatpush.bf16.msra.mxu0 %v3509
        %3955 = vmatpush.bf16.msra.mxu0 %v3508
        %3956 = vmatpush.bf16.msra.mxu0 %v3507
        %3957 = vmatpush.bf16.msra.mxu0 %v3506
        %3958 = vmatpush.bf16.msra.mxu0 %v3505
        %3959 = vmatpush.bf16.msra.mxu0 %v3504
        %3960 = vmatpush.bf16.msra.mxu0 %v3503
        %3961 = vmatpush.bf16.msra.mxu0 %v3502
        %3962 = vmatmul.bf16.gmra.mxu0 %v2958
        %v3963 = vpop.f32.mrf.mxu0
        %v3964 = vadd.f32 %v3875, %v3963
        %v3965 = vpop.f32.mrf.mxu0
        %v3966 = vadd.f32 %v3877, %v3965
        %3967 = vmatmul.bf16.gmra.mxu0 %v2966
        %v3968 = vpop.f32.mrf.mxu0
        %v3969 = vadd.f32 %v3880, %v3968
        %v3970 = vpop.f32.mrf.mxu0
        %v3971 = vadd.f32 %v3882, %v3970
        %3972 = vmatmul.bf16.gmra.mxu0 %v2974
        %v3973 = vpop.f32.mrf.mxu0
        %v3974 = vadd.f32 %v3885, %v3973
        %v3975 = vpop.f32.mrf.mxu0
        %v3976 = vadd.f32 %v3887, %v3975
        %3977 = vmatmul.bf16.gmra.mxu0 %v2982
        %v3978 = vpop.f32.mrf.mxu0
        %v3979 = vadd.f32 %v3890, %v3978
        %v3980 = vpop.f32.mrf.mxu0
        %v3981 = vadd.f32 %v3892, %v3980
        %3982 = vmatmul.bf16.gmra.mxu0 %v2990
        %v3983 = vpop.f32.mrf.mxu0
        %v3984 = vadd.f32 %v3895, %v3983
        %v3985 = vpop.f32.mrf.mxu0
        %v3986 = vadd.f32 %v3897, %v3985
        %3987 = vmatmul.bf16.gmra.mxu0 %v2998
        %v3988 = vpop.f32.mrf.mxu0
        %v3989 = vadd.f32 %v3900, %v3988
        %v3990 = vpop.f32.mrf.mxu0
        %v3991 = vadd.f32 %v3902, %v3990
        %3992 = vmatmul.bf16.gmra.mxu0 %v3006
        %v3993 = vpop.f32.mrf.mxu0
        %v3994 = vadd.f32 %v3905, %v3993
        %v3995 = vpop.f32.mrf.mxu0
        %v3996 = vadd.f32 %v3907, %v3995
        %3997 = vmatmul.bf16.gmra.mxu0 %v3014
        %v3998 = vpop.f32.mrf.mxu0
        %v3999 = vadd.f32 %v3910, %v3998
        %v4000 = vpop.f32.mrf.mxu0
        %v4001 = vadd.f32 %v3912, %v4000
        %4002 = vmatmul.bf16.gmra.mxu0 %v3022
        %v4003 = vpop.f32.mrf.mxu0
        %v4004 = vadd.f32 %v3915, %v4003
        %v4005 = vpop.f32.mrf.mxu0
        %v4006 = vadd.f32 %v3917, %v4005
        %4007 = vmatmul.bf16.gmra.mxu0 %v3030
        %v4008 = vpop.f32.mrf.mxu0
        %v4009 = vadd.f32 %v3920, %v4008
        %v4010 = vpop.f32.mrf.mxu0
        %v4011 = vadd.f32 %v3922, %v4010
        %4012 = vmatmul.bf16.gmra.mxu0 %v3038
        %v4013 = vpop.f32.mrf.mxu0
        %v4014 = vadd.f32 %v3925, %v4013
        %v4015 = vpop.f32.mrf.mxu0
        %v4016 = vadd.f32 %v3927, %v4015
        %4017 = vmatmul.bf16.gmra.mxu0 %v3046
        %v4018 = vpop.f32.mrf.mxu0
        %v4019 = vadd.f32 %v3930, %v4018
        %v4020 = vpop.f32.mrf.mxu0
        %v4021 = vadd.f32 %v3932, %v4020
        %4022 = vmatmul.bf16.gmra.mxu0 %v3054
        %v4023 = vpop.f32.mrf.mxu0
        %v4024 = vadd.f32 %v3935, %v4023
        %v4025 = vpop.f32.mrf.mxu0
        %v4026 = vadd.f32 %v3937, %v4025
        %4027 = vmatmul.bf16.gmra.mxu0 %v3062
        %v4028 = vpop.f32.mrf.mxu0
        %v4029 = vadd.f32 %v3940, %v4028
        %v4030 = vpop.f32.mrf.mxu0
        %v4031 = vadd.f32 %v3942, %v4030
        %4032 = vmatmul.bf16.gmra.mxu0 %v3070
        %v4033 = vpop.f32.mrf.mxu0
        %v4034 = vadd.f32 %v3945, %v4033
        %v4035 = vpop.f32.mrf.mxu0
        %v4036 = vadd.f32 %v3947, %v4035
        %4037 = vmatmul.bf16.gmra.mxu0 %v3078
        %v4038 = vpop.f32.mrf.mxu0
        %v4039 = vadd.f32 %v3950, %v4038
        %v4040 = vpop.f32.mrf.mxu0
        %v4041 = vadd.f32 %v3952, %v4040
        %4042 = vdwg.mxu0
        %4043 = vmatpush.bf16.msra.mxu0 %v3517
        %4044 = vmatpush.bf16.msra.mxu0 %v3516
        %4045 = vmatpush.bf16.msra.mxu0 %v3515
        %4046 = vmatpush.bf16.msra.mxu0 %v3514
        %4047 = vmatpush.bf16.msra.mxu0 %v3513
        %4048 = vmatpush.bf16.msra.mxu0 %v3512
        %4049 = vmatpush.bf16.msra.mxu0 %v3511
        %4050 = vmatpush.bf16.msra.mxu0 %v3510
        %4051 = vmatmul.bf16.gmra.mxu0 %v2959
        %v4052 = vpop.f32.mrf.mxu0
        %v4053 = vadd.f32 %v3964, %v4052
        %v4054 = vpop.f32.mrf.mxu0
        %v4055 = vadd.f32 %v3966, %v4054
        %4056 = vmatmul.bf16.gmra.mxu0 %v2967
        %v4057 = vpop.f32.mrf.mxu0
        %v4058 = vadd.f32 %v3969, %v4057
        %v4059 = vpop.f32.mrf.mxu0
        %v4060 = vadd.f32 %v3971, %v4059
        %4061 = vmatmul.bf16.gmra.mxu0 %v2975
        %v4062 = vpop.f32.mrf.mxu0
        %v4063 = vadd.f32 %v3974, %v4062
        %v4064 = vpop.f32.mrf.mxu0
        %v4065 = vadd.f32 %v3976, %v4064
        %4066 = vmatmul.bf16.gmra.mxu0 %v2983
        %v4067 = vpop.f32.mrf.mxu0
        %v4068 = vadd.f32 %v3979, %v4067
        %v4069 = vpop.f32.mrf.mxu0
        %v4070 = vadd.f32 %v3981, %v4069
        %4071 = vmatmul.bf16.gmra.mxu0 %v2991
        %v4072 = vpop.f32.mrf.mxu0
        %v4073 = vadd.f32 %v3984, %v4072
        %v4074 = vpop.f32.mrf.mxu0
        %v4075 = vadd.f32 %v3986, %v4074
        %4076 = vmatmul.bf16.gmra.mxu0 %v2999
        %v4077 = vpop.f32.mrf.mxu0
        %v4078 = vadd.f32 %v3989, %v4077
        %v4079 = vpop.f32.mrf.mxu0
        %v4080 = vadd.f32 %v3991, %v4079
        %4081 = vmatmul.bf16.gmra.mxu0 %v3007
        %v4082 = vpop.f32.mrf.mxu0
        %v4083 = vadd.f32 %v3994, %v4082
        %v4084 = vpop.f32.mrf.mxu0
        %v4085 = vadd.f32 %v3996, %v4084
        %4086 = vmatmul.bf16.gmra.mxu0 %v3015
        %v4087 = vpop.f32.mrf.mxu0
        %v4088 = vadd.f32 %v3999, %v4087
        %v4089 = vpop.f32.mrf.mxu0
        %v4090 = vadd.f32 %v4001, %v4089
        %4091 = vmatmul.bf16.gmra.mxu0 %v3023
        %v4092 = vpop.f32.mrf.mxu0
        %v4093 = vadd.f32 %v4004, %v4092
        %v4094 = vpop.f32.mrf.mxu0
        %v4095 = vadd.f32 %v4006, %v4094
        %4096 = vmatmul.bf16.gmra.mxu0 %v3031
        %v4097 = vpop.f32.mrf.mxu0
        %v4098 = vadd.f32 %v4009, %v4097
        %v4099 = vpop.f32.mrf.mxu0
        %v4100 = vadd.f32 %v4011, %v4099
        %4101 = vmatmul.bf16.gmra.mxu0 %v3039
        %v4102 = vpop.f32.mrf.mxu0
        %v4103 = vadd.f32 %v4014, %v4102
        %v4104 = vpop.f32.mrf.mxu0
        %v4105 = vadd.f32 %v4016, %v4104
        %4106 = vmatmul.bf16.gmra.mxu0 %v3047
        %v4107 = vpop.f32.mrf.mxu0
        %v4108 = vadd.f32 %v4019, %v4107
        %v4109 = vpop.f32.mrf.mxu0
        %v4110 = vadd.f32 %v4021, %v4109
        %4111 = vmatmul.bf16.gmra.mxu0 %v3055
        %v4112 = vpop.f32.mrf.mxu0
        %v4113 = vadd.f32 %v4024, %v4112
        %v4114 = vpop.f32.mrf.mxu0
        %v4115 = vadd.f32 %v4026, %v4114
        %4116 = vmatmul.bf16.gmra.mxu0 %v3063
        %v4117 = vpop.f32.mrf.mxu0
        %v4118 = vadd.f32 %v4029, %v4117
        %v4119 = vpop.f32.mrf.mxu0
        %v4120 = vadd.f32 %v4031, %v4119
        %4121 = vmatmul.bf16.gmra.mxu0 %v3071
        %v4122 = vpop.f32.mrf.mxu0
        %v4123 = vadd.f32 %v4034, %v4122
        %v4124 = vpop.f32.mrf.mxu0
        %v4125 = vadd.f32 %v4036, %v4124
        %4126 = vmatmul.bf16.gmra.mxu0 %v3079
        %v4127 = vpop.f32.mrf.mxu0
        %v4128 = vadd.f32 %v4039, %v4127
        %v4129 = vpop.f32.mrf.mxu0
        %v4130 = vadd.f32 %v4041, %v4129
        %4131 = vdwg.mxu0
        %4132 = vmatpush.bf16.msra.mxu0 %v3525
        %4133 = vmatpush.bf16.msra.mxu0 %v3524
        %4134 = vmatpush.bf16.msra.mxu0 %v3523
        %4135 = vmatpush.bf16.msra.mxu0 %v3522
        %4136 = vmatpush.bf16.msra.mxu0 %v3521
        %4137 = vmatpush.bf16.msra.mxu0 %v3520
        %4138 = vmatpush.bf16.msra.mxu0 %v3519
        %4139 = vmatpush.bf16.msra.mxu0 %v3518
        %4140 = vmatmul.bf16.gmra.mxu0 %v2960
        %v4141 = vpop.f32.mrf.mxu0
        %v4142 = vadd.f32 %v4053, %v4141
        %v4143 = vpop.f32.mrf.mxu0
        %v4144 = vadd.f32 %v4055, %v4143
        %4145 = vmatmul.bf16.gmra.mxu0 %v2968
        %v4146 = vpop.f32.mrf.mxu0
        %v4147 = vadd.f32 %v4058, %v4146
        %v4148 = vpop.f32.mrf.mxu0
        %v4149 = vadd.f32 %v4060, %v4148
        %4150 = vmatmul.bf16.gmra.mxu0 %v2976
        %v4151 = vpop.f32.mrf.mxu0
        %v4152 = vadd.f32 %v4063, %v4151
        %v4153 = vpop.f32.mrf.mxu0
        %v4154 = vadd.f32 %v4065, %v4153
        %4155 = vmatmul.bf16.gmra.mxu0 %v2984
        %v4156 = vpop.f32.mrf.mxu0
        %v4157 = vadd.f32 %v4068, %v4156
        %v4158 = vpop.f32.mrf.mxu0
        %v4159 = vadd.f32 %v4070, %v4158
        %4160 = vmatmul.bf16.gmra.mxu0 %v2992
        %v4161 = vpop.f32.mrf.mxu0
        %v4162 = vadd.f32 %v4073, %v4161
        %v4163 = vpop.f32.mrf.mxu0
        %v4164 = vadd.f32 %v4075, %v4163
        %4165 = vmatmul.bf16.gmra.mxu0 %v3000
        %v4166 = vpop.f32.mrf.mxu0
        %v4167 = vadd.f32 %v4078, %v4166
        %v4168 = vpop.f32.mrf.mxu0
        %v4169 = vadd.f32 %v4080, %v4168
        %4170 = vmatmul.bf16.gmra.mxu0 %v3008
        %v4171 = vpop.f32.mrf.mxu0
        %v4172 = vadd.f32 %v4083, %v4171
        %v4173 = vpop.f32.mrf.mxu0
        %v4174 = vadd.f32 %v4085, %v4173
        %4175 = vmatmul.bf16.gmra.mxu0 %v3016
        %v4176 = vpop.f32.mrf.mxu0
        %v4177 = vadd.f32 %v4088, %v4176
        %v4178 = vpop.f32.mrf.mxu0
        %v4179 = vadd.f32 %v4090, %v4178
        %4180 = vmatmul.bf16.gmra.mxu0 %v3024
        %v4181 = vpop.f32.mrf.mxu0
        %v4182 = vadd.f32 %v4093, %v4181
        %v4183 = vpop.f32.mrf.mxu0
        %v4184 = vadd.f32 %v4095, %v4183
        %4185 = vmatmul.bf16.gmra.mxu0 %v3032
        %v4186 = vpop.f32.mrf.mxu0
        %v4187 = vadd.f32 %v4098, %v4186
        %v4188 = vpop.f32.mrf.mxu0
        %v4189 = vadd.f32 %v4100, %v4188
        %4190 = vmatmul.bf16.gmra.mxu0 %v3040
        %v4191 = vpop.f32.mrf.mxu0
        %v4192 = vadd.f32 %v4103, %v4191
        %v4193 = vpop.f32.mrf.mxu0
        %v4194 = vadd.f32 %v4105, %v4193
        %4195 = vmatmul.bf16.gmra.mxu0 %v3048
        %v4196 = vpop.f32.mrf.mxu0
        %v4197 = vadd.f32 %v4108, %v4196
        %v4198 = vpop.f32.mrf.mxu0
        %v4199 = vadd.f32 %v4110, %v4198
        %4200 = vmatmul.bf16.gmra.mxu0 %v3056
        %v4201 = vpop.f32.mrf.mxu0
        %v4202 = vadd.f32 %v4113, %v4201
        %v4203 = vpop.f32.mrf.mxu0
        %v4204 = vadd.f32 %v4115, %v4203
        %4205 = vmatmul.bf16.gmra.mxu0 %v3064
        %v4206 = vpop.f32.mrf.mxu0
        %v4207 = vadd.f32 %v4118, %v4206
        %v4208 = vpop.f32.mrf.mxu0
        %v4209 = vadd.f32 %v4120, %v4208
        %4210 = vmatmul.bf16.gmra.mxu0 %v3072
        %v4211 = vpop.f32.mrf.mxu0
        %v4212 = vadd.f32 %v4123, %v4211
        %v4213 = vpop.f32.mrf.mxu0
        %v4214 = vadd.f32 %v4125, %v4213
        %4215 = vmatmul.bf16.gmra.mxu0 %v3080
        %v4216 = vpop.f32.mrf.mxu0
        %v4217 = vadd.f32 %v4128, %v4216
        %v4218 = vpop.f32.mrf.mxu0
        %v4219 = vadd.f32 %v4130, %v4218
        %4220 = vdwg.mxu0
        %4221 = vmatpush.bf16.msra.mxu0 %v3533
        %4222 = vmatpush.bf16.msra.mxu0 %v3532
        %4223 = vmatpush.bf16.msra.mxu0 %v3531
        %4224 = vmatpush.bf16.msra.mxu0 %v3530
        %4225 = vmatpush.bf16.msra.mxu0 %v3529
        %4226 = vmatpush.bf16.msra.mxu0 %v3528
        %4227 = vmatpush.bf16.msra.mxu0 %v3527
        %4228 = vmatpush.bf16.msra.mxu0 %v3526
        %4229 = vmatmul.bf16.gmra.mxu0 %v2961
        %v4230 = vpop.f32.mrf.mxu0
        %v4231 = vadd.f32 %v4142, %v4230
        %v4232 = vpop.f32.mrf.mxu0
        %v4233 = vadd.f32 %v4144, %v4232
        %4234 = vmatmul.bf16.gmra.mxu0 %v2969
        %v4235 = vpop.f32.mrf.mxu0
        %v4236 = vadd.f32 %v4147, %v4235
        %v4237 = vpop.f32.mrf.mxu0
        %v4238 = vadd.f32 %v4149, %v4237
        %4239 = vmatmul.bf16.gmra.mxu0 %v2977
        %v4240 = vpop.f32.mrf.mxu0
        %v4241 = vadd.f32 %v4152, %v4240
        %v4242 = vpop.f32.mrf.mxu0
        %v4243 = vadd.f32 %v4154, %v4242
        %4244 = vmatmul.bf16.gmra.mxu0 %v2985
        %v4245 = vpop.f32.mrf.mxu0
        %v4246 = vadd.f32 %v4157, %v4245
        %v4247 = vpop.f32.mrf.mxu0
        %v4248 = vadd.f32 %v4159, %v4247
        %4249 = vmatmul.bf16.gmra.mxu0 %v2993
        %v4250 = vpop.f32.mrf.mxu0
        %v4251 = vadd.f32 %v4162, %v4250
        %v4252 = vpop.f32.mrf.mxu0
        %v4253 = vadd.f32 %v4164, %v4252
        %4254 = vmatmul.bf16.gmra.mxu0 %v3001
        %v4255 = vpop.f32.mrf.mxu0
        %v4256 = vadd.f32 %v4167, %v4255
        %v4257 = vpop.f32.mrf.mxu0
        %v4258 = vadd.f32 %v4169, %v4257
        %4259 = vmatmul.bf16.gmra.mxu0 %v3009
        %v4260 = vpop.f32.mrf.mxu0
        %v4261 = vadd.f32 %v4172, %v4260
        %v4262 = vpop.f32.mrf.mxu0
        %v4263 = vadd.f32 %v4174, %v4262
        %4264 = vmatmul.bf16.gmra.mxu0 %v3017
        %v4265 = vpop.f32.mrf.mxu0
        %v4266 = vadd.f32 %v4177, %v4265
        %v4267 = vpop.f32.mrf.mxu0
        %v4268 = vadd.f32 %v4179, %v4267
        %4269 = vmatmul.bf16.gmra.mxu0 %v3025
        %v4270 = vpop.f32.mrf.mxu0
        %v4271 = vadd.f32 %v4182, %v4270
        %v4272 = vpop.f32.mrf.mxu0
        %v4273 = vadd.f32 %v4184, %v4272
        %4274 = vmatmul.bf16.gmra.mxu0 %v3033
        %v4275 = vpop.f32.mrf.mxu0
        %v4276 = vadd.f32 %v4187, %v4275
        %v4277 = vpop.f32.mrf.mxu0
        %v4278 = vadd.f32 %v4189, %v4277
        %4279 = vmatmul.bf16.gmra.mxu0 %v3041
        %v4280 = vpop.f32.mrf.mxu0
        %v4281 = vadd.f32 %v4192, %v4280
        %v4282 = vpop.f32.mrf.mxu0
        %v4283 = vadd.f32 %v4194, %v4282
        %4284 = vmatmul.bf16.gmra.mxu0 %v3049
        %v4285 = vpop.f32.mrf.mxu0
        %v4286 = vadd.f32 %v4197, %v4285
        %v4287 = vpop.f32.mrf.mxu0
        %v4288 = vadd.f32 %v4199, %v4287
        %4289 = vmatmul.bf16.gmra.mxu0 %v3057
        %v4290 = vpop.f32.mrf.mxu0
        %v4291 = vadd.f32 %v4202, %v4290
        %v4292 = vpop.f32.mrf.mxu0
        %v4293 = vadd.f32 %v4204, %v4292
        %4294 = vmatmul.bf16.gmra.mxu0 %v3065
        %v4295 = vpop.f32.mrf.mxu0
        %v4296 = vadd.f32 %v4207, %v4295
        %v4297 = vpop.f32.mrf.mxu0
        %v4298 = vadd.f32 %v4209, %v4297
        %4299 = vmatmul.bf16.gmra.mxu0 %v3073
        %v4300 = vpop.f32.mrf.mxu0
        %v4301 = vadd.f32 %v4212, %v4300
        %v4302 = vpop.f32.mrf.mxu0
        %v4303 = vadd.f32 %v4214, %v4302
        %4304 = vmatmul.bf16.gmra.mxu0 %v3081
        %v4305 = vpop.f32.mrf.mxu0
        %v4306 = vadd.f32 %v4217, %v4305
        %v4307 = vpop.f32.mrf.mxu0
        %v4308 = vadd.f32 %v4219, %v4307
        %4309 = vdwg.mxu0
        %4310 = vst [vmem:[%s293] sm:$0xff] %v4231
        %4311 = vst [vmem:[%s293 + $0x8] sm:$0xff] %v4233
        %4312 = vst [vmem:[%s293 + $0x10] sm:$0xff] %v4236
        %4313 = vst [vmem:[%s293 + $0x18] sm:$0xff] %v4238
        %4314 = vst [vmem:[%s293 + $0x20] sm:$0xff] %v4241
        %4315 = vst [vmem:[%s293 + $0x28] sm:$0xff] %v4243
        %4316 = vst [vmem:[%s293 + $0x30] sm:$0xff] %v4246
        %4317 = vst [vmem:[%s293 + $0x38] sm:$0xff] %v4248
        %4318 = vst [vmem:[%s293 + $0x40] sm:$0xff] %v4251
        %4319 = vst [vmem:[%s293 + $0x48] sm:$0xff] %v4253
        %4320 = vst [vmem:[%s293 + $0x50] sm:$0xff] %v4256
        %4321 = vst [vmem:[%s293 + $0x58] sm:$0xff] %v4258
        %4322 = vst [vmem:[%s293 + $0x60] sm:$0xff] %v4261
        %4323 = vst [vmem:[%s293 + $0x68] sm:$0xff] %v4263
        %4324 = vst [vmem:[%s293 + $0x70] sm:$0xff] %v4266
        %4325 = vst [vmem:[%s293 + $0x78] sm:$0xff] %v4268
        %4326 = vst [vmem:[%s293 + $0x80] sm:$0xff] %v4271
        %4327 = vst [vmem:[%s293 + $0x88] sm:$0xff] %v4273
        %4328 = vst [vmem:[%s293 + $0x90] sm:$0xff] %v4276
        %4329 = vst [vmem:[%s293 + $0x98] sm:$0xff] %v4278
        %4330 = vst [vmem:[%s293 + $0xa0] sm:$0xff] %v4281
        %4331 = vst [vmem:[%s293 + $0xa8] sm:$0xff] %v4283
        %4332 = vst [vmem:[%s293 + $0xb0] sm:$0xff] %v4286
        %4333 = vst [vmem:[%s293 + $0xb8] sm:$0xff] %v4288
        %4334 = vst [vmem:[%s293 + $0xc0] sm:$0xff] %v4291
        %4335 = vst [vmem:[%s293 + $0xc8] sm:$0xff] %v4293
        %4336 = vst [vmem:[%s293 + $0xd0] sm:$0xff] %v4296
        %4337 = vst [vmem:[%s293 + $0xd8] sm:$0xff] %v4298
        %4338 = vst [vmem:[%s293 + $0xe0] sm:$0xff] %v4301
        %4339 = vst [vmem:[%s293 + $0xe8] sm:$0xff] %v4303
        %4340 = vst [vmem:[%s293 + $0xf0] sm:$0xff] %v4306
        %4341 = vst [vmem:[%s293 + $0xf8] sm:$0xff] %v4308
        %s4342 = sand.u32 %s142, 1
        %s4343 = scalar_lea.sflag [#allocation4], %s4342
        %s4344 = sand.u32 %s142, 1
        %s4345 = smul.addr %s4344, 256
        %s4346 = scalar_lea.vmem [#allocation10], %s4345
        // Predicated region
        $region57: #{tpu_custom_call.1} parent=39 // pred_check
          %p4347 = pneg %p152
        $region58: #{tpu_custom_call.1} parent=39 // pred_check_branch
          %4349 = sbr.rel (%p4347) target = $region60
        $region59: #{tpu_custom_call.1} parent=39 // pred_region
          %s4350 = smul.u32 32, %s24
          %4352 = vsyncadd %s4343, 0
          %s4353 = smul.addr %s4350, 8
          %s4354 = scalar_lea.hbm %s5, %s4353
          %s4355 = sshll.u32 %s4346, 4
          %s4356 = int_to_ptr.vmem [resolvable:$true] %s4355
          %s4357 = sshll.u32 %s4354, 4
          %s4358 = int_to_ptr.hbm [resolvable:$true] %s4357
          %4363 = dma.vmem_to_hbm [thread:$0]  %s4356, 4096, %s4358, %s4343, 128, 128, 8
        $region60: #{tpu_custom_call.1} parent=39 // pred_fallthru
          _
      $region40: #{tpu_custom_call.1} parent=5 // pred_fallthru
        _
      %p4364 = scmp.le.s32.totalorder 2, %s19
      // Predicated region
      $region61: #{tpu_custom_call.1} parent=5 // pred_check
        %p4365 = pneg %p4364
      $region62: #{tpu_custom_call.1} parent=5 // pred_check_branch
        %4367 = sbr.rel (%p4365) target = $region64
      $region63: #{tpu_custom_call.1} parent=5 // pred_region
        %s4368 = ssub.s32 %s19, 2
        // Predicated region
        $region65: #{tpu_custom_call.1} parent=63 // pred_check
          %p4369 = pneg %p158
        $region66: #{tpu_custom_call.1} parent=63 // pred_check_branch
          %4371 = sbr.rel (%p4369) target = $region68
        $region67: #{tpu_custom_call.1} parent=63 // pred_region
          %s4372 = sand.u32 %s143, 1
          %s4373 = scalar_lea.sflag [#allocation4], %s4372
          %s4374 = sand.u32 %s143, 1
          %s4375 = smul.addr %s4374, 256
          %s4376 = scalar_lea.vmem [#allocation10], %s4375
          %4378 = dma.done %s4373, 4096
        $region68: #{tpu_custom_call.1} parent=63 // pred_fallthru
          _
      $region64: #{tpu_custom_call.1} parent=5 // pred_fallthru
        _
    $region6: #{tpu_custom_call.1} parent=1 // loop_footer
      %s23 = sadd.s32 1, %s19
    $region7: #{tpu_custom_call.1} parent=1 // loop_footer_branch
      %18 = sbr.rel target = $region3
    $region8: #{tpu_custom_call.1} parent=1 // loop_exit
      _
    %4379 = vsyncpa [#allocation3], 1
    %s4380 = scalar_lea.sflag [#allocation3], 1
    %4381 = vsyncpa %s4380, 1
    %4382 = vsyncpa [#allocation6], 1
    %4383 = vsyncpa [#allocation9], 1
    %4384 = vsyncpa [#allocation4], 1
    %s4385 = scalar_lea.sflag [#allocation4], 1
    %4386 = vsyncpa %s4385, 1

</llo_original>
